<compile_context>
chip_gen: v7x
topology: tpu7x:2x2x1
jax: 0.10.0
libtpu: 0.0.40
codegen_flags: <defaults>
</compile_context>

<pallas_src>
import jax
import jax.numpy as jnp
from jax.experimental import pallas as pl
from jax.experimental.pallas import tpu as pltpu


DIN_PAD = 8  # conv1 contraction dim padded 3 -> 8 (zero rows/cols)


def _make_decoder_kernel(num_layers, B, N, din_pad, bottleneck, hidden, hmax, dout):
    """All nb_primitives decoders: one grid step == one Mapping2Dto3D MLP."""
    inv_m = 1.0 / float(B * N)
    eps = 1e-5
    L = num_layers

    # Row layout of the packed parameter array `vecs` (must match pack_decoder_params).
    R_W1 = 0                      # din_pad rows: conv1 weight (zero-padded)
    R_B1 = din_pad                # b1, g1, be1
    R_B2 = din_pad + 3            # b2, g2, be2
    R_BL = din_pad + 6            # bl rows (L)
    R_GL = R_BL + L               # gl rows (L)
    R_BEL = R_GL + L              # bel rows (L)
    R_BLAST = R_BEL + L           # blast (padded; only first dout entries real)

    def kernel(points_ref, latent_ref, vecs_ref, w2_ref, ws_ref, out_ref):

        def vrow(i, width):
            r = vecs_ref[pl.ds(i, 1), :]            # (1, hmax) f32
            return r[:, :width] if width < hmax else r

        def bn_relu(x, gamma_row, beta_row, width):
            # BatchNorm1d training-mode (biased) stats over batch*points,
            # folded into a per-channel scale/shift; stats in f32.
            gamma = vrow(gamma_row, width)
            beta = vrow(beta_row, width)
            s1 = jnp.sum(x, axis=0, keepdims=True)
            s2 = jnp.sum(x * x, axis=0, keepdims=True)
            mean = s1 * inv_m
            var = jnp.maximum(s2 * inv_m - mean * mean, 0.0)
            scale = gamma * jax.lax.rsqrt(var + eps)
            shift = beta - mean * scale
            return jnp.maximum(x * scale + shift, 0.0)   # activation = relu

        # conv1 on the shared template points (K zero-padded to 8; tiny, stays f32),
        # then latent added as a per-batch bias (== concatenating latent per point).
        pts = points_ref[...]                                           # (N, din_pad)
        w1 = vecs_ref[pl.ds(R_W1, din_pad), :]                          # (din_pad, hmax)
        if bottleneck < hmax:
            w1 = w1[:, :bottleneck]
        b1 = vrow(R_B1, bottleneck)
        h = jnp.dot(pts, w1, preferred_element_type=jnp.float32) + b1   # (N, BN)
        x = h[None, :, :] + latent_ref[...][:, None, :]                 # (B, N, BN)
        x = x.reshape(B * N, bottleneck)
        x = bn_relu(x, R_B1 + 1, R_B1 + 2, bottleneck)

        # conv2: bf16 MXU matmul, f32 accumulate.
        h = (jnp.dot(x.astype(jnp.bfloat16), w2_ref[...],
                     preferred_element_type=jnp.float32)
             + vrow(R_B2, hidden))                                      # (B*N, H)
        x = bn_relu(h, R_B2 + 1, R_B2 + 2, hidden)

        # conv_list: num_layers is small & static -> unrolled Python loop.
        for i in range(L):
            h = (jnp.dot(x.astype(jnp.bfloat16), ws_ref[i],
                         preferred_element_type=jnp.float32)
                 + vrow(R_BL + i, hidden))
            x = bn_relu(h, R_GL + i, R_BEL + i, hidden)

        # last_conv: weight lives at ws_ref[L] with its dout columns zero-padded
        # to hidden; no BN, no activation.
        y = (jnp.dot(x.astype(jnp.bfloat16), ws_ref[L],
                     preferred_element_type=jnp.float32)
             + vrow(R_BLAST, hidden))                                   # (B*N, H) (cols >= dout are 0)
        y = y[:, :dout]                                                 # (B*N, dout)
        # Emit channels-first, lane-dense (B, dout, N) via a small in-kernel transpose.
        out_ref[...] = jnp.transpose(y.reshape(B, N, dout), (0, 2, 1))

    return kernel


def pack_decoder_params(params, din, dout=3, din_pad=DIN_PAD):
    """Pack the 14 per-primitive parameter arrays into 3 DMA-friendly arrays.

    Returns
      vecs   : (P, din_pad + 7 + 3L, Hmax) f32  - w1 rows + every bias/BN param
      w2     : (P, bottleneck, hidden)      bf16
      wstack : (P, L + 1, hidden, hidden)   bf16 - conv_list weights + padded last_conv
    """
    (w1, b1, g1, be1, w2, b2, g2, be2, wl, bl, gl, bel, wlast, blast) = params
    bottleneck = w1.shape[-1]
    hidden = w2.shape[-1]
    L = wl.shape[1]
    hmax = max(bottleneck, hidden)

    def pad_last(a, width=hmax):
        pad = width - a.shape[-1]
        return jnp.pad(a, ((0, 0), (0, 0), (0, pad))) if pad else a

    w1p = jnp.pad(w1, ((0, 0), (0, din_pad - din), (0, hmax - bottleneck)))  # (P, din_pad, hmax)
    vecs = jnp.concatenate(
        [w1p,
         pad_last(b1), pad_last(g1), pad_last(be1),
         pad_last(b2), pad_last(g2), pad_last(be2),
         pad_last(bl), pad_last(gl), pad_last(bel),
         pad_last(blast)],
        axis=1).astype(jnp.float32)                                           # (P, n_vecs, hmax)

    wlast_p = jnp.pad(wlast, ((0, 0), (0, 0), (0, hidden - dout)))            # (P, H, H)
    wstack = jnp.concatenate([wl, wlast_p[:, None]], axis=1).astype(jnp.bfloat16)
    return vecs, w2.astype(jnp.bfloat16), wstack


def atlasnet_forward(latent, points, vecs, w2, wstack, dout=3):
    """Fused Atlasnet.forward(train=True).

    points : (P, N, din_pad)  - per-primitive template points, channel dim zero-padded
    latent : (B, bottleneck)
    returns: (B, P, dout, N)  - written directly in PyTorch's layout (no wrapper transpose)
    """
    P, N, din_pad = points.shape
    B, bottleneck = latent.shape
    hidden = w2.shape[-1]
    num_layers = wstack.shape[1] - 1
    n_vecs, hmax = vecs.shape[1], vecs.shape[2]

    kernel = _make_decoder_kernel(num_layers, B, N, din_pad, bottleneck, hidden, hmax, dout)

    in_specs = [
        pl.BlockSpec((None, N, din_pad), lambda p: (p, 0, 0)),                 # template points
        # latent is shared across primitives: same block every step -> stays
        # resident in VMEM (DMA'd once).
        pl.BlockSpec((B, bottleneck), lambda p: (0, 0)),
        pl.BlockSpec((None, n_vecs, hmax), lambda p: (p, 0, 0)),               # packed small params
        pl.BlockSpec((None, bottleneck, hidden), lambda p: (p, 0, 0)),         # conv2 weight (bf16)
        pl.BlockSpec((None, num_layers + 1, hidden, hidden),
                     lambda p: (p, 0, 0, 0)),                                  # conv_list + last_conv (bf16)
    ]
    # P axis is written in position 1 directly -> lane-dense (dout, N) tail,
    # and no wrapper-side permute/copy of the output.
    out_spec = pl.BlockSpec((B, None, dout, N), lambda p: (0, p, 0, 0))

    return pl.pallas_call(
        kernel,
        out_shape=jax.ShapeDtypeStruct((B, P, dout, N), jnp.float32),
        grid_spec=pltpu.PrefetchScalarGridSpec(
            num_scalar_prefetch=0,
            grid=(P,),
            in_specs=in_specs,
            out_specs=out_spec,
        ),
        compiler_params=pltpu.CompilerParams(
            dimension_semantics=("parallel",)),
    )(points, latent, vecs, w2, wstack)


def init_decoder_params(key, din, bottleneck, hidden, num_layers, dout=3):
    """Deterministic Conv1d(k=1)/BatchNorm1d init (PyTorch-style bounds).

    Weights are stored pre-transposed as (Cin, Cout) so the kernel does x @ W.
    """
    ks = jax.random.split(key, 8)

    def conv_w(k, cin, cout):
        bound = 1.0 / jnp.sqrt(float(cin))
        return jax.random.uniform(k, (cin, cout), jnp.float32, -bound, bound)

    def conv_b(k, cin, cout):
        bound = 1.0 / jnp.sqrt(float(cin))
        return jax.random.uniform(k, (1, cout), jnp.float32, -bound, bound)

    w1 = conv_w(ks[0], din, bottleneck)
    b1 = conv_b(ks[1], din, bottleneck)
    g1 = jnp.ones((1, bottleneck), jnp.float32)
    be1 = jnp.zeros((1, bottleneck), jnp.float32)

    w2 = conv_w(ks[2], bottleneck, hidden)
    b2 = conv_b(ks[3], bottleneck, hidden)
    g2 = jnp.ones((1, hidden), jnp.float32)
    be2 = jnp.zeros((1, hidden), jnp.float32)

    wl = jnp.stack([conv_w(k, hidden, hidden)
                    for k in jax.random.split(ks[4], num_layers)], axis=0)        # (L, H, H)
    bl = jnp.concatenate([conv_b(k, hidden, hidden)
                          for k in jax.random.split(ks[5], num_layers)], axis=0)  # (L, H)
    gl = jnp.ones((num_layers, hidden), jnp.float32)
    bel = jnp.zeros((num_layers, hidden), jnp.float32)

    wlast = conv_w(ks[6], hidden, dout)
    blast = conv_b(ks[7], hidden, dout)

    return (w1, b1, g1, be1, w2, b2, g2, be2, wl, bl, gl, bel, wlast, blast)


def reference_forward(latent, points, stacked_params, num_layers):
    """Pure-JAX f32 reference matching the PyTorch module (train mode)."""
    (w1, b1, g1, be1, w2, b2, g2, be2, wl, bl, gl, bel, wlast, blast) = stacked_params
    B = latent.shape[0]
    P, N, _ = points.shape
    eps = 1e-5

    def bn_relu(x, g, b):
        mean = jnp.mean(x, axis=0, keepdims=True)
        var = jnp.mean((x - mean) ** 2, axis=0, keepdims=True)
        return jnp.maximum((x - mean) / jnp.sqrt(var + eps) * g + b, 0.0)

    outs = []
    for p in range(P):
        h = points[p] @ w1[p] + b1[p]                                   # (N, BN)
        x = (h[None] + latent[:, None, :]).reshape(B * N, -1)
        x = bn_relu(x, g1[p], be1[p])
        x = bn_relu(x @ w2[p] + b2[p], g2[p], be2[p])
        for i in range(num_layers):
            x = bn_relu(x @ wl[p, i] + bl[p, i:i + 1], gl[p, i:i + 1], bel[p, i:i + 1])
        y = x @ wlast[p] + blast[p]                                     # (B*N, 3)
        outs.append(jnp.transpose(y.reshape(B, N, -1), (0, 2, 1)))
    return jnp.stack(outs, axis=1)                                      # (B, P, 3, N)


if __name__ == "__main__":
    # Small "opt" configuration consistent with the module.
    B = 2                   # batch
    bottleneck = 32         # opt.bottleneck_size
    hidden = 32             # opt.hidden_neurons
    num_layers = 2          # opt.num_layers
    nb_primitives = 2       # opt.nb_primitives
    number_points = 512     # opt.number_points
    dim_template = 3        # SPHERE template -> dim 3
    N = number_points // nb_primitives   # nb_pts_in_primitive

    key = jax.random.PRNGKey(0)
    k_lat, k_pts, k_par = jax.random.split(key, 3)

    latent_vector = jax.random.normal(k_lat, (B, bottleneck), jnp.float32)

    # SphereTemplate.get_random_points: normal(0,1), normalized over channel dim.
    prim_points = []
    for kp in jax.random.split(k_pts, nb_primitives):
        rg = jax.random.normal(kp, (1, dim_template, N), jnp.float32)
        rg = rg / jnp.sqrt(jnp.sum(rg ** 2, axis=1, keepdims=True))
        prim_points.append(jnp.transpose(rg[0], (1, 0)))          # (N, 3) channels-last
    points = jnp.stack(prim_points, axis=0)                       # (P, N, 3)

    prim_params = [init_decoder_params(kw, dim_template, bottleneck, hidden, num_layers)
                   for kw in jax.random.split(k_par, nb_primitives)]
    # Stack every parameter across primitives -> leading P dim.
    stacked_params = tuple(jnp.stack(ps, axis=0) for ps in zip(*prim_params))

    # One-time packing: 3 kernel-side arrays (plus padded points) instead of 15.
    vecs, w2_b, wstack_b = pack_decoder_params(stacked_params, dim_template, dout=3)
    points_pad = jnp.pad(points, ((0, 0), (0, 0), (0, DIN_PAD - dim_template)))

    output_points = atlasnet_forward(latent_vector, points_pad, vecs, w2_b, wstack_b)
    output_points = jax.block_until_ready(output_points)

    assert output_points.shape == (B, nb_primitives, 3, N), output_points.shape
    assert output_points.dtype == jnp.float32
    assert bool(jnp.all(jnp.isfinite(output_points)))

    # Correctness check against the f32 reference (bf16 MXU path -> loose tolerance).
    ref = reference_forward(latent_vector, points, stacked_params, num_layers)
    err = float(jnp.max(jnp.abs(output_points - ref)))
    scale = float(jnp.max(jnp.abs(ref)))
    assert err <= 5e-2 * max(1.0, scale), (err, scale)

    # TODO(synk): eval-mode regular points (pymesh icosphere) and generate_mesh
    # (pymesh.form_mesh/merge_meshes) are host-side mesh utilities with no Pallas equivalent.
    print("KERNEL_OK")
</pallas_src>

<mosaic_0001>
module attributes {stable_mosaic.version = 11 : i64} {
  func.func @kernel(%arg0: i32, %arg1: memref<1x256x8xf32, #tpu.memory_space<vmem>>, %arg2: memref<2x32xf32, #tpu.memory_space<vmem>>, %arg3: memref<1x21x32xf32, #tpu.memory_space<vmem>>, %arg4: memref<1x32x32xbf16, #tpu.memory_space<vmem>>, %arg5: memref<1x3x32x32xbf16, #tpu.memory_space<vmem>>, %arg6: memref<2x1x3x256xf32, #tpu.memory_space<vmem>>) attributes {dimension_semantics = [#tpu.dimension_semantics<parallel>], iteration_bounds = array<i64: 2>, scalar_prefetch = 0 : i64, scratch_operands = 0 : i64, tpu.core_type = #tpu.core_type<tc>, window_params = [{transform_indices = @transform_0, window_bounds = array<i64: 1, 256, 8>}, {pipeline_mode = #tpu.pipeline_mode<synchronous>, transform_indices = @transform_1, window_bounds = array<i64: 2, 32>}, {transform_indices = @transform_2, window_bounds = array<i64: 1, 21, 32>}, {transform_indices = @transform_3, window_bounds = array<i64: 1, 32, 32>}, {transform_indices = @transform_4, window_bounds = array<i64: 1, 3, 32, 32>}, {transform_indices = @transform_5, window_bounds = array<i64: 2, 1, 3, 256>}]} {
    %c0 = arith.constant 0 : index
    %c0_0 = arith.constant 0 : index
    %c0_1 = arith.constant 0 : index
    %0 = vector.load %arg1[%c0, %c0_0, %c0_1] : memref<1x256x8xf32, #tpu.memory_space<vmem>>, vector<1x256x8xf32>
    %1 = vector.shape_cast %0 : vector<1x256x8xf32> to vector<256x8xf32>
    %c0_2 = arith.constant 0 : index
    %c0_3 = arith.constant 0 : index
    %c0_4 = arith.constant 0 : index
    %2 = vector.load %arg3[%c0_2, %c0_3, %c0_4] : memref<1x21x32xf32, #tpu.memory_space<vmem>>, vector<1x8x32xf32>
    %3 = vector.shape_cast %2 : vector<1x8x32xf32> to vector<8x32xf32>
    %c0_5 = arith.constant 0 : index
    %c8 = arith.constant 8 : index
    %c0_6 = arith.constant 0 : index
    %4 = vector.load %arg3[%c0_5, %c8, %c0_6] : memref<1x21x32xf32, #tpu.memory_space<vmem>>, vector<1x1x32xf32>
    %5 = vector.shape_cast %4 : vector<1x1x32xf32> to vector<1x32xf32>
    %cst = arith.constant dense<0.000000e+00> : vector<256x32xf32>
    %6 = tpu.matmul %1, %3, %cst {dimension_numbers = #tpu.dot_dimension_numbers<[1], [0], [0], [1], [0, 0, 1, 1], [], []>} : vector<256x8xf32>, vector<8x32xf32>, vector<256x32xf32> -> vector<256x32xf32>
    %7 = vector.broadcast %5 : vector<1x32xf32> to vector<256x32xf32>
    %8 = arith.addf %6, %7 : vector<256x32xf32>
    %9 = vector.shape_cast %8 : vector<256x32xf32> to vector<1x256x32xf32>
    %c0_7 = arith.constant 0 : index
    %c0_8 = arith.constant 0 : index
    %10 = vector.load %arg2[%c0_7, %c0_8] : memref<2x32xf32, #tpu.memory_space<vmem>>, vector<2x32xf32>
    %11 = vector.shape_cast %10 : vector<2x32xf32> to vector<2x1x32xf32>
    %12 = vector.broadcast %9 : vector<1x256x32xf32> to vector<2x256x32xf32>
    %13 = vector.broadcast %11 : vector<2x1x32xf32> to vector<2x256x32xf32>
    %14 = arith.addf %12, %13 : vector<2x256x32xf32>
    %15 = vector.shape_cast %14 : vector<2x256x32xf32> to vector<512x32xf32>
    %c0_9 = arith.constant 0 : index
    %c9 = arith.constant 9 : index
    %c0_10 = arith.constant 0 : index
    %16 = vector.load %arg3[%c0_9, %c9, %c0_10] : memref<1x21x32xf32, #tpu.memory_space<vmem>>, vector<1x1x32xf32>
    %17 = vector.shape_cast %16 : vector<1x1x32xf32> to vector<1x32xf32>
    %c0_11 = arith.constant 0 : index
    %c10 = arith.constant 10 : index
    %c0_12 = arith.constant 0 : index
    %18 = vector.load %arg3[%c0_11, %c10, %c0_12] : memref<1x21x32xf32, #tpu.memory_space<vmem>>, vector<1x1x32xf32>
    %19 = vector.shape_cast %18 : vector<1x1x32xf32> to vector<1x32xf32>
    %cst_13 = arith.constant dense<0.000000e+00> : vector<32xf32>
    %20 = vector.multi_reduction <add>, %15, %cst_13 [0] : vector<512x32xf32> to vector<32xf32>
    %21 = vector.shape_cast %20 : vector<32xf32> to vector<1x32xf32>
    %22 = arith.mulf %15, %15 : vector<512x32xf32>
    %cst_14 = arith.constant dense<0.000000e+00> : vector<32xf32>
    %23 = vector.multi_reduction <add>, %22, %cst_14 [0] : vector<512x32xf32> to vector<32xf32>
    %24 = vector.shape_cast %23 : vector<32xf32> to vector<1x32xf32>
    %cst_15 = arith.constant 0.001953125 : f32
    %25 = vector.broadcast %cst_15 : f32 to vector<1x32xf32>
    %26 = arith.mulf %21, %25 : vector<1x32xf32>
    %cst_16 = arith.constant 0.001953125 : f32
    %27 = vector.broadcast %cst_16 : f32 to vector<1x32xf32>
    %28 = arith.mulf %24, %27 : vector<1x32xf32>
    %29 = arith.mulf %26, %26 : vector<1x32xf32>
    %30 = arith.subf %28, %29 : vector<1x32xf32>
    %cst_17 = arith.constant 0.000000e+00 : f32
    %31 = vector.broadcast %cst_17 : f32 to vector<1x32xf32>
    %32 = arith.maximumf %30, %31 : vector<1x32xf32>
    %cst_18 = arith.constant 9.99999974E-6 : f32
    %33 = vector.broadcast %cst_18 : f32 to vector<1x32xf32>
    %34 = arith.addf %32, %33 : vector<1x32xf32>
    %35 = math.rsqrt %34 : vector<1x32xf32>
    %36 = arith.mulf %17, %35 : vector<1x32xf32>
    %37 = arith.mulf %26, %36 : vector<1x32xf32>
    %38 = arith.subf %19, %37 : vector<1x32xf32>
    %39 = vector.broadcast %36 : vector<1x32xf32> to vector<512x32xf32>
    %40 = arith.mulf %15, %39 : vector<512x32xf32>
    %41 = vector.broadcast %38 : vector<1x32xf32> to vector<512x32xf32>
    %42 = arith.addf %40, %41 : vector<512x32xf32>
    %cst_19 = arith.constant 0.000000e+00 : f32
    %43 = vector.broadcast %cst_19 : f32 to vector<512x32xf32>
    %44 = arith.maximumf %42, %43 : vector<512x32xf32>
    %45 = arith.truncf %44 : vector<512x32xf32> to vector<512x32xbf16>
    %c0_20 = arith.constant 0 : index
    %c0_21 = arith.constant 0 : index
    %c0_22 = arith.constant 0 : index
    %46 = vector.load %arg4[%c0_20, %c0_21, %c0_22] : memref<1x32x32xbf16, #tpu.memory_space<vmem>>, vector<1x32x32xbf16>
    %47 = vector.shape_cast %46 : vector<1x32x32xbf16> to vector<32x32xbf16>
    %cst_23 = arith.constant dense<0.000000e+00> : vector<512x32xf32>
    %48 = tpu.matmul %45, %47, %cst_23 {dimension_numbers = #tpu.dot_dimension_numbers<[1], [0], [0], [1], [0, 0, 1, 1], [], []>} : vector<512x32xbf16>, vector<32x32xbf16>, vector<512x32xf32> -> vector<512x32xf32>
    %c0_24 = arith.constant 0 : index
    %c11 = arith.constant 11 : index
    %c0_25 = arith.constant 0 : index
    %49 = vector.load %arg3[%c0_24, %c11, %c0_25] : memref<1x21x32xf32, #tpu.memory_space<vmem>>, vector<1x1x32xf32>
    %50 = vector.shape_cast %49 : vector<1x1x32xf32> to vector<1x32xf32>
    %51 = vector.broadcast %50 : vector<1x32xf32> to vector<512x32xf32>
    %52 = arith.addf %48, %51 : vector<512x32xf32>
    %c0_26 = arith.constant 0 : index
    %c12 = arith.constant 12 : index
    %c0_27 = arith.constant 0 : index
    %53 = vector.load %arg3[%c0_26, %c12, %c0_27] : memref<1x21x32xf32, #tpu.memory_space<vmem>>, vector<1x1x32xf32>
    %54 = vector.shape_cast %53 : vector<1x1x32xf32> to vector<1x32xf32>
    %c0_28 = arith.constant 0 : index
    %c13 = arith.constant 13 : index
    %c0_29 = arith.constant 0 : index
    %55 = vector.load %arg3[%c0_28, %c13, %c0_29] : memref<1x21x32xf32, #tpu.memory_space<vmem>>, vector<1x1x32xf32>
    %56 = vector.shape_cast %55 : vector<1x1x32xf32> to vector<1x32xf32>
    %cst_30 = arith.constant dense<0.000000e+00> : vector<32xf32>
    %57 = vector.multi_reduction <add>, %52, %cst_30 [0] : vector<512x32xf32> to vector<32xf32>
    %58 = vector.shape_cast %57 : vector<32xf32> to vector<1x32xf32>
    %59 = arith.mulf %52, %52 : vector<512x32xf32>
    %cst_31 = arith.constant dense<0.000000e+00> : vector<32xf32>
    %60 = vector.multi_reduction <add>, %59, %cst_31 [0] : vector<512x32xf32> to vector<32xf32>
    %61 = vector.shape_cast %60 : vector<32xf32> to vector<1x32xf32>
    %cst_32 = arith.constant 0.001953125 : f32
    %62 = vector.broadcast %cst_32 : f32 to vector<1x32xf32>
    %63 = arith.mulf %58, %62 : vector<1x32xf32>
    %cst_33 = arith.constant 0.001953125 : f32
    %64 = vector.broadcast %cst_33 : f32 to vector<1x32xf32>
    %65 = arith.mulf %61, %64 : vector<1x32xf32>
    %66 = arith.mulf %63, %63 : vector<1x32xf32>
    %67 = arith.subf %65, %66 : vector<1x32xf32>
    %cst_34 = arith.constant 0.000000e+00 : f32
    %68 = vector.broadcast %cst_34 : f32 to vector<1x32xf32>
    %69 = arith.maximumf %67, %68 : vector<1x32xf32>
    %cst_35 = arith.constant 9.99999974E-6 : f32
    %70 = vector.broadcast %cst_35 : f32 to vector<1x32xf32>
    %71 = arith.addf %69, %70 : vector<1x32xf32>
    %72 = math.rsqrt %71 : vector<1x32xf32>
    %73 = arith.mulf %54, %72 : vector<1x32xf32>
    %74 = arith.mulf %63, %73 : vector<1x32xf32>
    %75 = arith.subf %56, %74 : vector<1x32xf32>
    %76 = vector.broadcast %73 : vector<1x32xf32> to vector<512x32xf32>
    %77 = arith.mulf %52, %76 : vector<512x32xf32>
    %78 = vector.broadcast %75 : vector<1x32xf32> to vector<512x32xf32>
    %79 = arith.addf %77, %78 : vector<512x32xf32>
    %cst_36 = arith.constant 0.000000e+00 : f32
    %80 = vector.broadcast %cst_36 : f32 to vector<512x32xf32>
    %81 = arith.maximumf %79, %80 : vector<512x32xf32>
    %82 = arith.truncf %81 : vector<512x32xf32> to vector<512x32xbf16>
    %c0_37 = arith.constant 0 : index
    %c0_38 = arith.constant 0 : index
    %c0_39 = arith.constant 0 : index
    %c0_40 = arith.constant 0 : index
    %83 = vector.load %arg5[%c0_37, %c0_38, %c0_39, %c0_40] : memref<1x3x32x32xbf16, #tpu.memory_space<vmem>>, vector<1x1x32x32xbf16>
    %84 = vector.shape_cast %83 : vector<1x1x32x32xbf16> to vector<32x32xbf16>
    %cst_41 = arith.constant dense<0.000000e+00> : vector<512x32xf32>
    %85 = tpu.matmul %82, %84, %cst_41 {dimension_numbers = #tpu.dot_dimension_numbers<[1], [0], [0], [1], [0, 0, 1, 1], [], []>} : vector<512x32xbf16>, vector<32x32xbf16>, vector<512x32xf32> -> vector<512x32xf32>
    %c0_42 = arith.constant 0 : index
    %c14 = arith.constant 14 : index
    %c0_43 = arith.constant 0 : index
    %86 = vector.load %arg3[%c0_42, %c14, %c0_43] : memref<1x21x32xf32, #tpu.memory_space<vmem>>, vector<1x1x32xf32>
    %87 = vector.shape_cast %86 : vector<1x1x32xf32> to vector<1x32xf32>
    %88 = vector.broadcast %87 : vector<1x32xf32> to vector<512x32xf32>
    %89 = arith.addf %85, %88 : vector<512x32xf32>
    %c0_44 = arith.constant 0 : index
    %c16 = arith.constant 16 : index
    %c0_45 = arith.constant 0 : index
    %90 = vector.load %arg3[%c0_44, %c16, %c0_45] : memref<1x21x32xf32, #tpu.memory_space<vmem>>, vector<1x1x32xf32>
    %91 = vector.shape_cast %90 : vector<1x1x32xf32> to vector<1x32xf32>
    %c0_46 = arith.constant 0 : index
    %c18 = arith.constant 18 : index
    %c0_47 = arith.constant 0 : index
    %92 = vector.load %arg3[%c0_46, %c18, %c0_47] : memref<1x21x32xf32, #tpu.memory_space<vmem>>, vector<1x1x32xf32>
    %93 = vector.shape_cast %92 : vector<1x1x32xf32> to vector<1x32xf32>
    %cst_48 = arith.constant dense<0.000000e+00> : vector<32xf32>
    %94 = vector.multi_reduction <add>, %89, %cst_48 [0] : vector<512x32xf32> to vector<32xf32>
    %95 = vector.shape_cast %94 : vector<32xf32> to vector<1x32xf32>
    %96 = arith.mulf %89, %89 : vector<512x32xf32>
    %cst_49 = arith.constant dense<0.000000e+00> : vector<32xf32>
    %97 = vector.multi_reduction <add>, %96, %cst_49 [0] : vector<512x32xf32> to vector<32xf32>
    %98 = vector.shape_cast %97 : vector<32xf32> to vector<1x32xf32>
    %cst_50 = arith.constant 0.001953125 : f32
    %99 = vector.broadcast %cst_50 : f32 to vector<1x32xf32>
    %100 = arith.mulf %95, %99 : vector<1x32xf32>
    %cst_51 = arith.constant 0.001953125 : f32
    %101 = vector.broadcast %cst_51 : f32 to vector<1x32xf32>
    %102 = arith.mulf %98, %101 : vector<1x32xf32>
    %103 = arith.mulf %100, %100 : vector<1x32xf32>
    %104 = arith.subf %102, %103 : vector<1x32xf32>
    %cst_52 = arith.constant 0.000000e+00 : f32
    %105 = vector.broadcast %cst_52 : f32 to vector<1x32xf32>
    %106 = arith.maximumf %104, %105 : vector<1x32xf32>
    %cst_53 = arith.constant 9.99999974E-6 : f32
    %107 = vector.broadcast %cst_53 : f32 to vector<1x32xf32>
    %108 = arith.addf %106, %107 : vector<1x32xf32>
    %109 = math.rsqrt %108 : vector<1x32xf32>
    %110 = arith.mulf %91, %109 : vector<1x32xf32>
    %111 = arith.mulf %100, %110 : vector<1x32xf32>
    %112 = arith.subf %93, %111 : vector<1x32xf32>
    %113 = vector.broadcast %110 : vector<1x32xf32> to vector<512x32xf32>
    %114 = arith.mulf %89, %113 : vector<512x32xf32>
    %115 = vector.broadcast %112 : vector<1x32xf32> to vector<512x32xf32>
    %116 = arith.addf %114, %115 : vector<512x32xf32>
    %cst_54 = arith.constant 0.000000e+00 : f32
    %117 = vector.broadcast %cst_54 : f32 to vector<512x32xf32>
    %118 = arith.maximumf %116, %117 : vector<512x32xf32>
    %119 = arith.truncf %118 : vector<512x32xf32> to vector<512x32xbf16>
    %c0_55 = arith.constant 0 : index
    %c1 = arith.constant 1 : index
    %c0_56 = arith.constant 0 : index
    %c0_57 = arith.constant 0 : index
    %120 = vector.load %arg5[%c0_55, %c1, %c0_56, %c0_57] : memref<1x3x32x32xbf16, #tpu.memory_space<vmem>>, vector<1x1x32x32xbf16>
    %121 = vector.shape_cast %120 : vector<1x1x32x32xbf16> to vector<32x32xbf16>
    %cst_58 = arith.constant dense<0.000000e+00> : vector<512x32xf32>
    %122 = tpu.matmul %119, %121, %cst_58 {dimension_numbers = #tpu.dot_dimension_numbers<[1], [0], [0], [1], [0, 0, 1, 1], [], []>} : vector<512x32xbf16>, vector<32x32xbf16>, vector<512x32xf32> -> vector<512x32xf32>
    %c0_59 = arith.constant 0 : index
    %c15 = arith.constant 15 : index
    %c0_60 = arith.constant 0 : index
    %123 = vector.load %arg3[%c0_59, %c15, %c0_60] : memref<1x21x32xf32, #tpu.memory_space<vmem>>, vector<1x1x32xf32>
    %124 = vector.shape_cast %123 : vector<1x1x32xf32> to vector<1x32xf32>
    %125 = vector.broadcast %124 : vector<1x32xf32> to vector<512x32xf32>
    %126 = arith.addf %122, %125 : vector<512x32xf32>
    %c0_61 = arith.constant 0 : index
    %c17 = arith.constant 17 : index
    %c0_62 = arith.constant 0 : index
    %127 = vector.load %arg3[%c0_61, %c17, %c0_62] : memref<1x21x32xf32, #tpu.memory_space<vmem>>, vector<1x1x32xf32>
    %128 = vector.shape_cast %127 : vector<1x1x32xf32> to vector<1x32xf32>
    %c0_63 = arith.constant 0 : index
    %c19 = arith.constant 19 : index
    %c0_64 = arith.constant 0 : index
    %129 = vector.load %arg3[%c0_63, %c19, %c0_64] : memref<1x21x32xf32, #tpu.memory_space<vmem>>, vector<1x1x32xf32>
    %130 = vector.shape_cast %129 : vector<1x1x32xf32> to vector<1x32xf32>
    %cst_65 = arith.constant dense<0.000000e+00> : vector<32xf32>
    %131 = vector.multi_reduction <add>, %126, %cst_65 [0] : vector<512x32xf32> to vector<32xf32>
    %132 = vector.shape_cast %131 : vector<32xf32> to vector<1x32xf32>
    %133 = arith.mulf %126, %126 : vector<512x32xf32>
    %cst_66 = arith.constant dense<0.000000e+00> : vector<32xf32>
    %134 = vector.multi_reduction <add>, %133, %cst_66 [0] : vector<512x32xf32> to vector<32xf32>
    %135 = vector.shape_cast %134 : vector<32xf32> to vector<1x32xf32>
    %cst_67 = arith.constant 0.001953125 : f32
    %136 = vector.broadcast %cst_67 : f32 to vector<1x32xf32>
    %137 = arith.mulf %132, %136 : vector<1x32xf32>
    %cst_68 = arith.constant 0.001953125 : f32
    %138 = vector.broadcast %cst_68 : f32 to vector<1x32xf32>
    %139 = arith.mulf %135, %138 : vector<1x32xf32>
    %140 = arith.mulf %137, %137 : vector<1x32xf32>
    %141 = arith.subf %139, %140 : vector<1x32xf32>
    %cst_69 = arith.constant 0.000000e+00 : f32
    %142 = vector.broadcast %cst_69 : f32 to vector<1x32xf32>
    %143 = arith.maximumf %141, %142 : vector<1x32xf32>
    %cst_70 = arith.constant 9.99999974E-6 : f32
    %144 = vector.broadcast %cst_70 : f32 to vector<1x32xf32>
    %145 = arith.addf %143, %144 : vector<1x32xf32>
    %146 = math.rsqrt %145 : vector<1x32xf32>
    %147 = arith.mulf %128, %146 : vector<1x32xf32>
    %148 = arith.mulf %137, %147 : vector<1x32xf32>
    %149 = arith.subf %130, %148 : vector<1x32xf32>
    %150 = vector.broadcast %147 : vector<1x32xf32> to vector<512x32xf32>
    %151 = arith.mulf %126, %150 : vector<512x32xf32>
    %152 = vector.broadcast %149 : vector<1x32xf32> to vector<512x32xf32>
    %153 = arith.addf %151, %152 : vector<512x32xf32>
    %cst_71 = arith.constant 0.000000e+00 : f32
    %154 = vector.broadcast %cst_71 : f32 to vector<512x32xf32>
    %155 = arith.maximumf %153, %154 : vector<512x32xf32>
    %156 = arith.truncf %155 : vector<512x32xf32> to vector<512x32xbf16>
    %c0_72 = arith.constant 0 : index
    %c2 = arith.constant 2 : index
    %c0_73 = arith.constant 0 : index
    %c0_74 = arith.constant 0 : index
    %157 = vector.load %arg5[%c0_72, %c2, %c0_73, %c0_74] : memref<1x3x32x32xbf16, #tpu.memory_space<vmem>>, vector<1x1x32x32xbf16>
    %158 = vector.shape_cast %157 : vector<1x1x32x32xbf16> to vector<32x32xbf16>
    %cst_75 = arith.constant dense<0.000000e+00> : vector<512x32xf32>
    %159 = tpu.matmul %156, %158, %cst_75 {dimension_numbers = #tpu.dot_dimension_numbers<[1], [0], [0], [1], [0, 0, 1, 1], [], []>} : vector<512x32xbf16>, vector<32x32xbf16>, vector<512x32xf32> -> vector<512x32xf32>
    %c0_76 = arith.constant 0 : index
    %c20 = arith.constant 20 : index
    %c0_77 = arith.constant 0 : index
    %160 = vector.load %arg3[%c0_76, %c20, %c0_77] : memref<1x21x32xf32, #tpu.memory_space<vmem>>, vector<1x1x32xf32>
    %161 = vector.shape_cast %160 : vector<1x1x32xf32> to vector<1x32xf32>
    %162 = vector.broadcast %161 : vector<1x32xf32> to vector<512x32xf32>
    %163 = arith.addf %159, %162 : vector<512x32xf32>
    %164 = vector.extract_strided_slice %163 {offsets = [0, 0], sizes = [512, 3], strides = [1, 1]} : vector<512x32xf32> to vector<512x3xf32>
    %165 = vector.shape_cast %164 : vector<512x3xf32> to vector<2x256x3xf32>
    %166 = tpu.transpose %165, [0, 2, 1] : vector<2x256x3xf32> -> vector<2x3x256xf32>
    %c0_78 = arith.constant 0 : index
    %c0_79 = arith.constant 0 : index
    %c0_80 = arith.constant 0 : index
    %c0_81 = arith.constant 0 : index
    %167 = vector.load %arg6[%c0_78, %c0_79, %c0_80, %c0_81] : memref<2x1x3x256xf32, #tpu.memory_space<vmem>>, vector<2x1x3x256xf32>
    %168 = vector.shape_cast %167 : vector<2x1x3x256xf32> to vector<2x3x256xf32>
    %169 = vector.shape_cast %166 : vector<2x3x256xf32> to vector<2x1x3x256xf32>
    tpu.vector_store %arg6[%c0_78, %c0_79, %c0_80, %c0_81], %169 {strides = array<i32>} : memref<2x1x3x256xf32, #tpu.memory_space<vmem>>, vector<2x1x3x256xf32>,
    return
  }
  func.func @transform_0(%arg0: i32) -> (i32, i32, i32) {
    %c0_i32 = arith.constant 0 : i32
    %c0_i32_0 = arith.constant 0 : i32
    %c0_i32_1 = arith.constant 0 : i32
    return %arg0, %c0_i32, %c0_i32_0 : i32, i32, i32
  }
  func.func @transform_1(%arg0: i32) -> (i32, i32) {
    %c0_i32 = arith.constant 0 : i32
    %c0_i32_0 = arith.constant 0 : i32
    %c0_i32_1 = arith.constant 0 : i32
    return %c0_i32, %c0_i32_0 : i32, i32
  }
  func.func @transform_2(%arg0: i32) -> (i32, i32, i32) {
    %c0_i32 = arith.constant 0 : i32
    %c0_i32_0 = arith.constant 0 : i32
    %c0_i32_1 = arith.constant 0 : i32
    return %arg0, %c0_i32, %c0_i32_0 : i32, i32, i32
  }
  func.func @transform_3(%arg0: i32) -> (i32, i32, i32) {
    %c0_i32 = arith.constant 0 : i32
    %c0_i32_0 = arith.constant 0 : i32
    %c0_i32_1 = arith.constant 0 : i32
    return %arg0, %c0_i32, %c0_i32_0 : i32, i32, i32
  }
  func.func @transform_4(%arg0: i32) -> (i32, i32, i32, i32) {
    %c0_i32 = arith.constant 0 : i32
    %c0_i32_0 = arith.constant 0 : i32
    %c0_i32_1 = arith.constant 0 : i32
    %c0_i32_2 = arith.constant 0 : i32
    return %arg0, %c0_i32, %c0_i32_0, %c0_i32_1 : i32, i32, i32, i32
  }
  func.func @transform_5(%arg0: i32) -> (i32, i32, i32, i32) {
    %c0_i32 = arith.constant 0 : i32
    %c0_i32_0 = arith.constant 0 : i32
    %c0_i32_1 = arith.constant 0 : i32
    %c0_i32_2 = arith.constant 0 : i32
    return %c0_i32, %arg0, %c0_i32_0, %c0_i32_1 : i32, i32, i32, i32
  }
}

</mosaic_0001>

<llo_original>
// kernel: tpu_custom_call.1
$region0: #{tpu_custom_call.1}
  #allocation0 [shape = 'u32[]', space=smem, size = 0x4, offset = 0x4, fixed_abs, tag = 'smem constant byte address 0x4 - core index']
  #allocation1 [shape = 'u32[144,128]{1,0:T(1,128)}', space=vmem, size = 0x12000, scoped, tag = 'internal scratch']
  %s0 = inlined_call_operand.vmem [shape: f32[2,256,8], index: 0, kind: input, shape index: {}]
  %s1 = inlined_call_operand.vmem [shape: f32[2,32], index: 1, kind: input, shape index: {}]
  %s2 = inlined_call_operand.vmem [shape: f32[2,21,32], index: 2, kind: input, shape index: {}]
  %s3 = inlined_call_operand.vmem [shape: bf16[2,32,32], index: 3, kind: input, shape index: {}]
  %s4 = inlined_call_operand.vmem [shape: bf16[2,3,32,32], index: 4, kind: input, shape index: {}]
  %s5 = inlined_call_operand.vmem [shape: f32[2,2,3,256], index: 5, kind: output, shape index: {}]
  %s6 = sld [smem:[#allocation0]]
  $region87: #{tpu_custom_call.1} parent=0
    _
  %s8 = ssub.s32 1, %s6
  %s9 = scalar_select 0, %s8, %s6
  $region1: #{tpu_custom_call.1} parent=0
    #allocation2 [shape = 'u8[16384]{0}', space=vmem, size = 0x4000, scoped, tag = 'output window, operand 0']
    loop: start=0, step=1, limit=4
    $region2: #{tpu_custom_call.1} parent=1 // loop_pre_header
      _
    $region3: #{tpu_custom_call.1} parent=1 // loop_header
      %s11 = sphi 0, %s15
      %p12 = scmp.ge.s32.totalorder %s11, 4
      %s21 = sphi 0, %s23
      %s24 = sphi 0, %s21
      %s25 = sphi 0, %s24
      %s41 = sphi 0, %s25
      %s45 = sphi 0, %s45
      %s47 = sphi 0, %s45
      %s48 = sphi 0, %s47
      %s62 = sphi 0, %s48
      %s68 = sphi 0, %s70
      %s71 = sphi 0, %s68
      %s72 = sphi 0, %s71
      %s88 = sphi 0, %s72
      %s94 = sphi 0, %s96
      %s97 = sphi 0, %s94
      %s98 = sphi 0, %s97
      %s114 = sphi 0, %s98
      %s120 = sphi 0, %s122
      %s123 = sphi 0, %s120
      %s124 = sphi 0, %s123
      %s140 = sphi 0, %s124
      %s146 = sphi 0, %s148
      %s149 = sphi 0, %s146
      %s150 = sphi 0, %s149
      %s166 = sphi 0, %s150
    $region4: #{tpu_custom_call.1} parent=1 // loop_header_branch
      %14 = sbr.rel (%p12) target = $region8
    $region5: #{tpu_custom_call.1} parent=1 // loop_body
      %s16 = ssub.s32 %s11, 1
      %s17 = ssub.s32 %s11, 2
      %s18 = sadd.s32 %s11, 1
      %s19 = ssub.s32 %s11, %s18
      %p20 = scmp.eq.s32.totalorder %s19, 0
      %s22 = sadd.s32 %s21, 1
      %s23 = scalar_select %p20, %s21, %s22
      %p26 = pneg %p20
      %p27 = scmp.eq.s32.totalorder %s11, 1
      %p28 = por %p26, %p27
      %p29 = scmp.ne.s32.totalorder %s21, %s24
      %p30 = scmp.eq.s32.totalorder %s11, 0
      %p31 = por %p29, %p30
      %p32 = scmp.ne.s32.totalorder %s21, %s24
      %p33 = scmp.eq.s32.totalorder %s16, 1
      %p34 = por %p32, %p33
      %p35 = scmp.ne.s32.totalorder %s24, %s25
      %p36 = scmp.eq.s32.totalorder %s16, 0
      %p37 = por %p35, %p36
      %p38 = scmp.ne.s32.totalorder %s24, %s25
      %p39 = scmp.eq.s32.totalorder %s17, 1
      %p40 = por %p38, %p39
      %p42 = scmp.ne.s32.totalorder %s25, %s41
      %p43 = scmp.eq.s32.totalorder %s17, 0
      %p44 = por %p42, %p43
      %s46 = sadd.s32 %s45, 1
      %p49 = scmp.eq.s32.totalorder %s11, 1
      %p50 = scmp.ne.s32.totalorder %s45, %s47
      %p51 = scmp.eq.s32.totalorder %s11, 0
      %p52 = por %p50, %p51
      %p53 = scmp.ne.s32.totalorder %s45, %s47
      %p54 = scmp.eq.s32.totalorder %s16, 1
      %p55 = por %p53, %p54
      %p56 = scmp.ne.s32.totalorder %s47, %s48
      %p57 = scmp.eq.s32.totalorder %s16, 0
      %p58 = por %p56, %p57
      %p59 = scmp.ne.s32.totalorder %s47, %s48
      %p60 = scmp.eq.s32.totalorder %s17, 1
      %p61 = por %p59, %p60
      %p63 = scmp.ne.s32.totalorder %s48, %s62
      %p64 = scmp.eq.s32.totalorder %s17, 0
      %p65 = por %p63, %p64
      %s66 = ssub.s32 %s11, %s18
      %p67 = scmp.eq.s32.totalorder %s66, 0
      %s69 = sadd.s32 %s68, 1
      %s70 = scalar_select %p67, %s68, %s69
      %p73 = pneg %p67
      %p74 = scmp.eq.s32.totalorder %s11, 1
      %p75 = por %p73, %p74
      %p76 = scmp.ne.s32.totalorder %s68, %s71
      %p77 = scmp.eq.s32.totalorder %s11, 0
      %p78 = por %p76, %p77
      %p79 = scmp.ne.s32.totalorder %s68, %s71
      %p80 = scmp.eq.s32.totalorder %s16, 1
      %p81 = por %p79, %p80
      %p82 = scmp.ne.s32.totalorder %s71, %s72
      %p83 = scmp.eq.s32.totalorder %s16, 0
      %p84 = por %p82, %p83
      %p85 = scmp.ne.s32.totalorder %s71, %s72
      %p86 = scmp.eq.s32.totalorder %s17, 1
      %p87 = por %p85, %p86
      %p89 = scmp.ne.s32.totalorder %s72, %s88
      %p90 = scmp.eq.s32.totalorder %s17, 0
      %p91 = por %p89, %p90
      %s92 = ssub.s32 %s11, %s18
      %p93 = scmp.eq.s32.totalorder %s92, 0
      %s95 = sadd.s32 %s94, 1
      %s96 = scalar_select %p93, %s94, %s95
      %p99 = pneg %p93
      %p100 = scmp.eq.s32.totalorder %s11, 1
      %p101 = por %p99, %p100
      %p102 = scmp.ne.s32.totalorder %s94, %s97
      %p103 = scmp.eq.s32.totalorder %s11, 0
      %p104 = por %p102, %p103
      %p105 = scmp.ne.s32.totalorder %s94, %s97
      %p106 = scmp.eq.s32.totalorder %s16, 1
      %p107 = por %p105, %p106
      %p108 = scmp.ne.s32.totalorder %s97, %s98
      %p109 = scmp.eq.s32.totalorder %s16, 0
      %p110 = por %p108, %p109
      %p111 = scmp.ne.s32.totalorder %s97, %s98
      %p112 = scmp.eq.s32.totalorder %s17, 1
      %p113 = por %p111, %p112
      %p115 = scmp.ne.s32.totalorder %s98, %s114
      %p116 = scmp.eq.s32.totalorder %s17, 0
      %p117 = por %p115, %p116
      %s118 = ssub.s32 %s11, %s18
      %p119 = scmp.eq.s32.totalorder %s118, 0
      %s121 = sadd.s32 %s120, 1
      %s122 = scalar_select %p119, %s120, %s121
      %p125 = pneg %p119
      %p126 = scmp.eq.s32.totalorder %s11, 1
      %p127 = por %p125, %p126
      %p128 = scmp.ne.s32.totalorder %s120, %s123
      %p129 = scmp.eq.s32.totalorder %s11, 0
      %p130 = por %p128, %p129
      %p131 = scmp.ne.s32.totalorder %s120, %s123
      %p132 = scmp.eq.s32.totalorder %s16, 1
      %p133 = por %p131, %p132
      %p134 = scmp.ne.s32.totalorder %s123, %s124
      %p135 = scmp.eq.s32.totalorder %s16, 0
      %p136 = por %p134, %p135
      %p137 = scmp.ne.s32.totalorder %s123, %s124
      %p138 = scmp.eq.s32.totalorder %s17, 1
      %p139 = por %p137, %p138
      %p141 = scmp.ne.s32.totalorder %s124, %s140
      %p142 = scmp.eq.s32.totalorder %s17, 0
      %p143 = por %p141, %p142
      %s144 = ssub.s32 %s11, %s18
      %p145 = scmp.eq.s32.totalorder %s144, 0
      %s147 = sadd.s32 %s146, 1
      %s148 = scalar_select %p145, %s146, %s147
      %p151 = pneg %p145
      %p152 = scmp.eq.s32.totalorder %s11, 1
      %p153 = por %p151, %p152
      %p154 = scmp.ne.s32.totalorder %s146, %s149
      %p155 = scmp.eq.s32.totalorder %s11, 0
      %p156 = por %p154, %p155
      %p157 = scmp.ne.s32.totalorder %s146, %s149
      %p158 = scmp.eq.s32.totalorder %s16, 1
      %p159 = por %p157, %p158
      %p160 = scmp.ne.s32.totalorder %s149, %s150
      %p161 = scmp.eq.s32.totalorder %s16, 0
      %p162 = por %p160, %p161
      %p163 = scmp.ne.s32.totalorder %s149, %s150
      %p164 = scmp.eq.s32.totalorder %s17, 1
      %p165 = por %p163, %p164
      %p167 = scmp.ne.s32.totalorder %s150, %s166
      %p168 = scmp.eq.s32.totalorder %s17, 0
      %p169 = por %p167, %p168
      %p170 = scmp.le.s32.totalorder 1, %s11
      %p171 = scmp.lt.s32.totalorder %s11, 3
      %p172 = pnand %p170, %p171
      %p173 = pneg %p172
      // Predicated region
      $region9: #{tpu_custom_call.1} parent=5 // pred_check
        _
      $region10: #{tpu_custom_call.1} parent=5 // pred_check_branch
        %175 = sbr.rel (%p172) target = $region12
      $region11: #{tpu_custom_call.1} parent=5 // pred_region
        %s176 = ssub.s32 %s11, 1
        // Predicated region
        $region13: #{tpu_custom_call.1} parent=11 // pred_check
          %p177 = pneg %p58
        $region14: #{tpu_custom_call.1} parent=11 // pred_check_branch
          %179 = sbr.rel (%p177) target = $region16
        $region15: #{tpu_custom_call.1} parent=11 // pred_region
          _
        $region16: #{tpu_custom_call.1} parent=11 // pred_fallthru
          _
      $region12: #{tpu_custom_call.1} parent=5 // pred_fallthru
        _
      %p180 = scmp.lt.s32.totalorder %s11, 2
      // Predicated region
      $region17: #{tpu_custom_call.1} parent=5 // pred_check
        %p181 = pneg %p180
      $region18: #{tpu_custom_call.1} parent=5 // pred_check_branch
        %183 = sbr.rel (%p181) target = $region20
      $region19: #{tpu_custom_call.1} parent=5 // pred_region
        // Predicated region
        $region21: #{tpu_custom_call.1} parent=19 // pred_check
          %p184 = pneg %p31
        $region22: #{tpu_custom_call.1} parent=19 // pred_check_branch
          %186 = sbr.rel (%p184) target = $region24
        $region23: #{tpu_custom_call.1} parent=19 // pred_region
          %p187 = scmp.lt.s32.totalorder %s11, 1
          %s188 = scalar_select %p187, %s11, 1
          %s189 = smul.addr %s188, 32
          %s190 = smul.addr %s189, 8
          %s191 = scalar_lea.vmem %s0, %s190
        $region24: #{tpu_custom_call.1} parent=19 // pred_fallthru
          _
        // Predicated region
        $region25: #{tpu_custom_call.1} parent=19 // pred_check
          %p192 = pneg %p78
        $region26: #{tpu_custom_call.1} parent=19 // pred_check_branch
          %194 = sbr.rel (%p192) target = $region28
        $region27: #{tpu_custom_call.1} parent=19 // pred_region
          %p195 = scmp.lt.s32.totalorder %s11, 1
          %s196 = scalar_select %p195, %s11, 1
          %s197 = smul.addr %s196, 3
          %s198 = smul.addr %s197, 8
          %s199 = scalar_lea.vmem %s2, %s198
        $region28: #{tpu_custom_call.1} parent=19 // pred_fallthru
          _
        // Predicated region
        $region29: #{tpu_custom_call.1} parent=19 // pred_check
          %p200 = pneg %p104
        $region30: #{tpu_custom_call.1} parent=19 // pred_check_branch
          %202 = sbr.rel (%p200) target = $region32
        $region31: #{tpu_custom_call.1} parent=19 // pred_region
          %p203 = scmp.lt.s32.totalorder %s11, 1
          %s204 = scalar_select %p203, %s11, 1
          %s205 = smul.addr %s204, 4
          %s206 = smul.addr %s205, 4
          %s207 = scalar_lea.vmem %s3, %s206
        $region32: #{tpu_custom_call.1} parent=19 // pred_fallthru
          _
        // Predicated region
        $region33: #{tpu_custom_call.1} parent=19 // pred_check
          %p208 = pneg %p130
        $region34: #{tpu_custom_call.1} parent=19 // pred_check_branch
          %210 = sbr.rel (%p208) target = $region36
        $region35: #{tpu_custom_call.1} parent=19 // pred_region
          %p211 = scmp.lt.s32.totalorder %s11, 1
          %s212 = scalar_select %p211, %s11, 1
          %s213 = smul.addr %s212, 12
          %s214 = smul.addr %s213, 4
          %s215 = scalar_lea.vmem %s4, %s214
        $region36: #{tpu_custom_call.1} parent=19 // pred_fallthru
          _
      $region20: #{tpu_custom_call.1} parent=5 // pred_fallthru
        _
      %p216 = scmp.le.s32.totalorder 1, %s11
      %p217 = scmp.lt.s32.totalorder %s11, 3
      %p218 = pnand %p216, %p217
      %p219 = pneg %p218
      // Predicated region
      $region37: #{tpu_custom_call.1} parent=5 // pred_check
        _
      $region38: #{tpu_custom_call.1} parent=5 // pred_check_branch
        %221 = sbr.rel (%p218) target = $region40
      $region39: #{tpu_custom_call.1} parent=5 // pred_region
        %s222 = ssub.s32 %s11, 1
        %p223 = scmp.lt.s32.totalorder %s16, 1
        %s224 = scalar_select %p223, %s16, 1
        %s225 = smul.addr %s224, 32
        %s226 = smul.addr %s225, 8
        %s227 = scalar_lea.vmem %s0, %s226
        %p228 = pneg %p37
        %p229 = pneg %p34
        %p230 = pneg %p58
        %p231 = pneg %p55
        %p232 = scmp.lt.s32.totalorder %s16, 1
        %s233 = scalar_select %p232, %s16, 1
        %s234 = smul.addr %s233, 3
        %s235 = smul.addr %s234, 8
        %s236 = scalar_lea.vmem %s2, %s235
        %p237 = pneg %p84
        %p238 = pneg %p81
        %p239 = scmp.lt.s32.totalorder %s16, 1
        %s240 = scalar_select %p239, %s16, 1
        %s241 = smul.addr %s240, 4
        %s242 = smul.addr %s241, 4
        %s243 = scalar_lea.vmem %s3, %s242
        %p244 = pneg %p110
        %p245 = pneg %p107
        %p246 = scmp.lt.s32.totalorder %s16, 1
        %s247 = scalar_select %p246, %s16, 1
        %s248 = smul.addr %s247, 12
        %s249 = smul.addr %s248, 4
        %s250 = scalar_lea.vmem %s4, %s249
        %p251 = pneg %p136
        %p252 = pneg %p133
        %p253 = pneg %p162
        %p254 = pneg %p159
        %s255 = sand.u32 %s149, 1
        %s256 = sand.u32 %s149, 1
        %s257 = smul.addr %s256, 16
        %s258 = scalar_lea.vmem [#allocation2], %s257
        %p259 = scmp.lt.s32.totalorder %s16, 1
        %s260 = scalar_select %p259, %s16, 1
        %s261 = smul.addr %s260, 32
        %s262 = smul.addr %s261, 8
        %s263 = scalar_lea.vmem %s0, %s262
        %p264 = scmp.lt.s32.totalorder %s16, 1
        %s265 = scalar_select %p264, %s16, 1
        %s266 = smul.addr %s265, 3
        %s267 = smul.addr %s266, 8
        %s268 = scalar_lea.vmem %s2, %s267
        %p269 = scmp.lt.s32.totalorder %s16, 1
        %s270 = scalar_select %p269, %s16, 1
        %s271 = smul.addr %s270, 4
        %s272 = smul.addr %s271, 4
        %s273 = scalar_lea.vmem %s3, %s272
        %p274 = scmp.lt.s32.totalorder %s16, 1
        %s275 = scalar_select %p274, %s16, 1
        %s276 = smul.addr %s275, 12
        %s277 = smul.addr %s276, 4
        %s278 = scalar_lea.vmem %s4, %s277
        %v280 = vld [vmem:[%s263] sm:$0xff]
        %v281 = vld [vmem:[%s263 + $0x8] sm:$0xff]
        %v282 = vld [vmem:[%s263 + $0x10] sm:$0xff]
        %v283 = vld [vmem:[%s263 + $0x18] sm:$0xff]
        %v284 = vld [vmem:[%s263 + $0x20] sm:$0xff]
        %v285 = vld [vmem:[%s263 + $0x28] sm:$0xff]
        %v286 = vld [vmem:[%s263 + $0x30] sm:$0xff]
        %v287 = vld [vmem:[%s263 + $0x38] sm:$0xff]
        %v288 = vld [vmem:[%s263 + $0x40] sm:$0xff]
        %v289 = vld [vmem:[%s263 + $0x48] sm:$0xff]
        %v290 = vld [vmem:[%s263 + $0x50] sm:$0xff]
        %v291 = vld [vmem:[%s263 + $0x58] sm:$0xff]
        %v292 = vld [vmem:[%s263 + $0x60] sm:$0xff]
        %v293 = vld [vmem:[%s263 + $0x68] sm:$0xff]
        %v294 = vld [vmem:[%s263 + $0x70] sm:$0xff]
        %v295 = vld [vmem:[%s263 + $0x78] sm:$0xff]
        %v296 = vld [vmem:[%s263 + $0x80] sm:$0xff]
        %v297 = vld [vmem:[%s263 + $0x88] sm:$0xff]
        %v298 = vld [vmem:[%s263 + $0x90] sm:$0xff]
        %v299 = vld [vmem:[%s263 + $0x98] sm:$0xff]
        %v300 = vld [vmem:[%s263 + $0xa0] sm:$0xff]
        %v301 = vld [vmem:[%s263 + $0xa8] sm:$0xff]
        %v302 = vld [vmem:[%s263 + $0xb0] sm:$0xff]
        %v303 = vld [vmem:[%s263 + $0xb8] sm:$0xff]
        %v304 = vld [vmem:[%s263 + $0xc0] sm:$0xff]
        %v305 = vld [vmem:[%s263 + $0xc8] sm:$0xff]
        %v306 = vld [vmem:[%s263 + $0xd0] sm:$0xff]
        %v307 = vld [vmem:[%s263 + $0xd8] sm:$0xff]
        %v308 = vld [vmem:[%s263 + $0xe0] sm:$0xff]
        %v309 = vld [vmem:[%s263 + $0xe8] sm:$0xff]
        %v310 = vld [vmem:[%s263 + $0xf0] sm:$0xff]
        %v311 = vld [vmem:[%s263 + $0xf8] sm:$0xff]
        %v312 = vld [vmem:[%s268] sm:$0xff]
        %v313 = vld [vmem:[%s268 + $0x8] sm:$0x1]
        %v314 = vlaneseq
        %v315 = vshrl.u32 %v314, 7
        %v316 = vsub.s32 0, %v315
        %v317 = vrot.slane %v313, %v316
        %vm318 = vcmask 64512
        %v320 = vsel %vm318, %v280, 0
        %v323 = vsel %vm318, %v281, 0
        %v326 = vsel %vm318, %v282, 0
        %v329 = vsel %vm318, %v283, 0
        %v332 = vsel %vm318, %v284, 0
        %v335 = vsel %vm318, %v285, 0
        %v338 = vsel %vm318, %v286, 0
        %v341 = vsel %vm318, %v287, 0
        %v344 = vsel %vm318, %v288, 0
        %v347 = vsel %vm318, %v289, 0
        %v350 = vsel %vm318, %v290, 0
        %v353 = vsel %vm318, %v291, 0
        %v356 = vsel %vm318, %v292, 0
        %v359 = vsel %vm318, %v293, 0
        %v362 = vsel %vm318, %v294, 0
        %v365 = vsel %vm318, %v295, 0
        %v368 = vsel %vm318, %v296, 0
        %v371 = vsel %vm318, %v297, 0
        %v374 = vsel %vm318, %v298, 0
        %v377 = vsel %vm318, %v299, 0
        %v380 = vsel %vm318, %v300, 0
        %v383 = vsel %vm318, %v301, 0
        %v386 = vsel %vm318, %v302, 0
        %v389 = vsel %vm318, %v303, 0
        %v392 = vsel %vm318, %v304, 0
        %v395 = vsel %vm318, %v305, 0
        %v398 = vsel %vm318, %v306, 0
        %v401 = vsel %vm318, %v307, 0
        %v404 = vsel %vm318, %v308, 0
        %v407 = vsel %vm318, %v309, 0
        %v410 = vsel %vm318, %v310, 0
        %v413 = vsel %vm318, %v311, 0
        %415 = vmatprep.subr.mxu0 0.0
        %416 = vmatpush1.msra.mxu0 %v312
        %417 = vmatprep.subr.mxu0 0.0
        %418 = vmatpush1.msra.mxu0 0.0
        %419 = vmatprep.subr.mxu0 0.0
        %420 = vmatpush1.msra.mxu0 0.0
        %421 = vmatprep.subr.mxu0 0.0
        %422 = vmatpush1.msra.mxu0 0.0
        %423 = vmatprep.subr.mxu0 0.0
        %424 = vmatpush1.msra.mxu0 0.0
        %425 = vmatprep.subr.mxu0 0.0
        %426 = vmatpush1.msra.mxu0 0.0
        %427 = vmatprep.subr.mxu0 0.0
        %428 = vmatpush1.msra.mxu0 0.0
        %429 = vmatprep.subr.mxu0 0.0
        %430 = vmatpush1.msra.mxu0 0.0
        %431 = vmatprep.subr.mxu0 0.0
        %432 = vmatpush1.msra.mxu0 0.0
        %433 = vmatprep.subr.mxu0 0.0
        %434 = vmatpush1.msra.mxu0 0.0
        %435 = vmatprep.subr.mxu0 0.0
        %436 = vmatpush1.msra.mxu0 0.0
        %437 = vmatprep.subr.mxu0 0.0
        %438 = vmatpush1.msra.mxu0 0.0
        %439 = vmatprep.subr.mxu0 0.0
        %440 = vmatpush1.msra.mxu0 0.0
        %441 = vmatprep.subr.mxu0 0.0
        %442 = vmatpush1.msra.mxu0 0.0
        %443 = vmatprep.subr.mxu0 0.0
        %444 = vmatpush1.msra.mxu0 0.0
        %445 = vmatprep.subr.mxu0 0.0
        %446 = vmatpush1.msra.mxu0 0.0
        %447 = vmatprep.subr.mxu0 0.0
        %448 = vmatpush1.msra.mxu0 0.0
        %449 = vmatprep.subr.mxu0 0.0
        %450 = vmatpush1.msra.mxu0 0.0
        %451 = vmatprep.subr.mxu0 0.0
        %452 = vmatpush1.msra.mxu0 0.0
        %453 = vmatprep.subr.mxu0 0.0
        %454 = vmatpush1.msra.mxu0 0.0
        %455 = vmatprep.subr.mxu0 0.0
        %456 = vmatpush1.msra.mxu0 0.0
        %457 = vmatprep.subr.mxu0 0.0
        %458 = vmatpush1.msra.mxu0 0.0
        %459 = vmatprep.subr.mxu0 0.0
        %460 = vmatpush1.msra.mxu0 0.0
        %461 = vmatprep.subr.mxu0 0.0
        %462 = vmatpush1.msra.mxu0 0.0
        %463 = vmatprep.subr.mxu0 0.0
        %464 = vmatpush1.msra.mxu0 0.0
        %465 = vmatprep.subr.mxu0 0.0
        %466 = vmatpush1.msra.mxu0 0.0
        %467 = vmatprep.subr.mxu0 0.0
        %468 = vmatpush1.msra.mxu0 0.0
        %469 = vmatprep.subr.mxu0 0.0
        %470 = vmatpush1.msra.mxu0 0.0
        %471 = vmatprep.subr.mxu0 0.0
        %472 = vmatpush1.msra.mxu0 0.0
        %473 = vmatprep.subr.mxu0 0.0
        %474 = vmatpush1.msra.mxu0 0.0
        %475 = vmatprep.subr.mxu0 0.0
        %476 = vmatpush1.msra.mxu0 0.0
        %477 = vmatprep.subr.mxu0 0.0
        %478 = vmatpush1.msra.mxu0 0.0
        %479 = vmatprep.mubr.f32.mxu0 0.0
        %480 = vmatmul.mubr.f32.gmra.mrb[0].mxu0 %v320
        %v481 = vpop.f32.mrb[0].mxu0
        %v482 = vadd.f32 %v317, %v481
        %v483 = vpop.f32.mrb[0].mxu0
        %484 = vmatprep.mubr.f32.mxu0 0.0
        %485 = vmatmul.mubr.f32.gmra.mrb[0].mxu0 %v323
        %v486 = vpop.f32.mrb[0].mxu0
        %v487 = vadd.f32 %v317, %v486
        %v488 = vpop.f32.mrb[0].mxu0
        %489 = vmatprep.mubr.f32.mxu0 0.0
        %490 = vmatmul.mubr.f32.gmra.mrb[0].mxu0 %v326
        %v491 = vpop.f32.mrb[0].mxu0
        %v492 = vadd.f32 %v317, %v491
        %v493 = vpop.f32.mrb[0].mxu0
        %494 = vmatprep.mubr.f32.mxu0 0.0
        %495 = vmatmul.mubr.f32.gmra.mrb[0].mxu0 %v329
        %v496 = vpop.f32.mrb[0].mxu0
        %v497 = vadd.f32 %v317, %v496
        %v498 = vpop.f32.mrb[0].mxu0
        %499 = vmatprep.mubr.f32.mxu0 0.0
        %500 = vmatmul.mubr.f32.gmra.mrb[0].mxu0 %v332
        %v501 = vpop.f32.mrb[0].mxu0
        %v502 = vadd.f32 %v317, %v501
        %v503 = vpop.f32.mrb[0].mxu0
        %504 = vmatprep.mubr.f32.mxu0 0.0
        %505 = vmatmul.mubr.f32.gmra.mrb[0].mxu0 %v335
        %v506 = vpop.f32.mrb[0].mxu0
        %v507 = vadd.f32 %v317, %v506
        %v508 = vpop.f32.mrb[0].mxu0
        %509 = vmatprep.mubr.f32.mxu0 0.0
        %510 = vmatmul.mubr.f32.gmra.mrb[0].mxu0 %v338
        %v511 = vpop.f32.mrb[0].mxu0
        %v512 = vadd.f32 %v317, %v511
        %v513 = vpop.f32.mrb[0].mxu0
        %514 = vmatprep.mubr.f32.mxu0 0.0
        %515 = vmatmul.mubr.f32.gmra.mrb[0].mxu0 %v341
        %v516 = vpop.f32.mrb[0].mxu0
        %v517 = vadd.f32 %v317, %v516
        %v518 = vpop.f32.mrb[0].mxu0
        %519 = vmatprep.mubr.f32.mxu0 0.0
        %520 = vmatmul.mubr.f32.gmra.mrb[0].mxu0 %v344
        %v521 = vpop.f32.mrb[0].mxu0
        %v522 = vadd.f32 %v317, %v521
        %v523 = vpop.f32.mrb[0].mxu0
        %524 = vmatprep.mubr.f32.mxu0 0.0
        %525 = vmatmul.mubr.f32.gmra.mrb[0].mxu0 %v347
        %v526 = vpop.f32.mrb[0].mxu0
        %v527 = vadd.f32 %v317, %v526
        %v528 = vpop.f32.mrb[0].mxu0
        %529 = vmatprep.mubr.f32.mxu0 0.0
        %530 = vmatmul.mubr.f32.gmra.mrb[0].mxu0 %v350
        %v531 = vpop.f32.mrb[0].mxu0
        %v532 = vadd.f32 %v317, %v531
        %v533 = vpop.f32.mrb[0].mxu0
        %534 = vmatprep.mubr.f32.mxu0 0.0
        %535 = vmatmul.mubr.f32.gmra.mrb[0].mxu0 %v353
        %v536 = vpop.f32.mrb[0].mxu0
        %v537 = vadd.f32 %v317, %v536
        %v538 = vpop.f32.mrb[0].mxu0
        %539 = vmatprep.mubr.f32.mxu0 0.0
        %540 = vmatmul.mubr.f32.gmra.mrb[0].mxu0 %v356
        %v541 = vpop.f32.mrb[0].mxu0
        %v542 = vadd.f32 %v317, %v541
        %v543 = vpop.f32.mrb[0].mxu0
        %544 = vmatprep.mubr.f32.mxu0 0.0
        %545 = vmatmul.mubr.f32.gmra.mrb[0].mxu0 %v359
        %v546 = vpop.f32.mrb[0].mxu0
        %v547 = vadd.f32 %v317, %v546
        %v548 = vpop.f32.mrb[0].mxu0
        %549 = vmatprep.mubr.f32.mxu0 0.0
        %550 = vmatmul.mubr.f32.gmra.mrb[0].mxu0 %v362
        %v551 = vpop.f32.mrb[0].mxu0
        %v552 = vadd.f32 %v317, %v551
        %v553 = vpop.f32.mrb[0].mxu0
        %554 = vmatprep.mubr.f32.mxu0 0.0
        %555 = vmatmul.mubr.f32.gmra.mrb[0].mxu0 %v365
        %v556 = vpop.f32.mrb[0].mxu0
        %v557 = vadd.f32 %v317, %v556
        %v558 = vpop.f32.mrb[0].mxu0
        %559 = vmatprep.mubr.f32.mxu0 0.0
        %560 = vmatmul.mubr.f32.gmra.mrb[0].mxu0 %v368
        %v561 = vpop.f32.mrb[0].mxu0
        %v562 = vadd.f32 %v317, %v561
        %v563 = vpop.f32.mrb[0].mxu0
        %564 = vmatprep.mubr.f32.mxu0 0.0
        %565 = vmatmul.mubr.f32.gmra.mrb[0].mxu0 %v371
        %v566 = vpop.f32.mrb[0].mxu0
        %v567 = vadd.f32 %v317, %v566
        %v568 = vpop.f32.mrb[0].mxu0
        %569 = vmatprep.mubr.f32.mxu0 0.0
        %570 = vmatmul.mubr.f32.gmra.mrb[0].mxu0 %v374
        %v571 = vpop.f32.mrb[0].mxu0
        %v572 = vadd.f32 %v317, %v571
        %v573 = vpop.f32.mrb[0].mxu0
        %574 = vmatprep.mubr.f32.mxu0 0.0
        %575 = vmatmul.mubr.f32.gmra.mrb[0].mxu0 %v377
        %v576 = vpop.f32.mrb[0].mxu0
        %v577 = vadd.f32 %v317, %v576
        %v578 = vpop.f32.mrb[0].mxu0
        %579 = vmatprep.mubr.f32.mxu0 0.0
        %580 = vmatmul.mubr.f32.gmra.mrb[0].mxu0 %v380
        %v581 = vpop.f32.mrb[0].mxu0
        %v582 = vadd.f32 %v317, %v581
        %v583 = vpop.f32.mrb[0].mxu0
        %584 = vmatprep.mubr.f32.mxu0 0.0
        %585 = vmatmul.mubr.f32.gmra.mrb[0].mxu0 %v383
        %v586 = vpop.f32.mrb[0].mxu0
        %v587 = vadd.f32 %v317, %v586
        %v588 = vpop.f32.mrb[0].mxu0
        %589 = vmatprep.mubr.f32.mxu0 0.0
        %590 = vmatmul.mubr.f32.gmra.mrb[0].mxu0 %v386
        %v591 = vpop.f32.mrb[0].mxu0
        %v592 = vadd.f32 %v317, %v591
        %v593 = vpop.f32.mrb[0].mxu0
        %594 = vmatprep.mubr.f32.mxu0 0.0
        %595 = vmatmul.mubr.f32.gmra.mrb[0].mxu0 %v389
        %v596 = vpop.f32.mrb[0].mxu0
        %v597 = vadd.f32 %v317, %v596
        %v598 = vpop.f32.mrb[0].mxu0
        %599 = vmatprep.mubr.f32.mxu0 0.0
        %600 = vmatmul.mubr.f32.gmra.mrb[0].mxu0 %v392
        %v601 = vpop.f32.mrb[0].mxu0
        %v602 = vadd.f32 %v317, %v601
        %v603 = vpop.f32.mrb[0].mxu0
        %604 = vmatprep.mubr.f32.mxu0 0.0
        %605 = vmatmul.mubr.f32.gmra.mrb[0].mxu0 %v395
        %v606 = vpop.f32.mrb[0].mxu0
        %v607 = vadd.f32 %v317, %v606
        %v608 = vpop.f32.mrb[0].mxu0
        %609 = vmatprep.mubr.f32.mxu0 0.0
        %610 = vmatmul.mubr.f32.gmra.mrb[0].mxu0 %v398
        %v611 = vpop.f32.mrb[0].mxu0
        %v612 = vadd.f32 %v317, %v611
        %v613 = vpop.f32.mrb[0].mxu0
        %614 = vmatprep.mubr.f32.mxu0 0.0
        %615 = vmatmul.mubr.f32.gmra.mrb[0].mxu0 %v401
        %v616 = vpop.f32.mrb[0].mxu0
        %v617 = vadd.f32 %v317, %v616
        %v618 = vpop.f32.mrb[0].mxu0
        %619 = vmatprep.mubr.f32.mxu0 0.0
        %620 = vmatmul.mubr.f32.gmra.mrb[0].mxu0 %v404
        %v621 = vpop.f32.mrb[0].mxu0
        %v622 = vadd.f32 %v317, %v621
        %v623 = vpop.f32.mrb[0].mxu0
        %624 = vmatprep.mubr.f32.mxu0 0.0
        %625 = vmatmul.mubr.f32.gmra.mrb[0].mxu0 %v407
        %v626 = vpop.f32.mrb[0].mxu0
        %v627 = vadd.f32 %v317, %v626
        %v628 = vpop.f32.mrb[0].mxu0
        %629 = vmatprep.mubr.f32.mxu0 0.0
        %630 = vmatmul.mubr.f32.gmra.mrb[0].mxu0 %v410
        %v631 = vpop.f32.mrb[0].mxu0
        %v632 = vadd.f32 %v317, %v631
        %v633 = vpop.f32.mrb[0].mxu0
        %634 = vmatprep.mubr.f32.mxu0 0.0
        %635 = vmatmul.mubr.f32.gmra.mrb[0].mxu0 %v413
        %v636 = vpop.f32.mrb[0].mxu0
        %v637 = vadd.f32 %v317, %v636
        %v638 = vpop.f32.mrb[0].mxu0
        %639 = vdwg.mxu0
        %v640 = vld [vmem:[%s1] sm:$0x3]
        %v643 = vunpack.c.l.s4 1966171168
        %v644 = vunpack.c.0.s8 %v643
        %v645 = vlaneseq
        %v646 = vshrl.u32 %v645, 7
        %v647 = vsub.s32 %v644, %v646
        %v648 = vrot.slane %v640, %v647
        %v649 = vcombine.high %v648, %v648
        %v651 = vunpack.c.l.s4 1966171168
        %v652 = vunpack.c.0.s8 %v651
        %v653 = vlaneseq
        %v654 = vshrl.u32 %v653, 7
        %v655 = vsub.s32 %v652, %v654
        %v656 = vrot.slane %v648, %v655
        %v658 = vunpack.c.l.s4 1966171168
        %v659 = vunpack.c.0.s8 %v658
        %v660 = vlaneseq
        %v661 = vshrl.u32 %v660, 7
        %v662 = vsub.s32 %v659, %v661
        %v663 = vrot.slane %v649, %v662
        %v664 = vlaneseq
        %v665 = vshrl.u32 %v664, 7
        %v666 = vsub.s32 0, %v665
        %v667 = vrot.slane %v656, %v666
        %v668 = vlaneseq
        %v669 = vshrl.u32 %v668, 7
        %v670 = vsub.s32 0, %v669
        %v671 = vrot.slane %v663, %v670
        %v674 = vadd.f32 %v482, %v667
        %v675 = vadd.f32 %v487, %v667
        %v676 = vadd.f32 %v492, %v667
        %v677 = vadd.f32 %v497, %v667
        %v678 = vadd.f32 %v502, %v667
        %v679 = vadd.f32 %v507, %v667
        %v680 = vadd.f32 %v512, %v667
        %v681 = vadd.f32 %v517, %v667
        %v682 = vadd.f32 %v522, %v667
        %v683 = vadd.f32 %v527, %v667
        %v684 = vadd.f32 %v532, %v667
        %v685 = vadd.f32 %v537, %v667
        %v686 = vadd.f32 %v542, %v667
        %v687 = vadd.f32 %v547, %v667
        %v688 = vadd.f32 %v552, %v667
        %v689 = vadd.f32 %v557, %v667
        %v690 = vadd.f32 %v562, %v667
        %v691 = vadd.f32 %v567, %v667
        %v692 = vadd.f32 %v572, %v667
        %v693 = vadd.f32 %v577, %v667
        %v694 = vadd.f32 %v582, %v667
        %v695 = vadd.f32 %v587, %v667
        %v696 = vadd.f32 %v592, %v667
        %v697 = vadd.f32 %v597, %v667
        %v698 = vadd.f32 %v602, %v667
        %v699 = vadd.f32 %v607, %v667
        %v700 = vadd.f32 %v612, %v667
        %v701 = vadd.f32 %v617, %v667
        %v702 = vadd.f32 %v622, %v667
        %v703 = vadd.f32 %v627, %v667
        %v704 = vadd.f32 %v632, %v667
        %v705 = vadd.f32 %v637, %v667
        %v706 = vadd.f32 %v482, %v671
        %v707 = vadd.f32 %v487, %v671
        %v708 = vadd.f32 %v492, %v671
        %v709 = vadd.f32 %v497, %v671
        %v710 = vadd.f32 %v502, %v671
        %v711 = vadd.f32 %v507, %v671
        %v712 = vadd.f32 %v512, %v671
        %v713 = vadd.f32 %v517, %v671
        %v714 = vadd.f32 %v522, %v671
        %v715 = vadd.f32 %v527, %v671
        %v716 = vadd.f32 %v532, %v671
        %v717 = vadd.f32 %v537, %v671
        %v718 = vadd.f32 %v542, %v671
        %v719 = vadd.f32 %v547, %v671
        %v720 = vadd.f32 %v552, %v671
        %v721 = vadd.f32 %v557, %v671
        %v722 = vadd.f32 %v562, %v671
        %v723 = vadd.f32 %v567, %v671
        %v724 = vadd.f32 %v572, %v671
        %v725 = vadd.f32 %v577, %v671
        %v726 = vadd.f32 %v582, %v671
        %v727 = vadd.f32 %v587, %v671
        %v728 = vadd.f32 %v592, %v671
        %v729 = vadd.f32 %v597, %v671
        %v730 = vadd.f32 %v602, %v671
        %v731 = vadd.f32 %v607, %v671
        %v732 = vadd.f32 %v612, %v671
        %v733 = vadd.f32 %v617, %v671
        %v734 = vadd.f32 %v622, %v671
        %v735 = vadd.f32 %v627, %v671
        %v736 = vadd.f32 %v632, %v671
        %v737 = vadd.f32 %v637, %v671
        %v738 = vld [vmem:[%s268 + $0x9] sm:$0x1]
        %v739 = vld [vmem:[%s268 + $0xa] sm:$0x1]
        %vm740 = vcmask 261120
        %v741 = vsel %vm740, %v674, 0.0
        %v742 = vsel %vm740, %v675, 0.0
        %v743 = vadd.f32 %v741, %v742
        %v744 = vsel %vm740, %v676, 0.0
        %v745 = vadd.f32 %v743, %v744
        %v746 = vsel %vm740, %v677, 0.0
        %v747 = vadd.f32 %v745, %v746
        %v748 = vsel %vm740, %v678, 0.0
        %v749 = vadd.f32 %v747, %v748
        %v750 = vsel %vm740, %v679, 0.0
        %v751 = vadd.f32 %v749, %v750
        %v752 = vsel %vm740, %v680, 0.0
        %v753 = vadd.f32 %v751, %v752
        %v754 = vsel %vm740, %v681, 0.0
        %v755 = vadd.f32 %v753, %v754
        %v756 = vsel %vm740, %v682, 0.0
        %v757 = vadd.f32 %v755, %v756
        %v758 = vsel %vm740, %v683, 0.0
        %v759 = vadd.f32 %v757, %v758
        %v760 = vsel %vm740, %v684, 0.0
        %v761 = vadd.f32 %v759, %v760
        %v762 = vsel %vm740, %v685, 0.0
        %v763 = vadd.f32 %v761, %v762
        %v764 = vsel %vm740, %v686, 0.0
        %v765 = vadd.f32 %v763, %v764
        %v766 = vsel %vm740, %v687, 0.0
        %v767 = vadd.f32 %v765, %v766
        %v768 = vsel %vm740, %v688, 0.0
        %v769 = vadd.f32 %v767, %v768
        %v770 = vsel %vm740, %v689, 0.0
        %v771 = vadd.f32 %v769, %v770
        %v772 = vsel %vm740, %v690, 0.0
        %v773 = vadd.f32 %v771, %v772
        %v774 = vsel %vm740, %v691, 0.0
        %v775 = vadd.f32 %v773, %v774
        %v776 = vsel %vm740, %v692, 0.0
        %v777 = vadd.f32 %v775, %v776
        %v778 = vsel %vm740, %v693, 0.0
        %v779 = vadd.f32 %v777, %v778
        %v780 = vsel %vm740, %v694, 0.0
        %v781 = vadd.f32 %v779, %v780
        %v782 = vsel %vm740, %v695, 0.0
        %v783 = vadd.f32 %v781, %v782
        %v784 = vsel %vm740, %v696, 0.0
        %v785 = vadd.f32 %v783, %v784
        %v786 = vsel %vm740, %v697, 0.0
        %v787 = vadd.f32 %v785, %v786
        %v788 = vsel %vm740, %v698, 0.0
        %v789 = vadd.f32 %v787, %v788
        %v790 = vsel %vm740, %v699, 0.0
        %v791 = vadd.f32 %v789, %v790
        %v792 = vsel %vm740, %v700, 0.0
        %v793 = vadd.f32 %v791, %v792
        %v794 = vsel %vm740, %v701, 0.0
        %v795 = vadd.f32 %v793, %v794
        %v796 = vsel %vm740, %v702, 0.0
        %v797 = vadd.f32 %v795, %v796
        %v798 = vsel %vm740, %v703, 0.0
        %v799 = vadd.f32 %v797, %v798
        %v800 = vsel %vm740, %v704, 0.0
        %v801 = vadd.f32 %v799, %v800
        %v802 = vsel %vm740, %v705, 0.0
        %v803 = vadd.f32 %v801, %v802
        %v804 = vsel %vm740, %v706, 0.0
        %v805 = vadd.f32 %v803, %v804
        %v806 = vsel %vm740, %v707, 0.0
        %v807 = vadd.f32 %v805, %v806
        %v808 = vsel %vm740, %v708, 0.0
        %v809 = vadd.f32 %v807, %v808
        %v810 = vsel %vm740, %v709, 0.0
        %v811 = vadd.f32 %v809, %v810
        %v812 = vsel %vm740, %v710, 0.0
        %v813 = vadd.f32 %v811, %v812
        %v814 = vsel %vm740, %v711, 0.0
        %v815 = vadd.f32 %v813, %v814
        %v816 = vsel %vm740, %v712, 0.0
        %v817 = vadd.f32 %v815, %v816
        %v818 = vsel %vm740, %v713, 0.0
        %v819 = vadd.f32 %v817, %v818
        %v820 = vsel %vm740, %v714, 0.0
        %v821 = vadd.f32 %v819, %v820
        %v822 = vsel %vm740, %v715, 0.0
        %v823 = vadd.f32 %v821, %v822
        %v824 = vsel %vm740, %v716, 0.0
        %v825 = vadd.f32 %v823, %v824
        %v826 = vsel %vm740, %v717, 0.0
        %v827 = vadd.f32 %v825, %v826
        %v828 = vsel %vm740, %v718, 0.0
        %v829 = vadd.f32 %v827, %v828
        %v830 = vsel %vm740, %v719, 0.0
        %v831 = vadd.f32 %v829, %v830
        %v832 = vsel %vm740, %v720, 0.0
        %v833 = vadd.f32 %v831, %v832
        %v834 = vsel %vm740, %v721, 0.0
        %v835 = vadd.f32 %v833, %v834
        %v836 = vsel %vm740, %v722, 0.0
        %v837 = vadd.f32 %v835, %v836
        %v838 = vsel %vm740, %v723, 0.0
        %v839 = vadd.f32 %v837, %v838
        %v840 = vsel %vm740, %v724, 0.0
        %v841 = vadd.f32 %v839, %v840
        %v842 = vsel %vm740, %v725, 0.0
        %v843 = vadd.f32 %v841, %v842
        %v844 = vsel %vm740, %v726, 0.0
        %v845 = vadd.f32 %v843, %v844
        %v846 = vsel %vm740, %v727, 0.0
        %v847 = vadd.f32 %v845, %v846
        %v848 = vsel %vm740, %v728, 0.0
        %v849 = vadd.f32 %v847, %v848
        %v850 = vsel %vm740, %v729, 0.0
        %v851 = vadd.f32 %v849, %v850
        %v852 = vsel %vm740, %v730, 0.0
        %v853 = vadd.f32 %v851, %v852
        %v854 = vsel %vm740, %v731, 0.0
        %v855 = vadd.f32 %v853, %v854
        %v856 = vsel %vm740, %v732, 0.0
        %v857 = vadd.f32 %v855, %v856
        %v858 = vsel %vm740, %v733, 0.0
        %v859 = vadd.f32 %v857, %v858
        %v860 = vsel %vm740, %v734, 0.0
        %v861 = vadd.f32 %v859, %v860
        %v862 = vsel %vm740, %v735, 0.0
        %v863 = vadd.f32 %v861, %v862
        %v864 = vsel %vm740, %v736, 0.0
        %v865 = vadd.f32 %v863, %v864
        %v866 = vsel %vm740, %v737, 0.0
        %v867 = vadd.f32 %v865, %v866
        %v868 = vrot.slane %v867, 4
        %v869 = vadd.f32 %v867, %v868
        %v870 = vrot.slane %v869, 2
        %v871 = vadd.f32 %v869, %v870
        %v872 = vrot.slane %v871, 1
        %v873 = vadd.f32 %v871, %v872
        %v874 = vmul.f32 %v674, %v674
        %v875 = vmul.f32 %v675, %v675
        %v876 = vmul.f32 %v676, %v676
        %v877 = vmul.f32 %v677, %v677
        %v878 = vmul.f32 %v678, %v678
        %v879 = vmul.f32 %v679, %v679
        %v880 = vmul.f32 %v680, %v680
        %v881 = vmul.f32 %v681, %v681
        %v882 = vmul.f32 %v682, %v682
        %v883 = vmul.f32 %v683, %v683
        %v884 = vmul.f32 %v684, %v684
        %v885 = vmul.f32 %v685, %v685
        %v886 = vmul.f32 %v686, %v686
        %v887 = vmul.f32 %v687, %v687
        %v888 = vmul.f32 %v688, %v688
        %v889 = vmul.f32 %v689, %v689
        %v890 = vmul.f32 %v690, %v690
        %v891 = vmul.f32 %v691, %v691
        %v892 = vmul.f32 %v692, %v692
        %v893 = vmul.f32 %v693, %v693
        %v894 = vmul.f32 %v694, %v694
        %v895 = vmul.f32 %v695, %v695
        %v896 = vmul.f32 %v696, %v696
        %v897 = vmul.f32 %v697, %v697
        %v898 = vmul.f32 %v698, %v698
        %v899 = vmul.f32 %v699, %v699
        %v900 = vmul.f32 %v700, %v700
        %v901 = vmul.f32 %v701, %v701
        %v902 = vmul.f32 %v702, %v702
        %v903 = vmul.f32 %v703, %v703
        %v904 = vmul.f32 %v704, %v704
        %v905 = vmul.f32 %v705, %v705
        %v906 = vmul.f32 %v706, %v706
        %v907 = vmul.f32 %v707, %v707
        %v908 = vmul.f32 %v708, %v708
        %v909 = vmul.f32 %v709, %v709
        %v910 = vmul.f32 %v710, %v710
        %v911 = vmul.f32 %v711, %v711
        %v912 = vmul.f32 %v712, %v712
        %v913 = vmul.f32 %v713, %v713
        %v914 = vmul.f32 %v714, %v714
        %v915 = vmul.f32 %v715, %v715
        %v916 = vmul.f32 %v716, %v716
        %v917 = vmul.f32 %v717, %v717
        %v918 = vmul.f32 %v718, %v718
        %v919 = vmul.f32 %v719, %v719
        %v920 = vmul.f32 %v720, %v720
        %v921 = vmul.f32 %v721, %v721
        %v922 = vmul.f32 %v722, %v722
        %v923 = vmul.f32 %v723, %v723
        %v924 = vmul.f32 %v724, %v724
        %v925 = vmul.f32 %v725, %v725
        %v926 = vmul.f32 %v726, %v726
        %v927 = vmul.f32 %v727, %v727
        %v928 = vmul.f32 %v728, %v728
        %v929 = vmul.f32 %v729, %v729
        %v930 = vmul.f32 %v730, %v730
        %v931 = vmul.f32 %v731, %v731
        %v932 = vmul.f32 %v732, %v732
        %v933 = vmul.f32 %v733, %v733
        %v934 = vmul.f32 %v734, %v734
        %v935 = vmul.f32 %v735, %v735
        %v936 = vmul.f32 %v736, %v736
        %v937 = vmul.f32 %v737, %v737
        %v938 = vsel %vm740, %v874, 0.0
        %v939 = vsel %vm740, %v875, 0.0
        %v940 = vadd.f32 %v938, %v939
        %v941 = vsel %vm740, %v876, 0.0
        %v942 = vadd.f32 %v940, %v941
        %v943 = vsel %vm740, %v877, 0.0
        %v944 = vadd.f32 %v942, %v943
        %v945 = vsel %vm740, %v878, 0.0
        %v946 = vadd.f32 %v944, %v945
        %v947 = vsel %vm740, %v879, 0.0
        %v948 = vadd.f32 %v946, %v947
        %v949 = vsel %vm740, %v880, 0.0
        %v950 = vadd.f32 %v948, %v949
        %v951 = vsel %vm740, %v881, 0.0
        %v952 = vadd.f32 %v950, %v951
        %v953 = vsel %vm740, %v882, 0.0
        %v954 = vadd.f32 %v952, %v953
        %v955 = vsel %vm740, %v883, 0.0
        %v956 = vadd.f32 %v954, %v955
        %v957 = vsel %vm740, %v884, 0.0
        %v958 = vadd.f32 %v956, %v957
        %v959 = vsel %vm740, %v885, 0.0
        %v960 = vadd.f32 %v958, %v959
        %v961 = vsel %vm740, %v886, 0.0
        %v962 = vadd.f32 %v960, %v961
        %v963 = vsel %vm740, %v887, 0.0
        %v964 = vadd.f32 %v962, %v963
        %v965 = vsel %vm740, %v888, 0.0
        %v966 = vadd.f32 %v964, %v965
        %v967 = vsel %vm740, %v889, 0.0
        %v968 = vadd.f32 %v966, %v967
        %v969 = vsel %vm740, %v890, 0.0
        %v970 = vadd.f32 %v968, %v969
        %v971 = vsel %vm740, %v891, 0.0
        %v972 = vadd.f32 %v970, %v971
        %v973 = vsel %vm740, %v892, 0.0
        %v974 = vadd.f32 %v972, %v973
        %v975 = vsel %vm740, %v893, 0.0
        %v976 = vadd.f32 %v974, %v975
        %v977 = vsel %vm740, %v894, 0.0
        %v978 = vadd.f32 %v976, %v977
        %v979 = vsel %vm740, %v895, 0.0
        %v980 = vadd.f32 %v978, %v979
        %v981 = vsel %vm740, %v896, 0.0
        %v982 = vadd.f32 %v980, %v981
        %v983 = vsel %vm740, %v897, 0.0
        %v984 = vadd.f32 %v982, %v983
        %v985 = vsel %vm740, %v898, 0.0
        %v986 = vadd.f32 %v984, %v985
        %v987 = vsel %vm740, %v899, 0.0
        %v988 = vadd.f32 %v986, %v987
        %v989 = vsel %vm740, %v900, 0.0
        %v990 = vadd.f32 %v988, %v989
        %v991 = vsel %vm740, %v901, 0.0
        %v992 = vadd.f32 %v990, %v991
        %v993 = vsel %vm740, %v902, 0.0
        %v994 = vadd.f32 %v992, %v993
        %v995 = vsel %vm740, %v903, 0.0
        %v996 = vadd.f32 %v994, %v995
        %v997 = vsel %vm740, %v904, 0.0
        %v998 = vadd.f32 %v996, %v997
        %v999 = vsel %vm740, %v905, 0.0
        %v1000 = vadd.f32 %v998, %v999
        %v1001 = vsel %vm740, %v906, 0.0
        %v1002 = vadd.f32 %v1000, %v1001
        %v1003 = vsel %vm740, %v907, 0.0
        %v1004 = vadd.f32 %v1002, %v1003
        %v1005 = vsel %vm740, %v908, 0.0
        %v1006 = vadd.f32 %v1004, %v1005
        %v1007 = vsel %vm740, %v909, 0.0
        %v1008 = vadd.f32 %v1006, %v1007
        %v1009 = vsel %vm740, %v910, 0.0
        %v1010 = vadd.f32 %v1008, %v1009
        %v1011 = vsel %vm740, %v911, 0.0
        %v1012 = vadd.f32 %v1010, %v1011
        %v1013 = vsel %vm740, %v912, 0.0
        %v1014 = vadd.f32 %v1012, %v1013
        %v1015 = vsel %vm740, %v913, 0.0
        %v1016 = vadd.f32 %v1014, %v1015
        %v1017 = vsel %vm740, %v914, 0.0
        %v1018 = vadd.f32 %v1016, %v1017
        %v1019 = vsel %vm740, %v915, 0.0
        %v1020 = vadd.f32 %v1018, %v1019
        %v1021 = vsel %vm740, %v916, 0.0
        %v1022 = vadd.f32 %v1020, %v1021
        %v1023 = vsel %vm740, %v917, 0.0
        %v1024 = vadd.f32 %v1022, %v1023
        %v1025 = vsel %vm740, %v918, 0.0
        %v1026 = vadd.f32 %v1024, %v1025
        %v1027 = vsel %vm740, %v919, 0.0
        %v1028 = vadd.f32 %v1026, %v1027
        %v1029 = vsel %vm740, %v920, 0.0
        %v1030 = vadd.f32 %v1028, %v1029
        %v1031 = vsel %vm740, %v921, 0.0
        %v1032 = vadd.f32 %v1030, %v1031
        %v1033 = vsel %vm740, %v922, 0.0
        %v1034 = vadd.f32 %v1032, %v1033
        %v1035 = vsel %vm740, %v923, 0.0
        %v1036 = vadd.f32 %v1034, %v1035
        %v1037 = vsel %vm740, %v924, 0.0
        %v1038 = vadd.f32 %v1036, %v1037
        %v1039 = vsel %vm740, %v925, 0.0
        %v1040 = vadd.f32 %v1038, %v1039
        %v1041 = vsel %vm740, %v926, 0.0
        %v1042 = vadd.f32 %v1040, %v1041
        %v1043 = vsel %vm740, %v927, 0.0
        %v1044 = vadd.f32 %v1042, %v1043
        %v1045 = vsel %vm740, %v928, 0.0
        %v1046 = vadd.f32 %v1044, %v1045
        %v1047 = vsel %vm740, %v929, 0.0
        %v1048 = vadd.f32 %v1046, %v1047
        %v1049 = vsel %vm740, %v930, 0.0
        %v1050 = vadd.f32 %v1048, %v1049
        %v1051 = vsel %vm740, %v931, 0.0
        %v1052 = vadd.f32 %v1050, %v1051
        %v1053 = vsel %vm740, %v932, 0.0
        %v1054 = vadd.f32 %v1052, %v1053
        %v1055 = vsel %vm740, %v933, 0.0
        %v1056 = vadd.f32 %v1054, %v1055
        %v1057 = vsel %vm740, %v934, 0.0
        %v1058 = vadd.f32 %v1056, %v1057
        %v1059 = vsel %vm740, %v935, 0.0
        %v1060 = vadd.f32 %v1058, %v1059
        %v1061 = vsel %vm740, %v936, 0.0
        %v1062 = vadd.f32 %v1060, %v1061
        %v1063 = vsel %vm740, %v937, 0.0
        %v1064 = vadd.f32 %v1062, %v1063
        %v1065 = vrot.slane %v1064, 4
        %v1066 = vadd.f32 %v1064, %v1065
        %v1067 = vrot.slane %v1066, 2
        %v1068 = vadd.f32 %v1066, %v1067
        %v1069 = vrot.slane %v1068, 1
        %v1070 = vadd.f32 %v1068, %v1069
        %v1071 = vmul.f32 %v873, 0.001953125
        %v1072 = vmul.f32 %v1070, 0.001953125
        %v1073 = vmul.f32 %v1071, %v1071
        %v1074 = vsub.f32 %v1072, %v1073
        %v1075 = vmax.f32 %v1074, 0.0
        %v1076 = vadd.f32 %v1075, 1e-05
        %v1077 = vrsqrt.pop %v1076
        %v1078 = vmul.f32 %v738, %v1077
        %v1079 = vmul.f32 %v1071, %v1078
        %v1080 = vsub.f32 %v739, %v1079
        %v1081 = vlaneseq
        %v1082 = vshrl.u32 %v1081, 7
        %v1083 = vsub.s32 0, %v1082
        %v1084 = vrot.slane %v1078, %v1083
        %v1085 = vmul.f32 %v674, %v1084
        %v1086 = vmul.f32 %v675, %v1084
        %v1087 = vmul.f32 %v676, %v1084
        %v1088 = vmul.f32 %v677, %v1084
        %v1089 = vmul.f32 %v678, %v1084
        %v1090 = vmul.f32 %v679, %v1084
        %v1091 = vmul.f32 %v680, %v1084
        %v1092 = vmul.f32 %v681, %v1084
        %v1093 = vmul.f32 %v682, %v1084
        %v1094 = vmul.f32 %v683, %v1084
        %v1095 = vmul.f32 %v684, %v1084
        %v1096 = vmul.f32 %v685, %v1084
        %v1097 = vmul.f32 %v686, %v1084
        %v1098 = vmul.f32 %v687, %v1084
        %v1099 = vmul.f32 %v688, %v1084
        %v1100 = vmul.f32 %v689, %v1084
        %v1101 = vmul.f32 %v690, %v1084
        %v1102 = vmul.f32 %v691, %v1084
        %v1103 = vmul.f32 %v692, %v1084
        %v1104 = vmul.f32 %v693, %v1084
        %v1105 = vmul.f32 %v694, %v1084
        %v1106 = vmul.f32 %v695, %v1084
        %v1107 = vmul.f32 %v696, %v1084
        %v1108 = vmul.f32 %v697, %v1084
        %v1109 = vmul.f32 %v698, %v1084
        %v1110 = vmul.f32 %v699, %v1084
        %v1111 = vmul.f32 %v700, %v1084
        %v1112 = vmul.f32 %v701, %v1084
        %v1113 = vmul.f32 %v702, %v1084
        %v1114 = vmul.f32 %v703, %v1084
        %v1115 = vmul.f32 %v704, %v1084
        %v1116 = vmul.f32 %v705, %v1084
        %v1117 = vmul.f32 %v706, %v1084
        %v1118 = vmul.f32 %v707, %v1084
        %v1119 = vmul.f32 %v708, %v1084
        %v1120 = vmul.f32 %v709, %v1084
        %v1121 = vmul.f32 %v710, %v1084
        %v1122 = vmul.f32 %v711, %v1084
        %v1123 = vmul.f32 %v712, %v1084
        %v1124 = vmul.f32 %v713, %v1084
        %v1125 = vmul.f32 %v714, %v1084
        %v1126 = vmul.f32 %v715, %v1084
        %v1127 = vmul.f32 %v716, %v1084
        %v1128 = vmul.f32 %v717, %v1084
        %v1129 = vmul.f32 %v718, %v1084
        %v1130 = vmul.f32 %v719, %v1084
        %v1131 = vmul.f32 %v720, %v1084
        %v1132 = vmul.f32 %v721, %v1084
        %v1133 = vmul.f32 %v722, %v1084
        %v1134 = vmul.f32 %v723, %v1084
        %v1135 = vmul.f32 %v724, %v1084
        %v1136 = vmul.f32 %v725, %v1084
        %v1137 = vmul.f32 %v726, %v1084
        %v1138 = vmul.f32 %v727, %v1084
        %v1139 = vmul.f32 %v728, %v1084
        %v1140 = vmul.f32 %v729, %v1084
        %v1141 = vmul.f32 %v730, %v1084
        %v1142 = vmul.f32 %v731, %v1084
        %v1143 = vmul.f32 %v732, %v1084
        %v1144 = vmul.f32 %v733, %v1084
        %v1145 = vmul.f32 %v734, %v1084
        %v1146 = vmul.f32 %v735, %v1084
        %v1147 = vmul.f32 %v736, %v1084
        %v1148 = vmul.f32 %v737, %v1084
        %v1149 = vlaneseq
        %v1150 = vshrl.u32 %v1149, 7
        %v1151 = vsub.s32 0, %v1150
        %v1152 = vrot.slane %v1080, %v1151
        %v1153 = vadd.f32 %v1085, %v1152
        %v1154 = vadd.f32 %v1086, %v1152
        %v1155 = vadd.f32 %v1087, %v1152
        %v1156 = vadd.f32 %v1088, %v1152
        %v1157 = vadd.f32 %v1089, %v1152
        %v1158 = vadd.f32 %v1090, %v1152
        %v1159 = vadd.f32 %v1091, %v1152
        %v1160 = vadd.f32 %v1092, %v1152
        %v1161 = vadd.f32 %v1093, %v1152
        %v1162 = vadd.f32 %v1094, %v1152
        %v1163 = vadd.f32 %v1095, %v1152
        %v1164 = vadd.f32 %v1096, %v1152
        %v1165 = vadd.f32 %v1097, %v1152
        %v1166 = vadd.f32 %v1098, %v1152
        %v1167 = vadd.f32 %v1099, %v1152
        %v1168 = vadd.f32 %v1100, %v1152
        %v1169 = vadd.f32 %v1101, %v1152
        %v1170 = vadd.f32 %v1102, %v1152
        %v1171 = vadd.f32 %v1103, %v1152
        %v1172 = vadd.f32 %v1104, %v1152
        %v1173 = vadd.f32 %v1105, %v1152
        %v1174 = vadd.f32 %v1106, %v1152
        %v1175 = vadd.f32 %v1107, %v1152
        %v1176 = vadd.f32 %v1108, %v1152
        %v1177 = vadd.f32 %v1109, %v1152
        %v1178 = vadd.f32 %v1110, %v1152
        %v1179 = vadd.f32 %v1111, %v1152
        %v1180 = vadd.f32 %v1112, %v1152
        %v1181 = vadd.f32 %v1113, %v1152
        %v1182 = vadd.f32 %v1114, %v1152
        %v1183 = vadd.f32 %v1115, %v1152
        %v1184 = vadd.f32 %v1116, %v1152
        %v1185 = vadd.f32 %v1117, %v1152
        %v1186 = vadd.f32 %v1118, %v1152
        %v1187 = vadd.f32 %v1119, %v1152
        %v1188 = vadd.f32 %v1120, %v1152
        %v1189 = vadd.f32 %v1121, %v1152
        %v1190 = vadd.f32 %v1122, %v1152
        %v1191 = vadd.f32 %v1123, %v1152
        %v1192 = vadd.f32 %v1124, %v1152
        %v1193 = vadd.f32 %v1125, %v1152
        %v1194 = vadd.f32 %v1126, %v1152
        %v1195 = vadd.f32 %v1127, %v1152
        %v1196 = vadd.f32 %v1128, %v1152
        %v1197 = vadd.f32 %v1129, %v1152
        %v1198 = vadd.f32 %v1130, %v1152
        %v1199 = vadd.f32 %v1131, %v1152
        %v1200 = vadd.f32 %v1132, %v1152
        %v1201 = vadd.f32 %v1133, %v1152
        %v1202 = vadd.f32 %v1134, %v1152
        %v1203 = vadd.f32 %v1135, %v1152
        %v1204 = vadd.f32 %v1136, %v1152
        %v1205 = vadd.f32 %v1137, %v1152
        %v1206 = vadd.f32 %v1138, %v1152
        %v1207 = vadd.f32 %v1139, %v1152
        %v1208 = vadd.f32 %v1140, %v1152
        %v1209 = vadd.f32 %v1141, %v1152
        %v1210 = vadd.f32 %v1142, %v1152
        %v1211 = vadd.f32 %v1143, %v1152
        %v1212 = vadd.f32 %v1144, %v1152
        %v1213 = vadd.f32 %v1145, %v1152
        %v1214 = vadd.f32 %v1146, %v1152
        %v1215 = vadd.f32 %v1147, %v1152
        %v1216 = vadd.f32 %v1148, %v1152
        %v1217 = vmax.f32 %v1153, 0.0
        %v1218 = vmax.f32 %v1154, 0.0
        %v1219 = vmax.f32 %v1155, 0.0
        %v1220 = vmax.f32 %v1156, 0.0
        %v1221 = vmax.f32 %v1157, 0.0
        %v1222 = vmax.f32 %v1158, 0.0
        %v1223 = vmax.f32 %v1159, 0.0
        %v1224 = vmax.f32 %v1160, 0.0
        %v1225 = vmax.f32 %v1161, 0.0
        %v1226 = vmax.f32 %v1162, 0.0
        %v1227 = vmax.f32 %v1163, 0.0
        %v1228 = vmax.f32 %v1164, 0.0
        %v1229 = vmax.f32 %v1165, 0.0
        %v1230 = vmax.f32 %v1166, 0.0
        %v1231 = vmax.f32 %v1167, 0.0
        %v1232 = vmax.f32 %v1168, 0.0
        %v1233 = vmax.f32 %v1169, 0.0
        %v1234 = vmax.f32 %v1170, 0.0
        %v1235 = vmax.f32 %v1171, 0.0
        %v1236 = vmax.f32 %v1172, 0.0
        %v1237 = vmax.f32 %v1173, 0.0
        %v1238 = vmax.f32 %v1174, 0.0
        %v1239 = vmax.f32 %v1175, 0.0
        %v1240 = vmax.f32 %v1176, 0.0
        %v1241 = vmax.f32 %v1177, 0.0
        %v1242 = vmax.f32 %v1178, 0.0
        %v1243 = vmax.f32 %v1179, 0.0
        %v1244 = vmax.f32 %v1180, 0.0
        %v1245 = vmax.f32 %v1181, 0.0
        %v1246 = vmax.f32 %v1182, 0.0
        %v1247 = vmax.f32 %v1183, 0.0
        %v1248 = vmax.f32 %v1184, 0.0
        %v1249 = vmax.f32 %v1185, 0.0
        %v1250 = vmax.f32 %v1186, 0.0
        %v1251 = vmax.f32 %v1187, 0.0
        %v1252 = vmax.f32 %v1188, 0.0
        %v1253 = vmax.f32 %v1189, 0.0
        %v1254 = vmax.f32 %v1190, 0.0
        %v1255 = vmax.f32 %v1191, 0.0
        %v1256 = vmax.f32 %v1192, 0.0
        %v1257 = vmax.f32 %v1193, 0.0
        %v1258 = vmax.f32 %v1194, 0.0
        %v1259 = vmax.f32 %v1195, 0.0
        %v1260 = vmax.f32 %v1196, 0.0
        %v1261 = vmax.f32 %v1197, 0.0
        %v1262 = vmax.f32 %v1198, 0.0
        %v1263 = vmax.f32 %v1199, 0.0
        %v1264 = vmax.f32 %v1200, 0.0
        %v1265 = vmax.f32 %v1201, 0.0
        %v1266 = vmax.f32 %v1202, 0.0
        %v1267 = vmax.f32 %v1203, 0.0
        %v1268 = vmax.f32 %v1204, 0.0
        %v1269 = vmax.f32 %v1205, 0.0
        %v1270 = vmax.f32 %v1206, 0.0
        %v1271 = vmax.f32 %v1207, 0.0
        %v1272 = vmax.f32 %v1208, 0.0
        %v1273 = vmax.f32 %v1209, 0.0
        %v1274 = vmax.f32 %v1210, 0.0
        %v1275 = vmax.f32 %v1211, 0.0
        %v1276 = vmax.f32 %v1212, 0.0
        %v1277 = vmax.f32 %v1213, 0.0
        %v1278 = vmax.f32 %v1214, 0.0
        %v1279 = vmax.f32 %v1215, 0.0
        %v1280 = vmax.f32 %v1216, 0.0
        %v1281 = vpack.c.bf16 %v1218, %v1217
        %v1282 = vpack.c.bf16 %v1220, %v1219
        %v1283 = vpack.c.bf16 %v1222, %v1221
        %v1284 = vpack.c.bf16 %v1224, %v1223
        %v1285 = vpack.c.bf16 %v1226, %v1225
        %v1286 = vpack.c.bf16 %v1228, %v1227
        %v1287 = vpack.c.bf16 %v1230, %v1229
        %v1288 = vpack.c.bf16 %v1232, %v1231
        %v1289 = vpack.c.bf16 %v1234, %v1233
        %v1290 = vpack.c.bf16 %v1236, %v1235
        %v1291 = vpack.c.bf16 %v1238, %v1237
        %v1292 = vpack.c.bf16 %v1240, %v1239
        %v1293 = vpack.c.bf16 %v1242, %v1241
        %v1294 = vpack.c.bf16 %v1244, %v1243
        %v1295 = vpack.c.bf16 %v1246, %v1245
        %v1296 = vpack.c.bf16 %v1248, %v1247
        %v1297 = vpack.c.bf16 %v1250, %v1249
        %v1298 = vpack.c.bf16 %v1252, %v1251
        %v1299 = vpack.c.bf16 %v1254, %v1253
        %v1300 = vpack.c.bf16 %v1256, %v1255
        %v1301 = vpack.c.bf16 %v1258, %v1257
        %v1302 = vpack.c.bf16 %v1260, %v1259
        %v1303 = vpack.c.bf16 %v1262, %v1261
        %v1304 = vpack.c.bf16 %v1264, %v1263
        %v1305 = vpack.c.bf16 %v1266, %v1265
        %v1306 = vpack.c.bf16 %v1268, %v1267
        %v1307 = vpack.c.bf16 %v1270, %v1269
        %v1308 = vpack.c.bf16 %v1272, %v1271
        %v1309 = vpack.c.bf16 %v1274, %v1273
        %v1310 = vpack.c.bf16 %v1276, %v1275
        %v1311 = vpack.c.bf16 %v1278, %v1277
        %v1312 = vpack.c.bf16 %v1280, %v1279
        %v1313 = vld [vmem:[%s273] sm:$0xf]
        %v1314 = vld [vmem:[%s273 + $0x4] sm:$0xf]
        %v1315 = vld [vmem:[%s273 + $0x8] sm:$0xf]
        %v1316 = vld [vmem:[%s273 + $0xc] sm:$0xf]
        %v1317 = vld [vmem:[%s268 + $0xb] sm:$0x1]
        %v1318 = vlaneseq
        %v1319 = vshrl.u32 %v1318, 7
        %v1320 = vsub.s32 0, %v1319
        %v1321 = vrot.slane %v1317, %v1320
        %v1326 = vunpack.c.l.b16 %v1313
        %v1327 = vunpack.c.l.b16 %v1314
        %v1328 = vunpack.c.l.b16 %v1315
        %v1329 = vunpack.c.l.b16 %v1316
        %v1330 = vpack.c.b16 %v1327, %v1326
        %v1331 = vpack.c.b16 %v1329, %v1328
        %v1335 = vsel %vm740, %v1281, 0
        %v1338 = vsel %vm740, %v1282, 0
        %v1341 = vsel %vm740, %v1283, 0
        %v1344 = vsel %vm740, %v1284, 0
        %v1347 = vsel %vm740, %v1285, 0
        %v1350 = vsel %vm740, %v1286, 0
        %v1353 = vsel %vm740, %v1287, 0
        %v1356 = vsel %vm740, %v1288, 0
        %v1359 = vsel %vm740, %v1289, 0
        %v1362 = vsel %vm740, %v1290, 0
        %v1365 = vsel %vm740, %v1291, 0
        %v1368 = vsel %vm740, %v1292, 0
        %v1371 = vsel %vm740, %v1293, 0
        %v1374 = vsel %vm740, %v1294, 0
        %v1377 = vsel %vm740, %v1295, 0
        %v1380 = vsel %vm740, %v1296, 0
        %v1383 = vsel %vm740, %v1297, 0
        %v1386 = vsel %vm740, %v1298, 0
        %v1389 = vsel %vm740, %v1299, 0
        %v1392 = vsel %vm740, %v1300, 0
        %v1395 = vsel %vm740, %v1301, 0
        %v1398 = vsel %vm740, %v1302, 0
        %v1401 = vsel %vm740, %v1303, 0
        %v1404 = vsel %vm740, %v1304, 0
        %v1407 = vsel %vm740, %v1305, 0
        %v1410 = vsel %vm740, %v1306, 0
        %v1413 = vsel %vm740, %v1307, 0
        %v1416 = vsel %vm740, %v1308, 0
        %v1419 = vsel %vm740, %v1309, 0
        %v1422 = vsel %vm740, %v1310, 0
        %v1425 = vsel %vm740, %v1311, 0
        %v1428 = vsel %vm740, %v1312, 0
        %1430 = vmatprep.subr.bf16.mxu0 0
        %1431 = vmatpush1.bf16.msra.mxu0 %v1330
        %1432 = vmatprep.subr.bf16.mxu0 0
        %1433 = vmatpush1.bf16.msra.mxu0 %v1331
        %1434 = vmatprep.subr.bf16.mxu0 0
        %1435 = vmatpush1.bf16.msra.mxu0 0
        %1436 = vmatprep.subr.bf16.mxu0 0
        %1437 = vmatpush1.bf16.msra.mxu0 0
        %1438 = vmatprep.subr.bf16.mxu0 0
        %1439 = vmatpush1.bf16.msra.mxu0 0
        %1440 = vmatprep.subr.bf16.mxu0 0
        %1441 = vmatpush1.bf16.msra.mxu0 0
        %1442 = vmatprep.subr.bf16.mxu0 0
        %1443 = vmatpush1.bf16.msra.mxu0 0
        %1444 = vmatprep.subr.bf16.mxu0 0
        %1445 = vmatpush1.bf16.msra.mxu0 0
        %1446 = vmatprep.subr.bf16.mxu0 0
        %1447 = vmatpush1.bf16.msra.mxu0 0
        %1448 = vmatprep.subr.bf16.mxu0 0
        %1449 = vmatpush1.bf16.msra.mxu0 0
        %1450 = vmatprep.subr.bf16.mxu0 0
        %1451 = vmatpush1.bf16.msra.mxu0 0
        %1452 = vmatprep.subr.bf16.mxu0 0
        %1453 = vmatpush1.bf16.msra.mxu0 0
        %1454 = vmatprep.subr.bf16.mxu0 0
        %1455 = vmatpush1.bf16.msra.mxu0 0
        %1456 = vmatprep.subr.bf16.mxu0 0
        %1457 = vmatpush1.bf16.msra.mxu0 0
        %1458 = vmatprep.subr.bf16.mxu0 0
        %1459 = vmatpush1.bf16.msra.mxu0 0
        %1460 = vmatprep.subr.bf16.mxu0 0
        %1461 = vmatpush1.bf16.msra.mxu0 0
        %1462 = vmatprep.mubr.bf16.mxu0 0
        %1463 = vmatmul.mubr.bf16.gmra.mrb[0].mxu0 %v1335
        %v1464 = vpop.f32.mrb[0].mxu0
        %v1465 = vadd.f32 %v1321, %v1464
        %v1466 = vpop.f32.mrb[0].mxu0
        %v1467 = vpop.f32.mrb[0].mxu0
        %v1468 = vadd.f32 %v1321, %v1467
        %v1469 = vpop.f32.mrb[0].mxu0
        %1470 = vmatprep.mubr.bf16.mxu0 0
        %1471 = vmatmul.mubr.bf16.gmra.mrb[0].mxu0 %v1338
        %v1472 = vpop.f32.mrb[0].mxu0
        %v1473 = vadd.f32 %v1321, %v1472
        %v1474 = vpop.f32.mrb[0].mxu0
        %v1475 = vpop.f32.mrb[0].mxu0
        %v1476 = vadd.f32 %v1321, %v1475
        %v1477 = vpop.f32.mrb[0].mxu0
        %1478 = vmatprep.mubr.bf16.mxu0 0
        %1479 = vmatmul.mubr.bf16.gmra.mrb[0].mxu0 %v1341
        %v1480 = vpop.f32.mrb[0].mxu0
        %v1481 = vadd.f32 %v1321, %v1480
        %v1482 = vpop.f32.mrb[0].mxu0
        %v1483 = vpop.f32.mrb[0].mxu0
        %v1484 = vadd.f32 %v1321, %v1483
        %v1485 = vpop.f32.mrb[0].mxu0
        %1486 = vmatprep.mubr.bf16.mxu0 0
        %1487 = vmatmul.mubr.bf16.gmra.mrb[0].mxu0 %v1344
        %v1488 = vpop.f32.mrb[0].mxu0
        %v1489 = vadd.f32 %v1321, %v1488
        %v1490 = vpop.f32.mrb[0].mxu0
        %v1491 = vpop.f32.mrb[0].mxu0
        %v1492 = vadd.f32 %v1321, %v1491
        %v1493 = vpop.f32.mrb[0].mxu0
        %1494 = vmatprep.mubr.bf16.mxu0 0
        %1495 = vmatmul.mubr.bf16.gmra.mrb[0].mxu0 %v1347
        %v1496 = vpop.f32.mrb[0].mxu0
        %v1497 = vadd.f32 %v1321, %v1496
        %v1498 = vpop.f32.mrb[0].mxu0
        %v1499 = vpop.f32.mrb[0].mxu0
        %v1500 = vadd.f32 %v1321, %v1499
        %v1501 = vpop.f32.mrb[0].mxu0
        %1502 = vmatprep.mubr.bf16.mxu0 0
        %1503 = vmatmul.mubr.bf16.gmra.mrb[0].mxu0 %v1350
        %v1504 = vpop.f32.mrb[0].mxu0
        %v1505 = vadd.f32 %v1321, %v1504
        %v1506 = vpop.f32.mrb[0].mxu0
        %v1507 = vpop.f32.mrb[0].mxu0
        %v1508 = vadd.f32 %v1321, %v1507
        %v1509 = vpop.f32.mrb[0].mxu0
        %1510 = vmatprep.mubr.bf16.mxu0 0
        %1511 = vmatmul.mubr.bf16.gmra.mrb[0].mxu0 %v1353
        %v1512 = vpop.f32.mrb[0].mxu0
        %v1513 = vadd.f32 %v1321, %v1512
        %v1514 = vpop.f32.mrb[0].mxu0
        %v1515 = vpop.f32.mrb[0].mxu0
        %v1516 = vadd.f32 %v1321, %v1515
        %v1517 = vpop.f32.mrb[0].mxu0
        %1518 = vmatprep.mubr.bf16.mxu0 0
        %1519 = vmatmul.mubr.bf16.gmra.mrb[0].mxu0 %v1356
        %v1520 = vpop.f32.mrb[0].mxu0
        %v1521 = vadd.f32 %v1321, %v1520
        %v1522 = vpop.f32.mrb[0].mxu0
        %v1523 = vpop.f32.mrb[0].mxu0
        %v1524 = vadd.f32 %v1321, %v1523
        %v1525 = vpop.f32.mrb[0].mxu0
        %1526 = vmatprep.mubr.bf16.mxu0 0
        %1527 = vmatmul.mubr.bf16.gmra.mrb[0].mxu0 %v1359
        %v1528 = vpop.f32.mrb[0].mxu0
        %v1529 = vadd.f32 %v1321, %v1528
        %v1530 = vpop.f32.mrb[0].mxu0
        %v1531 = vpop.f32.mrb[0].mxu0
        %v1532 = vadd.f32 %v1321, %v1531
        %v1533 = vpop.f32.mrb[0].mxu0
        %1534 = vmatprep.mubr.bf16.mxu0 0
        %1535 = vmatmul.mubr.bf16.gmra.mrb[0].mxu0 %v1362
        %v1536 = vpop.f32.mrb[0].mxu0
        %v1537 = vadd.f32 %v1321, %v1536
        %v1538 = vpop.f32.mrb[0].mxu0
        %v1539 = vpop.f32.mrb[0].mxu0
        %v1540 = vadd.f32 %v1321, %v1539
        %v1541 = vpop.f32.mrb[0].mxu0
        %1542 = vmatprep.mubr.bf16.mxu0 0
        %1543 = vmatmul.mubr.bf16.gmra.mrb[0].mxu0 %v1365
        %v1544 = vpop.f32.mrb[0].mxu0
        %v1545 = vadd.f32 %v1321, %v1544
        %v1546 = vpop.f32.mrb[0].mxu0
        %v1547 = vpop.f32.mrb[0].mxu0
        %v1548 = vadd.f32 %v1321, %v1547
        %v1549 = vpop.f32.mrb[0].mxu0
        %1550 = vmatprep.mubr.bf16.mxu0 0
        %1551 = vmatmul.mubr.bf16.gmra.mrb[0].mxu0 %v1368
        %v1552 = vpop.f32.mrb[0].mxu0
        %v1553 = vadd.f32 %v1321, %v1552
        %v1554 = vpop.f32.mrb[0].mxu0
        %v1555 = vpop.f32.mrb[0].mxu0
        %v1556 = vadd.f32 %v1321, %v1555
        %v1557 = vpop.f32.mrb[0].mxu0
        %1558 = vmatprep.mubr.bf16.mxu0 0
        %1559 = vmatmul.mubr.bf16.gmra.mrb[0].mxu0 %v1371
        %v1560 = vpop.f32.mrb[0].mxu0
        %v1561 = vadd.f32 %v1321, %v1560
        %v1562 = vpop.f32.mrb[0].mxu0
        %v1563 = vpop.f32.mrb[0].mxu0
        %v1564 = vadd.f32 %v1321, %v1563
        %v1565 = vpop.f32.mrb[0].mxu0
        %1566 = vmatprep.mubr.bf16.mxu0 0
        %1567 = vmatmul.mubr.bf16.gmra.mrb[0].mxu0 %v1374
        %v1568 = vpop.f32.mrb[0].mxu0
        %v1569 = vadd.f32 %v1321, %v1568
        %v1570 = vpop.f32.mrb[0].mxu0
        %v1571 = vpop.f32.mrb[0].mxu0
        %v1572 = vadd.f32 %v1321, %v1571
        %v1573 = vpop.f32.mrb[0].mxu0
        %1574 = vmatprep.mubr.bf16.mxu0 0
        %1575 = vmatmul.mubr.bf16.gmra.mrb[0].mxu0 %v1377
        %v1576 = vpop.f32.mrb[0].mxu0
        %v1577 = vadd.f32 %v1321, %v1576
        %v1578 = vpop.f32.mrb[0].mxu0
        %v1579 = vpop.f32.mrb[0].mxu0
        %v1580 = vadd.f32 %v1321, %v1579
        %v1581 = vpop.f32.mrb[0].mxu0
        %1582 = vmatprep.mubr.bf16.mxu0 0
        %1583 = vmatmul.mubr.bf16.gmra.mrb[0].mxu0 %v1380
        %v1584 = vpop.f32.mrb[0].mxu0
        %v1585 = vadd.f32 %v1321, %v1584
        %v1586 = vpop.f32.mrb[0].mxu0
        %v1587 = vpop.f32.mrb[0].mxu0
        %v1588 = vadd.f32 %v1321, %v1587
        %v1589 = vpop.f32.mrb[0].mxu0
        %1590 = vmatprep.mubr.bf16.mxu0 0
        %1591 = vmatmul.mubr.bf16.gmra.mrb[0].mxu0 %v1383
        %v1592 = vpop.f32.mrb[0].mxu0
        %v1593 = vadd.f32 %v1321, %v1592
        %v1594 = vpop.f32.mrb[0].mxu0
        %v1595 = vpop.f32.mrb[0].mxu0
        %v1596 = vadd.f32 %v1321, %v1595
        %v1597 = vpop.f32.mrb[0].mxu0
        %1598 = vmatprep.mubr.bf16.mxu0 0
        %1599 = vmatmul.mubr.bf16.gmra.mrb[0].mxu0 %v1386
        %v1600 = vpop.f32.mrb[0].mxu0
        %v1601 = vadd.f32 %v1321, %v1600
        %v1602 = vpop.f32.mrb[0].mxu0
        %v1603 = vpop.f32.mrb[0].mxu0
        %v1604 = vadd.f32 %v1321, %v1603
        %v1605 = vpop.f32.mrb[0].mxu0
        %1606 = vmatprep.mubr.bf16.mxu0 0
        %1607 = vmatmul.mubr.bf16.gmra.mrb[0].mxu0 %v1389
        %v1608 = vpop.f32.mrb[0].mxu0
        %v1609 = vadd.f32 %v1321, %v1608
        %v1610 = vpop.f32.mrb[0].mxu0
        %v1611 = vpop.f32.mrb[0].mxu0
        %v1612 = vadd.f32 %v1321, %v1611
        %v1613 = vpop.f32.mrb[0].mxu0
        %1614 = vmatprep.mubr.bf16.mxu0 0
        %1615 = vmatmul.mubr.bf16.gmra.mrb[0].mxu0 %v1392
        %v1616 = vpop.f32.mrb[0].mxu0
        %v1617 = vadd.f32 %v1321, %v1616
        %v1618 = vpop.f32.mrb[0].mxu0
        %v1619 = vpop.f32.mrb[0].mxu0
        %v1620 = vadd.f32 %v1321, %v1619
        %v1621 = vpop.f32.mrb[0].mxu0
        %1622 = vmatprep.mubr.bf16.mxu0 0
        %1623 = vmatmul.mubr.bf16.gmra.mrb[0].mxu0 %v1395
        %v1624 = vpop.f32.mrb[0].mxu0
        %v1625 = vadd.f32 %v1321, %v1624
        %v1626 = vpop.f32.mrb[0].mxu0
        %v1627 = vpop.f32.mrb[0].mxu0
        %v1628 = vadd.f32 %v1321, %v1627
        %v1629 = vpop.f32.mrb[0].mxu0
        %1630 = vmatprep.mubr.bf16.mxu0 0
        %1631 = vmatmul.mubr.bf16.gmra.mrb[0].mxu0 %v1398
        %v1632 = vpop.f32.mrb[0].mxu0
        %v1633 = vadd.f32 %v1321, %v1632
        %v1634 = vpop.f32.mrb[0].mxu0
        %v1635 = vpop.f32.mrb[0].mxu0
        %v1636 = vadd.f32 %v1321, %v1635
        %v1637 = vpop.f32.mrb[0].mxu0
        %1638 = vmatprep.mubr.bf16.mxu0 0
        %1639 = vmatmul.mubr.bf16.gmra.mrb[0].mxu0 %v1401
        %v1640 = vpop.f32.mrb[0].mxu0
        %v1641 = vadd.f32 %v1321, %v1640
        %v1642 = vpop.f32.mrb[0].mxu0
        %v1643 = vpop.f32.mrb[0].mxu0
        %v1644 = vadd.f32 %v1321, %v1643
        %v1645 = vpop.f32.mrb[0].mxu0
        %1646 = vmatprep.mubr.bf16.mxu0 0
        %1647 = vmatmul.mubr.bf16.gmra.mrb[0].mxu0 %v1404
        %v1648 = vpop.f32.mrb[0].mxu0
        %v1649 = vadd.f32 %v1321, %v1648
        %v1650 = vpop.f32.mrb[0].mxu0
        %v1651 = vpop.f32.mrb[0].mxu0
        %v1652 = vadd.f32 %v1321, %v1651
        %v1653 = vpop.f32.mrb[0].mxu0
        %1654 = vmatprep.mubr.bf16.mxu0 0
        %1655 = vmatmul.mubr.bf16.gmra.mrb[0].mxu0 %v1407
        %v1656 = vpop.f32.mrb[0].mxu0
        %v1657 = vadd.f32 %v1321, %v1656
        %v1658 = vpop.f32.mrb[0].mxu0
        %v1659 = vpop.f32.mrb[0].mxu0
        %v1660 = vadd.f32 %v1321, %v1659
        %v1661 = vpop.f32.mrb[0].mxu0
        %1662 = vmatprep.mubr.bf16.mxu0 0
        %1663 = vmatmul.mubr.bf16.gmra.mrb[0].mxu0 %v1410
        %v1664 = vpop.f32.mrb[0].mxu0
        %v1665 = vadd.f32 %v1321, %v1664
        %v1666 = vpop.f32.mrb[0].mxu0
        %v1667 = vpop.f32.mrb[0].mxu0
        %v1668 = vadd.f32 %v1321, %v1667
        %v1669 = vpop.f32.mrb[0].mxu0
        %1670 = vmatprep.mubr.bf16.mxu0 0
        %1671 = vmatmul.mubr.bf16.gmra.mrb[0].mxu0 %v1413
        %v1672 = vpop.f32.mrb[0].mxu0
        %v1673 = vadd.f32 %v1321, %v1672
        %v1674 = vpop.f32.mrb[0].mxu0
        %v1675 = vpop.f32.mrb[0].mxu0
        %v1676 = vadd.f32 %v1321, %v1675
        %v1677 = vpop.f32.mrb[0].mxu0
        %1678 = vmatprep.mubr.bf16.mxu0 0
        %1679 = vmatmul.mubr.bf16.gmra.mrb[0].mxu0 %v1416
        %v1680 = vpop.f32.mrb[0].mxu0
        %v1681 = vadd.f32 %v1321, %v1680
        %v1682 = vpop.f32.mrb[0].mxu0
        %v1683 = vpop.f32.mrb[0].mxu0
        %v1684 = vadd.f32 %v1321, %v1683
        %v1685 = vpop.f32.mrb[0].mxu0
        %1686 = vmatprep.mubr.bf16.mxu0 0
        %1687 = vmatmul.mubr.bf16.gmra.mrb[0].mxu0 %v1419
        %v1688 = vpop.f32.mrb[0].mxu0
        %v1689 = vadd.f32 %v1321, %v1688
        %v1690 = vpop.f32.mrb[0].mxu0
        %v1691 = vpop.f32.mrb[0].mxu0
        %v1692 = vadd.f32 %v1321, %v1691
        %v1693 = vpop.f32.mrb[0].mxu0
        %1694 = vmatprep.mubr.bf16.mxu0 0
        %1695 = vmatmul.mubr.bf16.gmra.mrb[0].mxu0 %v1422
        %v1696 = vpop.f32.mrb[0].mxu0
        %v1697 = vadd.f32 %v1321, %v1696
        %v1698 = vpop.f32.mrb[0].mxu0
        %v1699 = vpop.f32.mrb[0].mxu0
        %v1700 = vadd.f32 %v1321, %v1699
        %v1701 = vpop.f32.mrb[0].mxu0
        %1702 = vmatprep.mubr.bf16.mxu0 0
        %1703 = vmatmul.mubr.bf16.gmra.mrb[0].mxu0 %v1425
        %v1704 = vpop.f32.mrb[0].mxu0
        %v1705 = vadd.f32 %v1321, %v1704
        %v1706 = vpop.f32.mrb[0].mxu0
        %v1707 = vpop.f32.mrb[0].mxu0
        %v1708 = vadd.f32 %v1321, %v1707
        %v1709 = vpop.f32.mrb[0].mxu0
        %1710 = vmatprep.mubr.bf16.mxu0 0
        %1711 = vmatmul.mubr.bf16.gmra.mrb[0].mxu0 %v1428
        %v1712 = vpop.f32.mrb[0].mxu0
        %v1713 = vadd.f32 %v1321, %v1712
        %v1714 = vpop.f32.mrb[0].mxu0
        %v1715 = vpop.f32.mrb[0].mxu0
        %v1716 = vadd.f32 %v1321, %v1715
        %v1717 = vpop.f32.mrb[0].mxu0
        %1718 = vdwg.mxu0
        %v1719 = vld [vmem:[%s268 + $0xc] sm:$0x1]
        %v1720 = vld [vmem:[%s268 + $0xd] sm:$0x1]
        %v1721 = vsel %vm740, %v1465, 0.0
        %v1722 = vsel %vm740, %v1468, 0.0
        %v1723 = vadd.f32 %v1721, %v1722
        %v1724 = vsel %vm740, %v1473, 0.0
        %v1725 = vadd.f32 %v1723, %v1724
        %v1726 = vsel %vm740, %v1476, 0.0
        %v1727 = vadd.f32 %v1725, %v1726
        %v1728 = vsel %vm740, %v1481, 0.0
        %v1729 = vadd.f32 %v1727, %v1728
        %v1730 = vsel %vm740, %v1484, 0.0
        %v1731 = vadd.f32 %v1729, %v1730
        %v1732 = vsel %vm740, %v1489, 0.0
        %v1733 = vadd.f32 %v1731, %v1732
        %v1734 = vsel %vm740, %v1492, 0.0
        %v1735 = vadd.f32 %v1733, %v1734
        %v1736 = vsel %vm740, %v1497, 0.0
        %v1737 = vadd.f32 %v1735, %v1736
        %v1738 = vsel %vm740, %v1500, 0.0
        %v1739 = vadd.f32 %v1737, %v1738
        %v1740 = vsel %vm740, %v1505, 0.0
        %v1741 = vadd.f32 %v1739, %v1740
        %v1742 = vsel %vm740, %v1508, 0.0
        %v1743 = vadd.f32 %v1741, %v1742
        %v1744 = vsel %vm740, %v1513, 0.0
        %v1745 = vadd.f32 %v1743, %v1744
        %v1746 = vsel %vm740, %v1516, 0.0
        %v1747 = vadd.f32 %v1745, %v1746
        %v1748 = vsel %vm740, %v1521, 0.0
        %v1749 = vadd.f32 %v1747, %v1748
        %v1750 = vsel %vm740, %v1524, 0.0
        %v1751 = vadd.f32 %v1749, %v1750
        %v1752 = vsel %vm740, %v1529, 0.0
        %v1753 = vadd.f32 %v1751, %v1752
        %v1754 = vsel %vm740, %v1532, 0.0
        %v1755 = vadd.f32 %v1753, %v1754
        %v1756 = vsel %vm740, %v1537, 0.0
        %v1757 = vadd.f32 %v1755, %v1756
        %v1758 = vsel %vm740, %v1540, 0.0
        %v1759 = vadd.f32 %v1757, %v1758
        %v1760 = vsel %vm740, %v1545, 0.0
        %v1761 = vadd.f32 %v1759, %v1760
        %v1762 = vsel %vm740, %v1548, 0.0
        %v1763 = vadd.f32 %v1761, %v1762
        %v1764 = vsel %vm740, %v1553, 0.0
        %v1765 = vadd.f32 %v1763, %v1764
        %v1766 = vsel %vm740, %v1556, 0.0
        %v1767 = vadd.f32 %v1765, %v1766
        %v1768 = vsel %vm740, %v1561, 0.0
        %v1769 = vadd.f32 %v1767, %v1768
        %v1770 = vsel %vm740, %v1564, 0.0
        %v1771 = vadd.f32 %v1769, %v1770
        %v1772 = vsel %vm740, %v1569, 0.0
        %v1773 = vadd.f32 %v1771, %v1772
        %v1774 = vsel %vm740, %v1572, 0.0
        %v1775 = vadd.f32 %v1773, %v1774
        %v1776 = vsel %vm740, %v1577, 0.0
        %v1777 = vadd.f32 %v1775, %v1776
        %v1778 = vsel %vm740, %v1580, 0.0
        %v1779 = vadd.f32 %v1777, %v1778
        %v1780 = vsel %vm740, %v1585, 0.0
        %v1781 = vadd.f32 %v1779, %v1780
        %v1782 = vsel %vm740, %v1588, 0.0
        %v1783 = vadd.f32 %v1781, %v1782
        %v1784 = vsel %vm740, %v1593, 0.0
        %v1785 = vadd.f32 %v1783, %v1784
        %v1786 = vsel %vm740, %v1596, 0.0
        %v1787 = vadd.f32 %v1785, %v1786
        %v1788 = vsel %vm740, %v1601, 0.0
        %v1789 = vadd.f32 %v1787, %v1788
        %v1790 = vsel %vm740, %v1604, 0.0
        %v1791 = vadd.f32 %v1789, %v1790
        %v1792 = vsel %vm740, %v1609, 0.0
        %v1793 = vadd.f32 %v1791, %v1792
        %v1794 = vsel %vm740, %v1612, 0.0
        %v1795 = vadd.f32 %v1793, %v1794
        %v1796 = vsel %vm740, %v1617, 0.0
        %v1797 = vadd.f32 %v1795, %v1796
        %v1798 = vsel %vm740, %v1620, 0.0
        %v1799 = vadd.f32 %v1797, %v1798
        %v1800 = vsel %vm740, %v1625, 0.0
        %v1801 = vadd.f32 %v1799, %v1800
        %v1802 = vsel %vm740, %v1628, 0.0
        %v1803 = vadd.f32 %v1801, %v1802
        %v1804 = vsel %vm740, %v1633, 0.0
        %v1805 = vadd.f32 %v1803, %v1804
        %v1806 = vsel %vm740, %v1636, 0.0
        %v1807 = vadd.f32 %v1805, %v1806
        %v1808 = vsel %vm740, %v1641, 0.0
        %v1809 = vadd.f32 %v1807, %v1808
        %v1810 = vsel %vm740, %v1644, 0.0
        %v1811 = vadd.f32 %v1809, %v1810
        %v1812 = vsel %vm740, %v1649, 0.0
        %v1813 = vadd.f32 %v1811, %v1812
        %v1814 = vsel %vm740, %v1652, 0.0
        %v1815 = vadd.f32 %v1813, %v1814
        %v1816 = vsel %vm740, %v1657, 0.0
        %v1817 = vadd.f32 %v1815, %v1816
        %v1818 = vsel %vm740, %v1660, 0.0
        %v1819 = vadd.f32 %v1817, %v1818
        %v1820 = vsel %vm740, %v1665, 0.0
        %v1821 = vadd.f32 %v1819, %v1820
        %v1822 = vsel %vm740, %v1668, 0.0
        %v1823 = vadd.f32 %v1821, %v1822
        %v1824 = vsel %vm740, %v1673, 0.0
        %v1825 = vadd.f32 %v1823, %v1824
        %v1826 = vsel %vm740, %v1676, 0.0
        %v1827 = vadd.f32 %v1825, %v1826
        %v1828 = vsel %vm740, %v1681, 0.0
        %v1829 = vadd.f32 %v1827, %v1828
        %v1830 = vsel %vm740, %v1684, 0.0
        %v1831 = vadd.f32 %v1829, %v1830
        %v1832 = vsel %vm740, %v1689, 0.0
        %v1833 = vadd.f32 %v1831, %v1832
        %v1834 = vsel %vm740, %v1692, 0.0
        %v1835 = vadd.f32 %v1833, %v1834
        %v1836 = vsel %vm740, %v1697, 0.0
        %v1837 = vadd.f32 %v1835, %v1836
        %v1838 = vsel %vm740, %v1700, 0.0
        %v1839 = vadd.f32 %v1837, %v1838
        %v1840 = vsel %vm740, %v1705, 0.0
        %v1841 = vadd.f32 %v1839, %v1840
        %v1842 = vsel %vm740, %v1708, 0.0
        %v1843 = vadd.f32 %v1841, %v1842
        %v1844 = vsel %vm740, %v1713, 0.0
        %v1845 = vadd.f32 %v1843, %v1844
        %v1846 = vsel %vm740, %v1716, 0.0
        %v1847 = vadd.f32 %v1845, %v1846
        %v1848 = vrot.slane %v1847, 4
        %v1849 = vadd.f32 %v1847, %v1848
        %v1850 = vrot.slane %v1849, 2
        %v1851 = vadd.f32 %v1849, %v1850
        %v1852 = vrot.slane %v1851, 1
        %v1853 = vadd.f32 %v1851, %v1852
        %v1854 = vmul.f32 %v1465, %v1465
        %v1855 = vmul.f32 %v1468, %v1468
        %v1856 = vmul.f32 %v1473, %v1473
        %v1857 = vmul.f32 %v1476, %v1476
        %v1858 = vmul.f32 %v1481, %v1481
        %v1859 = vmul.f32 %v1484, %v1484
        %v1860 = vmul.f32 %v1489, %v1489
        %v1861 = vmul.f32 %v1492, %v1492
        %v1862 = vmul.f32 %v1497, %v1497
        %v1863 = vmul.f32 %v1500, %v1500
        %v1864 = vmul.f32 %v1505, %v1505
        %v1865 = vmul.f32 %v1508, %v1508
        %v1866 = vmul.f32 %v1513, %v1513
        %v1867 = vmul.f32 %v1516, %v1516
        %v1868 = vmul.f32 %v1521, %v1521
        %v1869 = vmul.f32 %v1524, %v1524
        %v1870 = vmul.f32 %v1529, %v1529
        %v1871 = vmul.f32 %v1532, %v1532
        %v1872 = vmul.f32 %v1537, %v1537
        %v1873 = vmul.f32 %v1540, %v1540
        %v1874 = vmul.f32 %v1545, %v1545
        %v1875 = vmul.f32 %v1548, %v1548
        %v1876 = vmul.f32 %v1553, %v1553
        %v1877 = vmul.f32 %v1556, %v1556
        %v1878 = vmul.f32 %v1561, %v1561
        %v1879 = vmul.f32 %v1564, %v1564
        %v1880 = vmul.f32 %v1569, %v1569
        %v1881 = vmul.f32 %v1572, %v1572
        %v1882 = vmul.f32 %v1577, %v1577
        %v1883 = vmul.f32 %v1580, %v1580
        %v1884 = vmul.f32 %v1585, %v1585
        %v1885 = vmul.f32 %v1588, %v1588
        %v1886 = vmul.f32 %v1593, %v1593
        %v1887 = vmul.f32 %v1596, %v1596
        %v1888 = vmul.f32 %v1601, %v1601
        %v1889 = vmul.f32 %v1604, %v1604
        %v1890 = vmul.f32 %v1609, %v1609
        %v1891 = vmul.f32 %v1612, %v1612
        %v1892 = vmul.f32 %v1617, %v1617
        %v1893 = vmul.f32 %v1620, %v1620
        %v1894 = vmul.f32 %v1625, %v1625
        %v1895 = vmul.f32 %v1628, %v1628
        %v1896 = vmul.f32 %v1633, %v1633
        %v1897 = vmul.f32 %v1636, %v1636
        %v1898 = vmul.f32 %v1641, %v1641
        %v1899 = vmul.f32 %v1644, %v1644
        %v1900 = vmul.f32 %v1649, %v1649
        %v1901 = vmul.f32 %v1652, %v1652
        %v1902 = vmul.f32 %v1657, %v1657
        %v1903 = vmul.f32 %v1660, %v1660
        %v1904 = vmul.f32 %v1665, %v1665
        %v1905 = vmul.f32 %v1668, %v1668
        %v1906 = vmul.f32 %v1673, %v1673
        %v1907 = vmul.f32 %v1676, %v1676
        %v1908 = vmul.f32 %v1681, %v1681
        %v1909 = vmul.f32 %v1684, %v1684
        %v1910 = vmul.f32 %v1689, %v1689
        %v1911 = vmul.f32 %v1692, %v1692
        %v1912 = vmul.f32 %v1697, %v1697
        %v1913 = vmul.f32 %v1700, %v1700
        %v1914 = vmul.f32 %v1705, %v1705
        %v1915 = vmul.f32 %v1708, %v1708
        %v1916 = vmul.f32 %v1713, %v1713
        %v1917 = vmul.f32 %v1716, %v1716
        %v1918 = vsel %vm740, %v1854, 0.0
        %v1919 = vsel %vm740, %v1855, 0.0
        %v1920 = vadd.f32 %v1918, %v1919
        %v1921 = vsel %vm740, %v1856, 0.0
        %v1922 = vadd.f32 %v1920, %v1921
        %v1923 = vsel %vm740, %v1857, 0.0
        %v1924 = vadd.f32 %v1922, %v1923
        %v1925 = vsel %vm740, %v1858, 0.0
        %v1926 = vadd.f32 %v1924, %v1925
        %v1927 = vsel %vm740, %v1859, 0.0
        %v1928 = vadd.f32 %v1926, %v1927
        %v1929 = vsel %vm740, %v1860, 0.0
        %v1930 = vadd.f32 %v1928, %v1929
        %v1931 = vsel %vm740, %v1861, 0.0
        %v1932 = vadd.f32 %v1930, %v1931
        %v1933 = vsel %vm740, %v1862, 0.0
        %v1934 = vadd.f32 %v1932, %v1933
        %v1935 = vsel %vm740, %v1863, 0.0
        %v1936 = vadd.f32 %v1934, %v1935
        %v1937 = vsel %vm740, %v1864, 0.0
        %v1938 = vadd.f32 %v1936, %v1937
        %v1939 = vsel %vm740, %v1865, 0.0
        %v1940 = vadd.f32 %v1938, %v1939
        %v1941 = vsel %vm740, %v1866, 0.0
        %v1942 = vadd.f32 %v1940, %v1941
        %v1943 = vsel %vm740, %v1867, 0.0
        %v1944 = vadd.f32 %v1942, %v1943
        %v1945 = vsel %vm740, %v1868, 0.0
        %v1946 = vadd.f32 %v1944, %v1945
        %v1947 = vsel %vm740, %v1869, 0.0
        %v1948 = vadd.f32 %v1946, %v1947
        %v1949 = vsel %vm740, %v1870, 0.0
        %v1950 = vadd.f32 %v1948, %v1949
        %v1951 = vsel %vm740, %v1871, 0.0
        %v1952 = vadd.f32 %v1950, %v1951
        %v1953 = vsel %vm740, %v1872, 0.0
        %v1954 = vadd.f32 %v1952, %v1953
        %v1955 = vsel %vm740, %v1873, 0.0
        %v1956 = vadd.f32 %v1954, %v1955
        %v1957 = vsel %vm740, %v1874, 0.0
        %v1958 = vadd.f32 %v1956, %v1957
        %v1959 = vsel %vm740, %v1875, 0.0
        %v1960 = vadd.f32 %v1958, %v1959
        %v1961 = vsel %vm740, %v1876, 0.0
        %v1962 = vadd.f32 %v1960, %v1961
        %v1963 = vsel %vm740, %v1877, 0.0
        %v1964 = vadd.f32 %v1962, %v1963
        %v1965 = vsel %vm740, %v1878, 0.0
        %v1966 = vadd.f32 %v1964, %v1965
        %v1967 = vsel %vm740, %v1879, 0.0
        %v1968 = vadd.f32 %v1966, %v1967
        %v1969 = vsel %vm740, %v1880, 0.0
        %v1970 = vadd.f32 %v1968, %v1969
        %v1971 = vsel %vm740, %v1881, 0.0
        %v1972 = vadd.f32 %v1970, %v1971
        %v1973 = vsel %vm740, %v1882, 0.0
        %v1974 = vadd.f32 %v1972, %v1973
        %v1975 = vsel %vm740, %v1883, 0.0
        %v1976 = vadd.f32 %v1974, %v1975
        %v1977 = vsel %vm740, %v1884, 0.0
        %v1978 = vadd.f32 %v1976, %v1977
        %v1979 = vsel %vm740, %v1885, 0.0
        %v1980 = vadd.f32 %v1978, %v1979
        %v1981 = vsel %vm740, %v1886, 0.0
        %v1982 = vadd.f32 %v1980, %v1981
        %v1983 = vsel %vm740, %v1887, 0.0
        %v1984 = vadd.f32 %v1982, %v1983
        %v1985 = vsel %vm740, %v1888, 0.0
        %v1986 = vadd.f32 %v1984, %v1985
        %v1987 = vsel %vm740, %v1889, 0.0
        %v1988 = vadd.f32 %v1986, %v1987
        %v1989 = vsel %vm740, %v1890, 0.0
        %v1990 = vadd.f32 %v1988, %v1989
        %v1991 = vsel %vm740, %v1891, 0.0
        %v1992 = vadd.f32 %v1990, %v1991
        %v1993 = vsel %vm740, %v1892, 0.0
        %v1994 = vadd.f32 %v1992, %v1993
        %v1995 = vsel %vm740, %v1893, 0.0
        %v1996 = vadd.f32 %v1994, %v1995
        %v1997 = vsel %vm740, %v1894, 0.0
        %v1998 = vadd.f32 %v1996, %v1997
        %v1999 = vsel %vm740, %v1895, 0.0
        %v2000 = vadd.f32 %v1998, %v1999
        %v2001 = vsel %vm740, %v1896, 0.0
        %v2002 = vadd.f32 %v2000, %v2001
        %v2003 = vsel %vm740, %v1897, 0.0
        %v2004 = vadd.f32 %v2002, %v2003
        %v2005 = vsel %vm740, %v1898, 0.0
        %v2006 = vadd.f32 %v2004, %v2005
        %v2007 = vsel %vm740, %v1899, 0.0
        %v2008 = vadd.f32 %v2006, %v2007
        %v2009 = vsel %vm740, %v1900, 0.0
        %v2010 = vadd.f32 %v2008, %v2009
        %v2011 = vsel %vm740, %v1901, 0.0
        %v2012 = vadd.f32 %v2010, %v2011
        %v2013 = vsel %vm740, %v1902, 0.0
        %v2014 = vadd.f32 %v2012, %v2013
        %v2015 = vsel %vm740, %v1903, 0.0
        %v2016 = vadd.f32 %v2014, %v2015
        %v2017 = vsel %vm740, %v1904, 0.0
        %v2018 = vadd.f32 %v2016, %v2017
        %v2019 = vsel %vm740, %v1905, 0.0
        %v2020 = vadd.f32 %v2018, %v2019
        %v2021 = vsel %vm740, %v1906, 0.0
        %v2022 = vadd.f32 %v2020, %v2021
        %v2023 = vsel %vm740, %v1907, 0.0
        %v2024 = vadd.f32 %v2022, %v2023
        %v2025 = vsel %vm740, %v1908, 0.0
        %v2026 = vadd.f32 %v2024, %v2025
        %v2027 = vsel %vm740, %v1909, 0.0
        %v2028 = vadd.f32 %v2026, %v2027
        %v2029 = vsel %vm740, %v1910, 0.0
        %v2030 = vadd.f32 %v2028, %v2029
        %v2031 = vsel %vm740, %v1911, 0.0
        %v2032 = vadd.f32 %v2030, %v2031
        %v2033 = vsel %vm740, %v1912, 0.0
        %v2034 = vadd.f32 %v2032, %v2033
        %v2035 = vsel %vm740, %v1913, 0.0
        %v2036 = vadd.f32 %v2034, %v2035
        %v2037 = vsel %vm740, %v1914, 0.0
        %v2038 = vadd.f32 %v2036, %v2037
        %v2039 = vsel %vm740, %v1915, 0.0
        %v2040 = vadd.f32 %v2038, %v2039
        %v2041 = vsel %vm740, %v1916, 0.0
        %v2042 = vadd.f32 %v2040, %v2041
        %v2043 = vsel %vm740, %v1917, 0.0
        %v2044 = vadd.f32 %v2042, %v2043
        %v2045 = vrot.slane %v2044, 4
        %v2046 = vadd.f32 %v2044, %v2045
        %v2047 = vrot.slane %v2046, 2
        %v2048 = vadd.f32 %v2046, %v2047
        %v2049 = vrot.slane %v2048, 1
        %v2050 = vadd.f32 %v2048, %v2049
        %v2051 = vmul.f32 %v1853, 0.001953125
        %v2052 = vmul.f32 %v2050, 0.001953125
        %v2053 = vmul.f32 %v2051, %v2051
        %v2054 = vsub.f32 %v2052, %v2053
        %v2055 = vmax.f32 %v2054, 0.0
        %v2056 = vadd.f32 %v2055, 1e-05
        %v2057 = vrsqrt.pop %v2056
        %v2058 = vmul.f32 %v1719, %v2057
        %v2059 = vmul.f32 %v2051, %v2058
        %v2060 = vsub.f32 %v1720, %v2059
        %v2061 = vlaneseq
        %v2062 = vshrl.u32 %v2061, 7
        %v2063 = vsub.s32 0, %v2062
        %v2064 = vrot.slane %v2058, %v2063
        %v2065 = vmul.f32 %v1465, %v2064
        %v2066 = vmul.f32 %v1468, %v2064
        %v2067 = vmul.f32 %v1473, %v2064
        %v2068 = vmul.f32 %v1476, %v2064
        %v2069 = vmul.f32 %v1481, %v2064
        %v2070 = vmul.f32 %v1484, %v2064
        %v2071 = vmul.f32 %v1489, %v2064
        %v2072 = vmul.f32 %v1492, %v2064
        %v2073 = vmul.f32 %v1497, %v2064
        %v2074 = vmul.f32 %v1500, %v2064
        %v2075 = vmul.f32 %v1505, %v2064
        %v2076 = vmul.f32 %v1508, %v2064
        %v2077 = vmul.f32 %v1513, %v2064
        %v2078 = vmul.f32 %v1516, %v2064
        %v2079 = vmul.f32 %v1521, %v2064
        %v2080 = vmul.f32 %v1524, %v2064
        %v2081 = vmul.f32 %v1529, %v2064
        %v2082 = vmul.f32 %v1532, %v2064
        %v2083 = vmul.f32 %v1537, %v2064
        %v2084 = vmul.f32 %v1540, %v2064
        %v2085 = vmul.f32 %v1545, %v2064
        %v2086 = vmul.f32 %v1548, %v2064
        %v2087 = vmul.f32 %v1553, %v2064
        %v2088 = vmul.f32 %v1556, %v2064
        %v2089 = vmul.f32 %v1561, %v2064
        %v2090 = vmul.f32 %v1564, %v2064
        %v2091 = vmul.f32 %v1569, %v2064
        %v2092 = vmul.f32 %v1572, %v2064
        %v2093 = vmul.f32 %v1577, %v2064
        %v2094 = vmul.f32 %v1580, %v2064
        %v2095 = vmul.f32 %v1585, %v2064
        %v2096 = vmul.f32 %v1588, %v2064
        %v2097 = vmul.f32 %v1593, %v2064
        %v2098 = vmul.f32 %v1596, %v2064
        %v2099 = vmul.f32 %v1601, %v2064
        %v2100 = vmul.f32 %v1604, %v2064
        %v2101 = vmul.f32 %v1609, %v2064
        %v2102 = vmul.f32 %v1612, %v2064
        %v2103 = vmul.f32 %v1617, %v2064
        %v2104 = vmul.f32 %v1620, %v2064
        %v2105 = vmul.f32 %v1625, %v2064
        %v2106 = vmul.f32 %v1628, %v2064
        %v2107 = vmul.f32 %v1633, %v2064
        %v2108 = vmul.f32 %v1636, %v2064
        %v2109 = vmul.f32 %v1641, %v2064
        %v2110 = vmul.f32 %v1644, %v2064
        %v2111 = vmul.f32 %v1649, %v2064
        %v2112 = vmul.f32 %v1652, %v2064
        %v2113 = vmul.f32 %v1657, %v2064
        %v2114 = vmul.f32 %v1660, %v2064
        %v2115 = vmul.f32 %v1665, %v2064
        %v2116 = vmul.f32 %v1668, %v2064
        %v2117 = vmul.f32 %v1673, %v2064
        %v2118 = vmul.f32 %v1676, %v2064
        %v2119 = vmul.f32 %v1681, %v2064
        %v2120 = vmul.f32 %v1684, %v2064
        %v2121 = vmul.f32 %v1689, %v2064
        %v2122 = vmul.f32 %v1692, %v2064
        %v2123 = vmul.f32 %v1697, %v2064
        %v2124 = vmul.f32 %v1700, %v2064
        %v2125 = vmul.f32 %v1705, %v2064
        %v2126 = vmul.f32 %v1708, %v2064
        %v2127 = vmul.f32 %v1713, %v2064
        %v2128 = vmul.f32 %v1716, %v2064
        %v2129 = vlaneseq
        %v2130 = vshrl.u32 %v2129, 7
        %v2131 = vsub.s32 0, %v2130
        %v2132 = vrot.slane %v2060, %v2131
        %v2133 = vadd.f32 %v2065, %v2132
        %v2134 = vadd.f32 %v2066, %v2132
        %v2135 = vadd.f32 %v2067, %v2132
        %v2136 = vadd.f32 %v2068, %v2132
        %v2137 = vadd.f32 %v2069, %v2132
        %v2138 = vadd.f32 %v2070, %v2132
        %v2139 = vadd.f32 %v2071, %v2132
        %v2140 = vadd.f32 %v2072, %v2132
        %v2141 = vadd.f32 %v2073, %v2132
        %v2142 = vadd.f32 %v2074, %v2132
        %v2143 = vadd.f32 %v2075, %v2132
        %v2144 = vadd.f32 %v2076, %v2132
        %v2145 = vadd.f32 %v2077, %v2132
        %v2146 = vadd.f32 %v2078, %v2132
        %v2147 = vadd.f32 %v2079, %v2132
        %v2148 = vadd.f32 %v2080, %v2132
        %v2149 = vadd.f32 %v2081, %v2132
        %v2150 = vadd.f32 %v2082, %v2132
        %v2151 = vadd.f32 %v2083, %v2132
        %v2152 = vadd.f32 %v2084, %v2132
        %v2153 = vadd.f32 %v2085, %v2132
        %v2154 = vadd.f32 %v2086, %v2132
        %v2155 = vadd.f32 %v2087, %v2132
        %v2156 = vadd.f32 %v2088, %v2132
        %v2157 = vadd.f32 %v2089, %v2132
        %v2158 = vadd.f32 %v2090, %v2132
        %v2159 = vadd.f32 %v2091, %v2132
        %v2160 = vadd.f32 %v2092, %v2132
        %v2161 = vadd.f32 %v2093, %v2132
        %v2162 = vadd.f32 %v2094, %v2132
        %v2163 = vadd.f32 %v2095, %v2132
        %v2164 = vadd.f32 %v2096, %v2132
        %v2165 = vadd.f32 %v2097, %v2132
        %v2166 = vadd.f32 %v2098, %v2132
        %v2167 = vadd.f32 %v2099, %v2132
        %v2168 = vadd.f32 %v2100, %v2132
        %v2169 = vadd.f32 %v2101, %v2132
        %v2170 = vadd.f32 %v2102, %v2132
        %v2171 = vadd.f32 %v2103, %v2132
        %v2172 = vadd.f32 %v2104, %v2132
        %v2173 = vadd.f32 %v2105, %v2132
        %v2174 = vadd.f32 %v2106, %v2132
        %v2175 = vadd.f32 %v2107, %v2132
        %v2176 = vadd.f32 %v2108, %v2132
        %v2177 = vadd.f32 %v2109, %v2132
        %v2178 = vadd.f32 %v2110, %v2132
        %v2179 = vadd.f32 %v2111, %v2132
        %v2180 = vadd.f32 %v2112, %v2132
        %v2181 = vadd.f32 %v2113, %v2132
        %v2182 = vadd.f32 %v2114, %v2132
        %v2183 = vadd.f32 %v2115, %v2132
        %v2184 = vadd.f32 %v2116, %v2132
        %v2185 = vadd.f32 %v2117, %v2132
        %v2186 = vadd.f32 %v2118, %v2132
        %v2187 = vadd.f32 %v2119, %v2132
        %v2188 = vadd.f32 %v2120, %v2132
        %v2189 = vadd.f32 %v2121, %v2132
        %v2190 = vadd.f32 %v2122, %v2132
        %v2191 = vadd.f32 %v2123, %v2132
        %v2192 = vadd.f32 %v2124, %v2132
        %v2193 = vadd.f32 %v2125, %v2132
        %v2194 = vadd.f32 %v2126, %v2132
        %v2195 = vadd.f32 %v2127, %v2132
        %v2196 = vadd.f32 %v2128, %v2132
        %v2197 = vmax.f32 %v2133, 0.0
        %v2198 = vmax.f32 %v2134, 0.0
        %v2199 = vmax.f32 %v2135, 0.0
        %v2200 = vmax.f32 %v2136, 0.0
        %v2201 = vmax.f32 %v2137, 0.0
        %v2202 = vmax.f32 %v2138, 0.0
        %v2203 = vmax.f32 %v2139, 0.0
        %v2204 = vmax.f32 %v2140, 0.0
        %v2205 = vmax.f32 %v2141, 0.0
        %v2206 = vmax.f32 %v2142, 0.0
        %v2207 = vmax.f32 %v2143, 0.0
        %v2208 = vmax.f32 %v2144, 0.0
        %v2209 = vmax.f32 %v2145, 0.0
        %v2210 = vmax.f32 %v2146, 0.0
        %v2211 = vmax.f32 %v2147, 0.0
        %v2212 = vmax.f32 %v2148, 0.0
        %v2213 = vmax.f32 %v2149, 0.0
        %v2214 = vmax.f32 %v2150, 0.0
        %v2215 = vmax.f32 %v2151, 0.0
        %v2216 = vmax.f32 %v2152, 0.0
        %v2217 = vmax.f32 %v2153, 0.0
        %v2218 = vmax.f32 %v2154, 0.0
        %v2219 = vmax.f32 %v2155, 0.0
        %v2220 = vmax.f32 %v2156, 0.0
        %v2221 = vmax.f32 %v2157, 0.0
        %v2222 = vmax.f32 %v2158, 0.0
        %v2223 = vmax.f32 %v2159, 0.0
        %v2224 = vmax.f32 %v2160, 0.0
        %v2225 = vmax.f32 %v2161, 0.0
        %v2226 = vmax.f32 %v2162, 0.0
        %v2227 = vmax.f32 %v2163, 0.0
        %v2228 = vmax.f32 %v2164, 0.0
        %v2229 = vmax.f32 %v2165, 0.0
        %v2230 = vmax.f32 %v2166, 0.0
        %v2231 = vmax.f32 %v2167, 0.0
        %v2232 = vmax.f32 %v2168, 0.0
        %v2233 = vmax.f32 %v2169, 0.0
        %v2234 = vmax.f32 %v2170, 0.0
        %v2235 = vmax.f32 %v2171, 0.0
        %v2236 = vmax.f32 %v2172, 0.0
        %v2237 = vmax.f32 %v2173, 0.0
        %v2238 = vmax.f32 %v2174, 0.0
        %v2239 = vmax.f32 %v2175, 0.0
        %v2240 = vmax.f32 %v2176, 0.0
        %v2241 = vmax.f32 %v2177, 0.0
        %v2242 = vmax.f32 %v2178, 0.0
        %v2243 = vmax.f32 %v2179, 0.0
        %v2244 = vmax.f32 %v2180, 0.0
        %v2245 = vmax.f32 %v2181, 0.0
        %v2246 = vmax.f32 %v2182, 0.0
        %v2247 = vmax.f32 %v2183, 0.0
        %v2248 = vmax.f32 %v2184, 0.0
        %v2249 = vmax.f32 %v2185, 0.0
        %v2250 = vmax.f32 %v2186, 0.0
        %v2251 = vmax.f32 %v2187, 0.0
        %v2252 = vmax.f32 %v2188, 0.0
        %v2253 = vmax.f32 %v2189, 0.0
        %v2254 = vmax.f32 %v2190, 0.0
        %v2255 = vmax.f32 %v2191, 0.0
        %v2256 = vmax.f32 %v2192, 0.0
        %v2257 = vmax.f32 %v2193, 0.0
        %v2258 = vmax.f32 %v2194, 0.0
        %v2259 = vmax.f32 %v2195, 0.0
        %v2260 = vmax.f32 %v2196, 0.0
        %v2261 = vpack.c.bf16 %v2198, %v2197
        %v2262 = vpack.c.bf16 %v2200, %v2199
        %v2263 = vpack.c.bf16 %v2202, %v2201
        %v2264 = vpack.c.bf16 %v2204, %v2203
        %v2265 = vpack.c.bf16 %v2206, %v2205
        %v2266 = vpack.c.bf16 %v2208, %v2207
        %v2267 = vpack.c.bf16 %v2210, %v2209
        %v2268 = vpack.c.bf16 %v2212, %v2211
        %v2269 = vpack.c.bf16 %v2214, %v2213
        %v2270 = vpack.c.bf16 %v2216, %v2215
        %v2271 = vpack.c.bf16 %v2218, %v2217
        %v2272 = vpack.c.bf16 %v2220, %v2219
        %v2273 = vpack.c.bf16 %v2222, %v2221
        %v2274 = vpack.c.bf16 %v2224, %v2223
        %v2275 = vpack.c.bf16 %v2226, %v2225
        %v2276 = vpack.c.bf16 %v2228, %v2227
        %v2277 = vpack.c.bf16 %v2230, %v2229
        %v2278 = vpack.c.bf16 %v2232, %v2231
        %v2279 = vpack.c.bf16 %v2234, %v2233
        %v2280 = vpack.c.bf16 %v2236, %v2235
        %v2281 = vpack.c.bf16 %v2238, %v2237
        %v2282 = vpack.c.bf16 %v2240, %v2239
        %v2283 = vpack.c.bf16 %v2242, %v2241
        %v2284 = vpack.c.bf16 %v2244, %v2243
        %v2285 = vpack.c.bf16 %v2246, %v2245
        %v2286 = vpack.c.bf16 %v2248, %v2247
        %v2287 = vpack.c.bf16 %v2250, %v2249
        %v2288 = vpack.c.bf16 %v2252, %v2251
        %v2289 = vpack.c.bf16 %v2254, %v2253
        %v2290 = vpack.c.bf16 %v2256, %v2255
        %v2291 = vpack.c.bf16 %v2258, %v2257
        %v2292 = vpack.c.bf16 %v2260, %v2259
        %v2293 = vld [vmem:[%s278] sm:$0xf]
        %v2294 = vld [vmem:[%s278 + $0x4] sm:$0xf]
        %v2295 = vld [vmem:[%s278 + $0x8] sm:$0xf]
        %v2296 = vld [vmem:[%s278 + $0xc] sm:$0xf]
        %v2297 = vld [vmem:[%s268 + $0xe] sm:$0x1]
        %v2298 = vlaneseq
        %v2299 = vshrl.u32 %v2298, 7
        %v2300 = vsub.s32 0, %v2299
        %v2301 = vrot.slane %v2297, %v2300
        %v2306 = vunpack.c.l.b16 %v2293
        %v2307 = vunpack.c.l.b16 %v2294
        %v2308 = vunpack.c.l.b16 %v2295
        %v2309 = vunpack.c.l.b16 %v2296
        %v2310 = vpack.c.b16 %v2307, %v2306
        %v2311 = vpack.c.b16 %v2309, %v2308
        %v2315 = vsel %vm740, %v2261, 0
        %v2318 = vsel %vm740, %v2262, 0
        %v2321 = vsel %vm740, %v2263, 0
        %v2324 = vsel %vm740, %v2264, 0
        %v2327 = vsel %vm740, %v2265, 0
        %v2330 = vsel %vm740, %v2266, 0
        %v2333 = vsel %vm740, %v2267, 0
        %v2336 = vsel %vm740, %v2268, 0
        %v2339 = vsel %vm740, %v2269, 0
        %v2342 = vsel %vm740, %v2270, 0
        %v2345 = vsel %vm740, %v2271, 0
        %v2348 = vsel %vm740, %v2272, 0
        %v2351 = vsel %vm740, %v2273, 0
        %v2354 = vsel %vm740, %v2274, 0
        %v2357 = vsel %vm740, %v2275, 0
        %v2360 = vsel %vm740, %v2276, 0
        %v2363 = vsel %vm740, %v2277, 0
        %v2366 = vsel %vm740, %v2278, 0
        %v2369 = vsel %vm740, %v2279, 0
        %v2372 = vsel %vm740, %v2280, 0
        %v2375 = vsel %vm740, %v2281, 0
        %v2378 = vsel %vm740, %v2282, 0
        %v2381 = vsel %vm740, %v2283, 0
        %v2384 = vsel %vm740, %v2284, 0
        %v2387 = vsel %vm740, %v2285, 0
        %v2390 = vsel %vm740, %v2286, 0
        %v2393 = vsel %vm740, %v2287, 0
        %v2396 = vsel %vm740, %v2288, 0
        %v2399 = vsel %vm740, %v2289, 0
        %v2402 = vsel %vm740, %v2290, 0
        %v2405 = vsel %vm740, %v2291, 0
        %v2408 = vsel %vm740, %v2292, 0
        %2410 = vmatprep.subr.bf16.mxu0 0
        %2411 = vmatpush1.bf16.msra.mxu0 %v2310
        %2412 = vmatprep.subr.bf16.mxu0 0
        %2413 = vmatpush1.bf16.msra.mxu0 %v2311
        %2414 = vmatprep.subr.bf16.mxu0 0
        %2415 = vmatpush1.bf16.msra.mxu0 0
        %2416 = vmatprep.subr.bf16.mxu0 0
        %2417 = vmatpush1.bf16.msra.mxu0 0
        %2418 = vmatprep.subr.bf16.mxu0 0
        %2419 = vmatpush1.bf16.msra.mxu0 0
        %2420 = vmatprep.subr.bf16.mxu0 0
        %2421 = vmatpush1.bf16.msra.mxu0 0
        %2422 = vmatprep.subr.bf16.mxu0 0
        %2423 = vmatpush1.bf16.msra.mxu0 0
        %2424 = vmatprep.subr.bf16.mxu0 0
        %2425 = vmatpush1.bf16.msra.mxu0 0
        %2426 = vmatprep.subr.bf16.mxu0 0
        %2427 = vmatpush1.bf16.msra.mxu0 0
        %2428 = vmatprep.subr.bf16.mxu0 0
        %2429 = vmatpush1.bf16.msra.mxu0 0
        %2430 = vmatprep.subr.bf16.mxu0 0
        %2431 = vmatpush1.bf16.msra.mxu0 0
        %2432 = vmatprep.subr.bf16.mxu0 0
        %2433 = vmatpush1.bf16.msra.mxu0 0
        %2434 = vmatprep.subr.bf16.mxu0 0
        %2435 = vmatpush1.bf16.msra.mxu0 0
        %2436 = vmatprep.subr.bf16.mxu0 0
        %2437 = vmatpush1.bf16.msra.mxu0 0
        %2438 = vmatprep.subr.bf16.mxu0 0
        %2439 = vmatpush1.bf16.msra.mxu0 0
        %2440 = vmatprep.subr.bf16.mxu0 0
        %2441 = vmatpush1.bf16.msra.mxu0 0
        %2442 = vmatprep.mubr.bf16.mxu0 0
        %2443 = vmatmul.mubr.bf16.gmra.mrb[0].mxu0 %v2315
        %v2444 = vpop.f32.mrb[0].mxu0
        %v2445 = vadd.f32 %v2301, %v2444
        %v2446 = vpop.f32.mrb[0].mxu0
        %v2447 = vpop.f32.mrb[0].mxu0
        %v2448 = vadd.f32 %v2301, %v2447
        %v2449 = vpop.f32.mrb[0].mxu0
        %2450 = vmatprep.mubr.bf16.mxu0 0
        %2451 = vmatmul.mubr.bf16.gmra.mrb[0].mxu0 %v2318
        %v2452 = vpop.f32.mrb[0].mxu0
        %v2453 = vadd.f32 %v2301, %v2452
        %v2454 = vpop.f32.mrb[0].mxu0
        %v2455 = vpop.f32.mrb[0].mxu0
        %v2456 = vadd.f32 %v2301, %v2455
        %v2457 = vpop.f32.mrb[0].mxu0
        %2458 = vmatprep.mubr.bf16.mxu0 0
        %2459 = vmatmul.mubr.bf16.gmra.mrb[0].mxu0 %v2321
        %v2460 = vpop.f32.mrb[0].mxu0
        %v2461 = vadd.f32 %v2301, %v2460
        %v2462 = vpop.f32.mrb[0].mxu0
        %v2463 = vpop.f32.mrb[0].mxu0
        %v2464 = vadd.f32 %v2301, %v2463
        %v2465 = vpop.f32.mrb[0].mxu0
        %2466 = vmatprep.mubr.bf16.mxu0 0
        %2467 = vmatmul.mubr.bf16.gmra.mrb[0].mxu0 %v2324
        %v2468 = vpop.f32.mrb[0].mxu0
        %v2469 = vadd.f32 %v2301, %v2468
        %v2470 = vpop.f32.mrb[0].mxu0
        %v2471 = vpop.f32.mrb[0].mxu0
        %v2472 = vadd.f32 %v2301, %v2471
        %v2473 = vpop.f32.mrb[0].mxu0
        %2474 = vmatprep.mubr.bf16.mxu0 0
        %2475 = vmatmul.mubr.bf16.gmra.mrb[0].mxu0 %v2327
        %v2476 = vpop.f32.mrb[0].mxu0
        %v2477 = vadd.f32 %v2301, %v2476
        %v2478 = vpop.f32.mrb[0].mxu0
        %v2479 = vpop.f32.mrb[0].mxu0
        %v2480 = vadd.f32 %v2301, %v2479
        %v2481 = vpop.f32.mrb[0].mxu0
        %2482 = vmatprep.mubr.bf16.mxu0 0
        %2483 = vmatmul.mubr.bf16.gmra.mrb[0].mxu0 %v2330
        %v2484 = vpop.f32.mrb[0].mxu0
        %v2485 = vadd.f32 %v2301, %v2484
        %v2486 = vpop.f32.mrb[0].mxu0
        %v2487 = vpop.f32.mrb[0].mxu0
        %v2488 = vadd.f32 %v2301, %v2487
        %v2489 = vpop.f32.mrb[0].mxu0
        %2490 = vmatprep.mubr.bf16.mxu0 0
        %2491 = vmatmul.mubr.bf16.gmra.mrb[0].mxu0 %v2333
        %v2492 = vpop.f32.mrb[0].mxu0
        %v2493 = vadd.f32 %v2301, %v2492
        %v2494 = vpop.f32.mrb[0].mxu0
        %v2495 = vpop.f32.mrb[0].mxu0
        %v2496 = vadd.f32 %v2301, %v2495
        %v2497 = vpop.f32.mrb[0].mxu0
        %2498 = vmatprep.mubr.bf16.mxu0 0
        %2499 = vmatmul.mubr.bf16.gmra.mrb[0].mxu0 %v2336
        %v2500 = vpop.f32.mrb[0].mxu0
        %v2501 = vadd.f32 %v2301, %v2500
        %v2502 = vpop.f32.mrb[0].mxu0
        %v2503 = vpop.f32.mrb[0].mxu0
        %v2504 = vadd.f32 %v2301, %v2503
        %v2505 = vpop.f32.mrb[0].mxu0
        %2506 = vmatprep.mubr.bf16.mxu0 0
        %2507 = vmatmul.mubr.bf16.gmra.mrb[0].mxu0 %v2339
        %v2508 = vpop.f32.mrb[0].mxu0
        %v2509 = vadd.f32 %v2301, %v2508
        %v2510 = vpop.f32.mrb[0].mxu0
        %v2511 = vpop.f32.mrb[0].mxu0
        %v2512 = vadd.f32 %v2301, %v2511
        %v2513 = vpop.f32.mrb[0].mxu0
        %2514 = vmatprep.mubr.bf16.mxu0 0
        %2515 = vmatmul.mubr.bf16.gmra.mrb[0].mxu0 %v2342
        %v2516 = vpop.f32.mrb[0].mxu0
        %v2517 = vadd.f32 %v2301, %v2516
        %v2518 = vpop.f32.mrb[0].mxu0
        %v2519 = vpop.f32.mrb[0].mxu0
        %v2520 = vadd.f32 %v2301, %v2519
        %v2521 = vpop.f32.mrb[0].mxu0
        %2522 = vmatprep.mubr.bf16.mxu0 0
        %2523 = vmatmul.mubr.bf16.gmra.mrb[0].mxu0 %v2345
        %v2524 = vpop.f32.mrb[0].mxu0
        %v2525 = vadd.f32 %v2301, %v2524
        %v2526 = vpop.f32.mrb[0].mxu0
        %v2527 = vpop.f32.mrb[0].mxu0
        %v2528 = vadd.f32 %v2301, %v2527
        %v2529 = vpop.f32.mrb[0].mxu0
        %2530 = vmatprep.mubr.bf16.mxu0 0
        %2531 = vmatmul.mubr.bf16.gmra.mrb[0].mxu0 %v2348
        %v2532 = vpop.f32.mrb[0].mxu0
        %v2533 = vadd.f32 %v2301, %v2532
        %v2534 = vpop.f32.mrb[0].mxu0
        %v2535 = vpop.f32.mrb[0].mxu0
        %v2536 = vadd.f32 %v2301, %v2535
        %v2537 = vpop.f32.mrb[0].mxu0
        %2538 = vmatprep.mubr.bf16.mxu0 0
        %2539 = vmatmul.mubr.bf16.gmra.mrb[0].mxu0 %v2351
        %v2540 = vpop.f32.mrb[0].mxu0
        %v2541 = vadd.f32 %v2301, %v2540
        %v2542 = vpop.f32.mrb[0].mxu0
        %v2543 = vpop.f32.mrb[0].mxu0
        %v2544 = vadd.f32 %v2301, %v2543
        %v2545 = vpop.f32.mrb[0].mxu0
        %2546 = vmatprep.mubr.bf16.mxu0 0
        %2547 = vmatmul.mubr.bf16.gmra.mrb[0].mxu0 %v2354
        %v2548 = vpop.f32.mrb[0].mxu0
        %v2549 = vadd.f32 %v2301, %v2548
        %v2550 = vpop.f32.mrb[0].mxu0
        %v2551 = vpop.f32.mrb[0].mxu0
        %v2552 = vadd.f32 %v2301, %v2551
        %v2553 = vpop.f32.mrb[0].mxu0
        %2554 = vmatprep.mubr.bf16.mxu0 0
        %2555 = vmatmul.mubr.bf16.gmra.mrb[0].mxu0 %v2357
        %v2556 = vpop.f32.mrb[0].mxu0
        %v2557 = vadd.f32 %v2301, %v2556
        %v2558 = vpop.f32.mrb[0].mxu0
        %v2559 = vpop.f32.mrb[0].mxu0
        %v2560 = vadd.f32 %v2301, %v2559
        %v2561 = vpop.f32.mrb[0].mxu0
        %2562 = vmatprep.mubr.bf16.mxu0 0
        %2563 = vmatmul.mubr.bf16.gmra.mrb[0].mxu0 %v2360
        %v2564 = vpop.f32.mrb[0].mxu0
        %v2565 = vadd.f32 %v2301, %v2564
        %v2566 = vpop.f32.mrb[0].mxu0
        %v2567 = vpop.f32.mrb[0].mxu0
        %v2568 = vadd.f32 %v2301, %v2567
        %v2569 = vpop.f32.mrb[0].mxu0
        %2570 = vmatprep.mubr.bf16.mxu0 0
        %2571 = vmatmul.mubr.bf16.gmra.mrb[0].mxu0 %v2363
        %v2572 = vpop.f32.mrb[0].mxu0
        %v2573 = vadd.f32 %v2301, %v2572
        %v2574 = vpop.f32.mrb[0].mxu0
        %v2575 = vpop.f32.mrb[0].mxu0
        %v2576 = vadd.f32 %v2301, %v2575
        %v2577 = vpop.f32.mrb[0].mxu0
        %2578 = vmatprep.mubr.bf16.mxu0 0
        %2579 = vmatmul.mubr.bf16.gmra.mrb[0].mxu0 %v2366
        %v2580 = vpop.f32.mrb[0].mxu0
        %v2581 = vadd.f32 %v2301, %v2580
        %v2582 = vpop.f32.mrb[0].mxu0
        %v2583 = vpop.f32.mrb[0].mxu0
        %v2584 = vadd.f32 %v2301, %v2583
        %v2585 = vpop.f32.mrb[0].mxu0
        %2586 = vmatprep.mubr.bf16.mxu0 0
        %2587 = vmatmul.mubr.bf16.gmra.mrb[0].mxu0 %v2369
        %v2588 = vpop.f32.mrb[0].mxu0
        %v2589 = vadd.f32 %v2301, %v2588
        %v2590 = vpop.f32.mrb[0].mxu0
        %v2591 = vpop.f32.mrb[0].mxu0
        %v2592 = vadd.f32 %v2301, %v2591
        %v2593 = vpop.f32.mrb[0].mxu0
        %2594 = vmatprep.mubr.bf16.mxu0 0
        %2595 = vmatmul.mubr.bf16.gmra.mrb[0].mxu0 %v2372
        %v2596 = vpop.f32.mrb[0].mxu0
        %v2597 = vadd.f32 %v2301, %v2596
        %v2598 = vpop.f32.mrb[0].mxu0
        %v2599 = vpop.f32.mrb[0].mxu0
        %v2600 = vadd.f32 %v2301, %v2599
        %v2601 = vpop.f32.mrb[0].mxu0
        %2602 = vmatprep.mubr.bf16.mxu0 0
        %2603 = vmatmul.mubr.bf16.gmra.mrb[0].mxu0 %v2375
        %v2604 = vpop.f32.mrb[0].mxu0
        %v2605 = vadd.f32 %v2301, %v2604
        %v2606 = vpop.f32.mrb[0].mxu0
        %v2607 = vpop.f32.mrb[0].mxu0
        %v2608 = vadd.f32 %v2301, %v2607
        %v2609 = vpop.f32.mrb[0].mxu0
        %2610 = vmatprep.mubr.bf16.mxu0 0
        %2611 = vmatmul.mubr.bf16.gmra.mrb[0].mxu0 %v2378
        %v2612 = vpop.f32.mrb[0].mxu0
        %v2613 = vadd.f32 %v2301, %v2612
        %v2614 = vpop.f32.mrb[0].mxu0
        %v2615 = vpop.f32.mrb[0].mxu0
        %v2616 = vadd.f32 %v2301, %v2615
        %v2617 = vpop.f32.mrb[0].mxu0
        %2618 = vmatprep.mubr.bf16.mxu0 0
        %2619 = vmatmul.mubr.bf16.gmra.mrb[0].mxu0 %v2381
        %v2620 = vpop.f32.mrb[0].mxu0
        %v2621 = vadd.f32 %v2301, %v2620
        %v2622 = vpop.f32.mrb[0].mxu0
        %v2623 = vpop.f32.mrb[0].mxu0
        %v2624 = vadd.f32 %v2301, %v2623
        %v2625 = vpop.f32.mrb[0].mxu0
        %2626 = vmatprep.mubr.bf16.mxu0 0
        %2627 = vmatmul.mubr.bf16.gmra.mrb[0].mxu0 %v2384
        %v2628 = vpop.f32.mrb[0].mxu0
        %v2629 = vadd.f32 %v2301, %v2628
        %v2630 = vpop.f32.mrb[0].mxu0
        %v2631 = vpop.f32.mrb[0].mxu0
        %v2632 = vadd.f32 %v2301, %v2631
        %v2633 = vpop.f32.mrb[0].mxu0
        %2634 = vmatprep.mubr.bf16.mxu0 0
        %2635 = vmatmul.mubr.bf16.gmra.mrb[0].mxu0 %v2387
        %v2636 = vpop.f32.mrb[0].mxu0
        %v2637 = vadd.f32 %v2301, %v2636
        %v2638 = vpop.f32.mrb[0].mxu0
        %v2639 = vpop.f32.mrb[0].mxu0
        %v2640 = vadd.f32 %v2301, %v2639
        %v2641 = vpop.f32.mrb[0].mxu0
        %2642 = vmatprep.mubr.bf16.mxu0 0
        %2643 = vmatmul.mubr.bf16.gmra.mrb[0].mxu0 %v2390
        %v2644 = vpop.f32.mrb[0].mxu0
        %v2645 = vadd.f32 %v2301, %v2644
        %v2646 = vpop.f32.mrb[0].mxu0
        %v2647 = vpop.f32.mrb[0].mxu0
        %v2648 = vadd.f32 %v2301, %v2647
        %v2649 = vpop.f32.mrb[0].mxu0
        %2650 = vmatprep.mubr.bf16.mxu0 0
        %2651 = vmatmul.mubr.bf16.gmra.mrb[0].mxu0 %v2393
        %v2652 = vpop.f32.mrb[0].mxu0
        %v2653 = vadd.f32 %v2301, %v2652
        %v2654 = vpop.f32.mrb[0].mxu0
        %v2655 = vpop.f32.mrb[0].mxu0
        %v2656 = vadd.f32 %v2301, %v2655
        %v2657 = vpop.f32.mrb[0].mxu0
        %2658 = vmatprep.mubr.bf16.mxu0 0
        %2659 = vmatmul.mubr.bf16.gmra.mrb[0].mxu0 %v2396
        %v2660 = vpop.f32.mrb[0].mxu0
        %v2661 = vadd.f32 %v2301, %v2660
        %v2662 = vpop.f32.mrb[0].mxu0
        %v2663 = vpop.f32.mrb[0].mxu0
        %v2664 = vadd.f32 %v2301, %v2663
        %v2665 = vpop.f32.mrb[0].mxu0
        %2666 = vmatprep.mubr.bf16.mxu0 0
        %2667 = vmatmul.mubr.bf16.gmra.mrb[0].mxu0 %v2399
        %v2668 = vpop.f32.mrb[0].mxu0
        %v2669 = vadd.f32 %v2301, %v2668
        %v2670 = vpop.f32.mrb[0].mxu0
        %v2671 = vpop.f32.mrb[0].mxu0
        %v2672 = vadd.f32 %v2301, %v2671
        %v2673 = vpop.f32.mrb[0].mxu0
        %2674 = vmatprep.mubr.bf16.mxu0 0
        %2675 = vmatmul.mubr.bf16.gmra.mrb[0].mxu0 %v2402
        %v2676 = vpop.f32.mrb[0].mxu0
        %v2677 = vadd.f32 %v2301, %v2676
        %v2678 = vpop.f32.mrb[0].mxu0
        %v2679 = vpop.f32.mrb[0].mxu0
        %v2680 = vadd.f32 %v2301, %v2679
        %v2681 = vpop.f32.mrb[0].mxu0
        %2682 = vmatprep.mubr.bf16.mxu0 0
        %2683 = vmatmul.mubr.bf16.gmra.mrb[0].mxu0 %v2405
        %v2684 = vpop.f32.mrb[0].mxu0
        %v2685 = vadd.f32 %v2301, %v2684
        %v2686 = vpop.f32.mrb[0].mxu0
        %v2687 = vpop.f32.mrb[0].mxu0
        %v2688 = vadd.f32 %v2301, %v2687
        %v2689 = vpop.f32.mrb[0].mxu0
        %2690 = vmatprep.mubr.bf16.mxu0 0
        %2691 = vmatmul.mubr.bf16.gmra.mrb[0].mxu0 %v2408
        %v2692 = vpop.f32.mrb[0].mxu0
        %v2693 = vadd.f32 %v2301, %v2692
        %v2694 = vpop.f32.mrb[0].mxu0
        %v2695 = vpop.f32.mrb[0].mxu0
        %v2696 = vadd.f32 %v2301, %v2695
        %v2697 = vpop.f32.mrb[0].mxu0
        %2698 = vdwg.mxu0
        %v2699 = vld [vmem:[%s268 + $0x10] sm:$0x1]
        %v2700 = vld [vmem:[%s268 + $0x12] sm:$0x1]
        %v2701 = vsel %vm740, %v2445, 0.0
        %v2702 = vsel %vm740, %v2448, 0.0
        %v2703 = vadd.f32 %v2701, %v2702
        %v2704 = vsel %vm740, %v2453, 0.0
        %v2705 = vadd.f32 %v2703, %v2704
        %v2706 = vsel %vm740, %v2456, 0.0
        %v2707 = vadd.f32 %v2705, %v2706
        %v2708 = vsel %vm740, %v2461, 0.0
        %v2709 = vadd.f32 %v2707, %v2708
        %v2710 = vsel %vm740, %v2464, 0.0
        %v2711 = vadd.f32 %v2709, %v2710
        %v2712 = vsel %vm740, %v2469, 0.0
        %v2713 = vadd.f32 %v2711, %v2712
        %v2714 = vsel %vm740, %v2472, 0.0
        %v2715 = vadd.f32 %v2713, %v2714
        %v2716 = vsel %vm740, %v2477, 0.0
        %v2717 = vadd.f32 %v2715, %v2716
        %v2718 = vsel %vm740, %v2480, 0.0
        %v2719 = vadd.f32 %v2717, %v2718
        %v2720 = vsel %vm740, %v2485, 0.0
        %v2721 = vadd.f32 %v2719, %v2720
        %v2722 = vsel %vm740, %v2488, 0.0
        %v2723 = vadd.f32 %v2721, %v2722
        %v2724 = vsel %vm740, %v2493, 0.0
        %v2725 = vadd.f32 %v2723, %v2724
        %v2726 = vsel %vm740, %v2496, 0.0
        %v2727 = vadd.f32 %v2725, %v2726
        %v2728 = vsel %vm740, %v2501, 0.0
        %v2729 = vadd.f32 %v2727, %v2728
        %v2730 = vsel %vm740, %v2504, 0.0
        %v2731 = vadd.f32 %v2729, %v2730
        %v2732 = vsel %vm740, %v2509, 0.0
        %v2733 = vadd.f32 %v2731, %v2732
        %v2734 = vsel %vm740, %v2512, 0.0
        %v2735 = vadd.f32 %v2733, %v2734
        %v2736 = vsel %vm740, %v2517, 0.0
        %v2737 = vadd.f32 %v2735, %v2736
        %v2738 = vsel %vm740, %v2520, 0.0
        %v2739 = vadd.f32 %v2737, %v2738
        %v2740 = vsel %vm740, %v2525, 0.0
        %v2741 = vadd.f32 %v2739, %v2740
        %v2742 = vsel %vm740, %v2528, 0.0
        %v2743 = vadd.f32 %v2741, %v2742
        %v2744 = vsel %vm740, %v2533, 0.0
        %v2745 = vadd.f32 %v2743, %v2744
        %v2746 = vsel %vm740, %v2536, 0.0
        %v2747 = vadd.f32 %v2745, %v2746
        %v2748 = vsel %vm740, %v2541, 0.0
        %v2749 = vadd.f32 %v2747, %v2748
        %v2750 = vsel %vm740, %v2544, 0.0
        %v2751 = vadd.f32 %v2749, %v2750
        %v2752 = vsel %vm740, %v2549, 0.0
        %v2753 = vadd.f32 %v2751, %v2752
        %v2754 = vsel %vm740, %v2552, 0.0
        %v2755 = vadd.f32 %v2753, %v2754
        %v2756 = vsel %vm740, %v2557, 0.0
        %v2757 = vadd.f32 %v2755, %v2756
        %v2758 = vsel %vm740, %v2560, 0.0
        %v2759 = vadd.f32 %v2757, %v2758
        %v2760 = vsel %vm740, %v2565, 0.0
        %v2761 = vadd.f32 %v2759, %v2760
        %v2762 = vsel %vm740, %v2568, 0.0
        %v2763 = vadd.f32 %v2761, %v2762
        %v2764 = vsel %vm740, %v2573, 0.0
        %v2765 = vadd.f32 %v2763, %v2764
        %v2766 = vsel %vm740, %v2576, 0.0
        %v2767 = vadd.f32 %v2765, %v2766
        %v2768 = vsel %vm740, %v2581, 0.0
        %v2769 = vadd.f32 %v2767, %v2768
        %v2770 = vsel %vm740, %v2584, 0.0
        %v2771 = vadd.f32 %v2769, %v2770
        %v2772 = vsel %vm740, %v2589, 0.0
        %v2773 = vadd.f32 %v2771, %v2772
        %v2774 = vsel %vm740, %v2592, 0.0
        %v2775 = vadd.f32 %v2773, %v2774
        %v2776 = vsel %vm740, %v2597, 0.0
        %v2777 = vadd.f32 %v2775, %v2776
        %v2778 = vsel %vm740, %v2600, 0.0
        %v2779 = vadd.f32 %v2777, %v2778
        %v2780 = vsel %vm740, %v2605, 0.0
        %v2781 = vadd.f32 %v2779, %v2780
        %v2782 = vsel %vm740, %v2608, 0.0
        %v2783 = vadd.f32 %v2781, %v2782
        %v2784 = vsel %vm740, %v2613, 0.0
        %v2785 = vadd.f32 %v2783, %v2784
        %v2786 = vsel %vm740, %v2616, 0.0
        %v2787 = vadd.f32 %v2785, %v2786
        %v2788 = vsel %vm740, %v2621, 0.0
        %v2789 = vadd.f32 %v2787, %v2788
        %v2790 = vsel %vm740, %v2624, 0.0
        %v2791 = vadd.f32 %v2789, %v2790
        %v2792 = vsel %vm740, %v2629, 0.0
        %v2793 = vadd.f32 %v2791, %v2792
        %v2794 = vsel %vm740, %v2632, 0.0
        %v2795 = vadd.f32 %v2793, %v2794
        %v2796 = vsel %vm740, %v2637, 0.0
        %v2797 = vadd.f32 %v2795, %v2796
        %v2798 = vsel %vm740, %v2640, 0.0
        %v2799 = vadd.f32 %v2797, %v2798
        %v2800 = vsel %vm740, %v2645, 0.0
        %v2801 = vadd.f32 %v2799, %v2800
        %v2802 = vsel %vm740, %v2648, 0.0
        %v2803 = vadd.f32 %v2801, %v2802
        %v2804 = vsel %vm740, %v2653, 0.0
        %v2805 = vadd.f32 %v2803, %v2804
        %v2806 = vsel %vm740, %v2656, 0.0
        %v2807 = vadd.f32 %v2805, %v2806
        %v2808 = vsel %vm740, %v2661, 0.0
        %v2809 = vadd.f32 %v2807, %v2808
        %v2810 = vsel %vm740, %v2664, 0.0
        %v2811 = vadd.f32 %v2809, %v2810
        %v2812 = vsel %vm740, %v2669, 0.0
        %v2813 = vadd.f32 %v2811, %v2812
        %v2814 = vsel %vm740, %v2672, 0.0
        %v2815 = vadd.f32 %v2813, %v2814
        %v2816 = vsel %vm740, %v2677, 0.0
        %v2817 = vadd.f32 %v2815, %v2816
        %v2818 = vsel %vm740, %v2680, 0.0
        %v2819 = vadd.f32 %v2817, %v2818
        %v2820 = vsel %vm740, %v2685, 0.0
        %v2821 = vadd.f32 %v2819, %v2820
        %v2822 = vsel %vm740, %v2688, 0.0
        %v2823 = vadd.f32 %v2821, %v2822
        %v2824 = vsel %vm740, %v2693, 0.0
        %v2825 = vadd.f32 %v2823, %v2824
        %v2826 = vsel %vm740, %v2696, 0.0
        %v2827 = vadd.f32 %v2825, %v2826
        %v2828 = vrot.slane %v2827, 4
        %v2829 = vadd.f32 %v2827, %v2828
        %v2830 = vrot.slane %v2829, 2
        %v2831 = vadd.f32 %v2829, %v2830
        %v2832 = vrot.slane %v2831, 1
        %v2833 = vadd.f32 %v2831, %v2832
        %v2834 = vmul.f32 %v2445, %v2445
        %v2835 = vmul.f32 %v2448, %v2448
        %v2836 = vmul.f32 %v2453, %v2453
        %v2837 = vmul.f32 %v2456, %v2456
        %v2838 = vmul.f32 %v2461, %v2461
        %v2839 = vmul.f32 %v2464, %v2464
        %v2840 = vmul.f32 %v2469, %v2469
        %v2841 = vmul.f32 %v2472, %v2472
        %v2842 = vmul.f32 %v2477, %v2477
        %v2843 = vmul.f32 %v2480, %v2480
        %v2844 = vmul.f32 %v2485, %v2485
        %v2845 = vmul.f32 %v2488, %v2488
        %v2846 = vmul.f32 %v2493, %v2493
        %v2847 = vmul.f32 %v2496, %v2496
        %v2848 = vmul.f32 %v2501, %v2501
        %v2849 = vmul.f32 %v2504, %v2504
        %v2850 = vmul.f32 %v2509, %v2509
        %v2851 = vmul.f32 %v2512, %v2512
        %v2852 = vmul.f32 %v2517, %v2517
        %v2853 = vmul.f32 %v2520, %v2520
        %v2854 = vmul.f32 %v2525, %v2525
        %v2855 = vmul.f32 %v2528, %v2528
        %v2856 = vmul.f32 %v2533, %v2533
        %v2857 = vmul.f32 %v2536, %v2536
        %v2858 = vmul.f32 %v2541, %v2541
        %v2859 = vmul.f32 %v2544, %v2544
        %v2860 = vmul.f32 %v2549, %v2549
        %v2861 = vmul.f32 %v2552, %v2552
        %v2862 = vmul.f32 %v2557, %v2557
        %v2863 = vmul.f32 %v2560, %v2560
        %v2864 = vmul.f32 %v2565, %v2565
        %v2865 = vmul.f32 %v2568, %v2568
        %v2866 = vmul.f32 %v2573, %v2573
        %v2867 = vmul.f32 %v2576, %v2576
        %v2868 = vmul.f32 %v2581, %v2581
        %v2869 = vmul.f32 %v2584, %v2584
        %v2870 = vmul.f32 %v2589, %v2589
        %v2871 = vmul.f32 %v2592, %v2592
        %v2872 = vmul.f32 %v2597, %v2597
        %v2873 = vmul.f32 %v2600, %v2600
        %v2874 = vmul.f32 %v2605, %v2605
        %v2875 = vmul.f32 %v2608, %v2608
        %v2876 = vmul.f32 %v2613, %v2613
        %v2877 = vmul.f32 %v2616, %v2616
        %v2878 = vmul.f32 %v2621, %v2621
        %v2879 = vmul.f32 %v2624, %v2624
        %v2880 = vmul.f32 %v2629, %v2629
        %v2881 = vmul.f32 %v2632, %v2632
        %v2882 = vmul.f32 %v2637, %v2637
        %v2883 = vmul.f32 %v2640, %v2640
        %v2884 = vmul.f32 %v2645, %v2645
        %v2885 = vmul.f32 %v2648, %v2648
        %v2886 = vmul.f32 %v2653, %v2653
        %v2887 = vmul.f32 %v2656, %v2656
        %v2888 = vmul.f32 %v2661, %v2661
        %v2889 = vmul.f32 %v2664, %v2664
        %v2890 = vmul.f32 %v2669, %v2669
        %v2891 = vmul.f32 %v2672, %v2672
        %v2892 = vmul.f32 %v2677, %v2677
        %v2893 = vmul.f32 %v2680, %v2680
        %v2894 = vmul.f32 %v2685, %v2685
        %v2895 = vmul.f32 %v2688, %v2688
        %v2896 = vmul.f32 %v2693, %v2693
        %v2897 = vmul.f32 %v2696, %v2696
        %v2898 = vsel %vm740, %v2834, 0.0
        %v2899 = vsel %vm740, %v2835, 0.0
        %v2900 = vadd.f32 %v2898, %v2899
        %v2901 = vsel %vm740, %v2836, 0.0
        %v2902 = vadd.f32 %v2900, %v2901
        %v2903 = vsel %vm740, %v2837, 0.0
        %v2904 = vadd.f32 %v2902, %v2903
        %v2905 = vsel %vm740, %v2838, 0.0
        %v2906 = vadd.f32 %v2904, %v2905
        %v2907 = vsel %vm740, %v2839, 0.0
        %v2908 = vadd.f32 %v2906, %v2907
        %v2909 = vsel %vm740, %v2840, 0.0
        %v2910 = vadd.f32 %v2908, %v2909
        %v2911 = vsel %vm740, %v2841, 0.0
        %v2912 = vadd.f32 %v2910, %v2911
        %v2913 = vsel %vm740, %v2842, 0.0
        %v2914 = vadd.f32 %v2912, %v2913
        %v2915 = vsel %vm740, %v2843, 0.0
        %v2916 = vadd.f32 %v2914, %v2915
        %v2917 = vsel %vm740, %v2844, 0.0
        %v2918 = vadd.f32 %v2916, %v2917
        %v2919 = vsel %vm740, %v2845, 0.0
        %v2920 = vadd.f32 %v2918, %v2919
        %v2921 = vsel %vm740, %v2846, 0.0
        %v2922 = vadd.f32 %v2920, %v2921
        %v2923 = vsel %vm740, %v2847, 0.0
        %v2924 = vadd.f32 %v2922, %v2923
        %v2925 = vsel %vm740, %v2848, 0.0
        %v2926 = vadd.f32 %v2924, %v2925
        %v2927 = vsel %vm740, %v2849, 0.0
        %v2928 = vadd.f32 %v2926, %v2927
        %v2929 = vsel %vm740, %v2850, 0.0
        %v2930 = vadd.f32 %v2928, %v2929
        %v2931 = vsel %vm740, %v2851, 0.0
        %v2932 = vadd.f32 %v2930, %v2931
        %v2933 = vsel %vm740, %v2852, 0.0
        %v2934 = vadd.f32 %v2932, %v2933
        %v2935 = vsel %vm740, %v2853, 0.0
        %v2936 = vadd.f32 %v2934, %v2935
        %v2937 = vsel %vm740, %v2854, 0.0
        %v2938 = vadd.f32 %v2936, %v2937
        %v2939 = vsel %vm740, %v2855, 0.0
        %v2940 = vadd.f32 %v2938, %v2939
        %v2941 = vsel %vm740, %v2856, 0.0
        %v2942 = vadd.f32 %v2940, %v2941
        %v2943 = vsel %vm740, %v2857, 0.0
        %v2944 = vadd.f32 %v2942, %v2943
        %v2945 = vsel %vm740, %v2858, 0.0
        %v2946 = vadd.f32 %v2944, %v2945
        %v2947 = vsel %vm740, %v2859, 0.0
        %v2948 = vadd.f32 %v2946, %v2947
        %v2949 = vsel %vm740, %v2860, 0.0
        %v2950 = vadd.f32 %v2948, %v2949
        %v2951 = vsel %vm740, %v2861, 0.0
        %v2952 = vadd.f32 %v2950, %v2951
        %v2953 = vsel %vm740, %v2862, 0.0
        %v2954 = vadd.f32 %v2952, %v2953
        %v2955 = vsel %vm740, %v2863, 0.0
        %v2956 = vadd.f32 %v2954, %v2955
        %v2957 = vsel %vm740, %v2864, 0.0
        %v2958 = vadd.f32 %v2956, %v2957
        %v2959 = vsel %vm740, %v2865, 0.0
        %v2960 = vadd.f32 %v2958, %v2959
        %v2961 = vsel %vm740, %v2866, 0.0
        %v2962 = vadd.f32 %v2960, %v2961
        %v2963 = vsel %vm740, %v2867, 0.0
        %v2964 = vadd.f32 %v2962, %v2963
        %v2965 = vsel %vm740, %v2868, 0.0
        %v2966 = vadd.f32 %v2964, %v2965
        %v2967 = vsel %vm740, %v2869, 0.0
        %v2968 = vadd.f32 %v2966, %v2967
        %v2969 = vsel %vm740, %v2870, 0.0
        %v2970 = vadd.f32 %v2968, %v2969
        %v2971 = vsel %vm740, %v2871, 0.0
        %v2972 = vadd.f32 %v2970, %v2971
        %v2973 = vsel %vm740, %v2872, 0.0
        %v2974 = vadd.f32 %v2972, %v2973
        %v2975 = vsel %vm740, %v2873, 0.0
        %v2976 = vadd.f32 %v2974, %v2975
        %v2977 = vsel %vm740, %v2874, 0.0
        %v2978 = vadd.f32 %v2976, %v2977
        %v2979 = vsel %vm740, %v2875, 0.0
        %v2980 = vadd.f32 %v2978, %v2979
        %v2981 = vsel %vm740, %v2876, 0.0
        %v2982 = vadd.f32 %v2980, %v2981
        %v2983 = vsel %vm740, %v2877, 0.0
        %v2984 = vadd.f32 %v2982, %v2983
        %v2985 = vsel %vm740, %v2878, 0.0
        %v2986 = vadd.f32 %v2984, %v2985
        %v2987 = vsel %vm740, %v2879, 0.0
        %v2988 = vadd.f32 %v2986, %v2987
        %v2989 = vsel %vm740, %v2880, 0.0
        %v2990 = vadd.f32 %v2988, %v2989
        %v2991 = vsel %vm740, %v2881, 0.0
        %v2992 = vadd.f32 %v2990, %v2991
        %v2993 = vsel %vm740, %v2882, 0.0
        %v2994 = vadd.f32 %v2992, %v2993
        %v2995 = vsel %vm740, %v2883, 0.0
        %v2996 = vadd.f32 %v2994, %v2995
        %v2997 = vsel %vm740, %v2884, 0.0
        %v2998 = vadd.f32 %v2996, %v2997
        %v2999 = vsel %vm740, %v2885, 0.0
        %v3000 = vadd.f32 %v2998, %v2999
        %v3001 = vsel %vm740, %v2886, 0.0
        %v3002 = vadd.f32 %v3000, %v3001
        %v3003 = vsel %vm740, %v2887, 0.0
        %v3004 = vadd.f32 %v3002, %v3003
        %v3005 = vsel %vm740, %v2888, 0.0
        %v3006 = vadd.f32 %v3004, %v3005
        %v3007 = vsel %vm740, %v2889, 0.0
        %v3008 = vadd.f32 %v3006, %v3007
        %v3009 = vsel %vm740, %v2890, 0.0
        %v3010 = vadd.f32 %v3008, %v3009
        %v3011 = vsel %vm740, %v2891, 0.0
        %v3012 = vadd.f32 %v3010, %v3011
        %v3013 = vsel %vm740, %v2892, 0.0
        %v3014 = vadd.f32 %v3012, %v3013
        %v3015 = vsel %vm740, %v2893, 0.0
        %v3016 = vadd.f32 %v3014, %v3015
        %v3017 = vsel %vm740, %v2894, 0.0
        %v3018 = vadd.f32 %v3016, %v3017
        %v3019 = vsel %vm740, %v2895, 0.0
        %v3020 = vadd.f32 %v3018, %v3019
        %v3021 = vsel %vm740, %v2896, 0.0
        %v3022 = vadd.f32 %v3020, %v3021
        %v3023 = vsel %vm740, %v2897, 0.0
        %v3024 = vadd.f32 %v3022, %v3023
        %v3025 = vrot.slane %v3024, 4
        %v3026 = vadd.f32 %v3024, %v3025
        %v3027 = vrot.slane %v3026, 2
        %v3028 = vadd.f32 %v3026, %v3027
        %v3029 = vrot.slane %v3028, 1
        %v3030 = vadd.f32 %v3028, %v3029
        %v3031 = vmul.f32 %v2833, 0.001953125
        %v3032 = vmul.f32 %v3030, 0.001953125
        %v3033 = vmul.f32 %v3031, %v3031
        %v3034 = vsub.f32 %v3032, %v3033
        %v3035 = vmax.f32 %v3034, 0.0
        %v3036 = vadd.f32 %v3035, 1e-05
        %v3037 = vrsqrt.pop %v3036
        %v3038 = vmul.f32 %v2699, %v3037
        %v3039 = vmul.f32 %v3031, %v3038
        %v3040 = vsub.f32 %v2700, %v3039
        %v3041 = vlaneseq
        %v3042 = vshrl.u32 %v3041, 7
        %v3043 = vsub.s32 0, %v3042
        %v3044 = vrot.slane %v3038, %v3043
        %v3045 = vmul.f32 %v2445, %v3044
        %v3046 = vmul.f32 %v2448, %v3044
        %v3047 = vmul.f32 %v2453, %v3044
        %v3048 = vmul.f32 %v2456, %v3044
        %v3049 = vmul.f32 %v2461, %v3044
        %v3050 = vmul.f32 %v2464, %v3044
        %v3051 = vmul.f32 %v2469, %v3044
        %v3052 = vmul.f32 %v2472, %v3044
        %v3053 = vmul.f32 %v2477, %v3044
        %v3054 = vmul.f32 %v2480, %v3044
        %v3055 = vmul.f32 %v2485, %v3044
        %v3056 = vmul.f32 %v2488, %v3044
        %v3057 = vmul.f32 %v2493, %v3044
        %v3058 = vmul.f32 %v2496, %v3044
        %v3059 = vmul.f32 %v2501, %v3044
        %v3060 = vmul.f32 %v2504, %v3044
        %v3061 = vmul.f32 %v2509, %v3044
        %v3062 = vmul.f32 %v2512, %v3044
        %v3063 = vmul.f32 %v2517, %v3044
        %v3064 = vmul.f32 %v2520, %v3044
        %v3065 = vmul.f32 %v2525, %v3044
        %v3066 = vmul.f32 %v2528, %v3044
        %v3067 = vmul.f32 %v2533, %v3044
        %v3068 = vmul.f32 %v2536, %v3044
        %v3069 = vmul.f32 %v2541, %v3044
        %v3070 = vmul.f32 %v2544, %v3044
        %v3071 = vmul.f32 %v2549, %v3044
        %v3072 = vmul.f32 %v2552, %v3044
        %v3073 = vmul.f32 %v2557, %v3044
        %v3074 = vmul.f32 %v2560, %v3044
        %v3075 = vmul.f32 %v2565, %v3044
        %v3076 = vmul.f32 %v2568, %v3044
        %v3077 = vmul.f32 %v2573, %v3044
        %v3078 = vmul.f32 %v2576, %v3044
        %v3079 = vmul.f32 %v2581, %v3044
        %v3080 = vmul.f32 %v2584, %v3044
        %v3081 = vmul.f32 %v2589, %v3044
        %v3082 = vmul.f32 %v2592, %v3044
        %v3083 = vmul.f32 %v2597, %v3044
        %v3084 = vmul.f32 %v2600, %v3044
        %v3085 = vmul.f32 %v2605, %v3044
        %v3086 = vmul.f32 %v2608, %v3044
        %v3087 = vmul.f32 %v2613, %v3044
        %v3088 = vmul.f32 %v2616, %v3044
        %v3089 = vmul.f32 %v2621, %v3044
        %v3090 = vmul.f32 %v2624, %v3044
        %v3091 = vmul.f32 %v2629, %v3044
        %v3092 = vmul.f32 %v2632, %v3044
        %v3093 = vmul.f32 %v2637, %v3044
        %v3094 = vmul.f32 %v2640, %v3044
        %v3095 = vmul.f32 %v2645, %v3044
        %v3096 = vmul.f32 %v2648, %v3044
        %v3097 = vmul.f32 %v2653, %v3044
        %v3098 = vmul.f32 %v2656, %v3044
        %v3099 = vmul.f32 %v2661, %v3044
        %v3100 = vmul.f32 %v2664, %v3044
        %v3101 = vmul.f32 %v2669, %v3044
        %v3102 = vmul.f32 %v2672, %v3044
        %v3103 = vmul.f32 %v2677, %v3044
        %v3104 = vmul.f32 %v2680, %v3044
        %v3105 = vmul.f32 %v2685, %v3044
        %v3106 = vmul.f32 %v2688, %v3044
        %v3107 = vmul.f32 %v2693, %v3044
        %v3108 = vmul.f32 %v2696, %v3044
        %v3109 = vlaneseq
        %v3110 = vshrl.u32 %v3109, 7
        %v3111 = vsub.s32 0, %v3110
        %v3112 = vrot.slane %v3040, %v3111
        %v3113 = vadd.f32 %v3045, %v3112
        %v3114 = vadd.f32 %v3046, %v3112
        %v3115 = vadd.f32 %v3047, %v3112
        %v3116 = vadd.f32 %v3048, %v3112
        %v3117 = vadd.f32 %v3049, %v3112
        %v3118 = vadd.f32 %v3050, %v3112
        %v3119 = vadd.f32 %v3051, %v3112
        %v3120 = vadd.f32 %v3052, %v3112
        %v3121 = vadd.f32 %v3053, %v3112
        %v3122 = vadd.f32 %v3054, %v3112
        %v3123 = vadd.f32 %v3055, %v3112
        %v3124 = vadd.f32 %v3056, %v3112
        %v3125 = vadd.f32 %v3057, %v3112
        %v3126 = vadd.f32 %v3058, %v3112
        %v3127 = vadd.f32 %v3059, %v3112
        %v3128 = vadd.f32 %v3060, %v3112
        %v3129 = vadd.f32 %v3061, %v3112
        %v3130 = vadd.f32 %v3062, %v3112
        %v3131 = vadd.f32 %v3063, %v3112
        %v3132 = vadd.f32 %v3064, %v3112
        %v3133 = vadd.f32 %v3065, %v3112
        %v3134 = vadd.f32 %v3066, %v3112
        %v3135 = vadd.f32 %v3067, %v3112
        %v3136 = vadd.f32 %v3068, %v3112
        %v3137 = vadd.f32 %v3069, %v3112
        %v3138 = vadd.f32 %v3070, %v3112
        %v3139 = vadd.f32 %v3071, %v3112
        %v3140 = vadd.f32 %v3072, %v3112
        %v3141 = vadd.f32 %v3073, %v3112
        %v3142 = vadd.f32 %v3074, %v3112
        %v3143 = vadd.f32 %v3075, %v3112
        %v3144 = vadd.f32 %v3076, %v3112
        %v3145 = vadd.f32 %v3077, %v3112
        %v3146 = vadd.f32 %v3078, %v3112
        %v3147 = vadd.f32 %v3079, %v3112
        %v3148 = vadd.f32 %v3080, %v3112
        %v3149 = vadd.f32 %v3081, %v3112
        %v3150 = vadd.f32 %v3082, %v3112
        %v3151 = vadd.f32 %v3083, %v3112
        %v3152 = vadd.f32 %v3084, %v3112
        %v3153 = vadd.f32 %v3085, %v3112
        %v3154 = vadd.f32 %v3086, %v3112
        %v3155 = vadd.f32 %v3087, %v3112
        %v3156 = vadd.f32 %v3088, %v3112
        %v3157 = vadd.f32 %v3089, %v3112
        %v3158 = vadd.f32 %v3090, %v3112
        %v3159 = vadd.f32 %v3091, %v3112
        %v3160 = vadd.f32 %v3092, %v3112
        %v3161 = vadd.f32 %v3093, %v3112
        %v3162 = vadd.f32 %v3094, %v3112
        %v3163 = vadd.f32 %v3095, %v3112
        %v3164 = vadd.f32 %v3096, %v3112
        %v3165 = vadd.f32 %v3097, %v3112
        %v3166 = vadd.f32 %v3098, %v3112
        %v3167 = vadd.f32 %v3099, %v3112
        %v3168 = vadd.f32 %v3100, %v3112
        %v3169 = vadd.f32 %v3101, %v3112
        %v3170 = vadd.f32 %v3102, %v3112
        %v3171 = vadd.f32 %v3103, %v3112
        %v3172 = vadd.f32 %v3104, %v3112
        %v3173 = vadd.f32 %v3105, %v3112
        %v3174 = vadd.f32 %v3106, %v3112
        %v3175 = vadd.f32 %v3107, %v3112
        %v3176 = vadd.f32 %v3108, %v3112
        %v3177 = vmax.f32 %v3113, 0.0
        %v3178 = vmax.f32 %v3114, 0.0
        %v3179 = vmax.f32 %v3115, 0.0
        %v3180 = vmax.f32 %v3116, 0.0
        %v3181 = vmax.f32 %v3117, 0.0
        %v3182 = vmax.f32 %v3118, 0.0
        %v3183 = vmax.f32 %v3119, 0.0
        %v3184 = vmax.f32 %v3120, 0.0
        %v3185 = vmax.f32 %v3121, 0.0
        %v3186 = vmax.f32 %v3122, 0.0
        %v3187 = vmax.f32 %v3123, 0.0
        %v3188 = vmax.f32 %v3124, 0.0
        %v3189 = vmax.f32 %v3125, 0.0
        %v3190 = vmax.f32 %v3126, 0.0
        %v3191 = vmax.f32 %v3127, 0.0
        %v3192 = vmax.f32 %v3128, 0.0
        %v3193 = vmax.f32 %v3129, 0.0
        %v3194 = vmax.f32 %v3130, 0.0
        %v3195 = vmax.f32 %v3131, 0.0
        %v3196 = vmax.f32 %v3132, 0.0
        %v3197 = vmax.f32 %v3133, 0.0
        %v3198 = vmax.f32 %v3134, 0.0
        %v3199 = vmax.f32 %v3135, 0.0
        %v3200 = vmax.f32 %v3136, 0.0
        %v3201 = vmax.f32 %v3137, 0.0
        %v3202 = vmax.f32 %v3138, 0.0
        %v3203 = vmax.f32 %v3139, 0.0
        %v3204 = vmax.f32 %v3140, 0.0
        %v3205 = vmax.f32 %v3141, 0.0
        %v3206 = vmax.f32 %v3142, 0.0
        %v3207 = vmax.f32 %v3143, 0.0
        %v3208 = vmax.f32 %v3144, 0.0
        %v3209 = vmax.f32 %v3145, 0.0
        %v3210 = vmax.f32 %v3146, 0.0
        %v3211 = vmax.f32 %v3147, 0.0
        %v3212 = vmax.f32 %v3148, 0.0
        %v3213 = vmax.f32 %v3149, 0.0
        %v3214 = vmax.f32 %v3150, 0.0
        %v3215 = vmax.f32 %v3151, 0.0
        %v3216 = vmax.f32 %v3152, 0.0
        %v3217 = vmax.f32 %v3153, 0.0
        %v3218 = vmax.f32 %v3154, 0.0
        %v3219 = vmax.f32 %v3155, 0.0
        %v3220 = vmax.f32 %v3156, 0.0
        %v3221 = vmax.f32 %v3157, 0.0
        %v3222 = vmax.f32 %v3158, 0.0
        %v3223 = vmax.f32 %v3159, 0.0
        %v3224 = vmax.f32 %v3160, 0.0
        %v3225 = vmax.f32 %v3161, 0.0
        %v3226 = vmax.f32 %v3162, 0.0
        %v3227 = vmax.f32 %v3163, 0.0
        %v3228 = vmax.f32 %v3164, 0.0
        %v3229 = vmax.f32 %v3165, 0.0
        %v3230 = vmax.f32 %v3166, 0.0
        %v3231 = vmax.f32 %v3167, 0.0
        %v3232 = vmax.f32 %v3168, 0.0
        %v3233 = vmax.f32 %v3169, 0.0
        %v3234 = vmax.f32 %v3170, 0.0
        %v3235 = vmax.f32 %v3171, 0.0
        %v3236 = vmax.f32 %v3172, 0.0
        %v3237 = vmax.f32 %v3173, 0.0
        %v3238 = vmax.f32 %v3174, 0.0
        %v3239 = vmax.f32 %v3175, 0.0
        %v3240 = vmax.f32 %v3176, 0.0
        %v3241 = vpack.c.bf16 %v3178, %v3177
        %v3242 = vpack.c.bf16 %v3180, %v3179
        %v3243 = vpack.c.bf16 %v3182, %v3181
        %v3244 = vpack.c.bf16 %v3184, %v3183
        %v3245 = vpack.c.bf16 %v3186, %v3185
        %v3246 = vpack.c.bf16 %v3188, %v3187
        %v3247 = vpack.c.bf16 %v3190, %v3189
        %v3248 = vpack.c.bf16 %v3192, %v3191
        %v3249 = vpack.c.bf16 %v3194, %v3193
        %v3250 = vpack.c.bf16 %v3196, %v3195
        %v3251 = vpack.c.bf16 %v3198, %v3197
        %v3252 = vpack.c.bf16 %v3200, %v3199
        %v3253 = vpack.c.bf16 %v3202, %v3201
        %v3254 = vpack.c.bf16 %v3204, %v3203
        %v3255 = vpack.c.bf16 %v3206, %v3205
        %v3256 = vpack.c.bf16 %v3208, %v3207
        %v3257 = vpack.c.bf16 %v3210, %v3209
        %v3258 = vpack.c.bf16 %v3212, %v3211
        %v3259 = vpack.c.bf16 %v3214, %v3213
        %v3260 = vpack.c.bf16 %v3216, %v3215
        %v3261 = vpack.c.bf16 %v3218, %v3217
        %v3262 = vpack.c.bf16 %v3220, %v3219
        %v3263 = vpack.c.bf16 %v3222, %v3221
        %v3264 = vpack.c.bf16 %v3224, %v3223
        %v3265 = vpack.c.bf16 %v3226, %v3225
        %v3266 = vpack.c.bf16 %v3228, %v3227
        %v3267 = vpack.c.bf16 %v3230, %v3229
        %v3268 = vpack.c.bf16 %v3232, %v3231
        %v3269 = vpack.c.bf16 %v3234, %v3233
        %v3270 = vpack.c.bf16 %v3236, %v3235
        %v3271 = vpack.c.bf16 %v3238, %v3237
        %v3272 = vpack.c.bf16 %v3240, %v3239
        %s3273 = scalar_lea.vmem %s278, 16
        %v3274 = vld [vmem:[%s3273] sm:$0xf]
        %v3275 = vld [vmem:[%s3273 + $0x4] sm:$0xf]
        %v3276 = vld [vmem:[%s3273 + $0x8] sm:$0xf]
        %v3277 = vld [vmem:[%s3273 + $0xc] sm:$0xf]
        %v3278 = vld [vmem:[%s268 + $0xf] sm:$0x1]
        %v3279 = vlaneseq
        %v3280 = vshrl.u32 %v3279, 7
        %v3281 = vsub.s32 0, %v3280
        %v3282 = vrot.slane %v3278, %v3281
        %v3287 = vunpack.c.l.b16 %v3274
        %v3288 = vunpack.c.l.b16 %v3275
        %v3289 = vunpack.c.l.b16 %v3276
        %v3290 = vunpack.c.l.b16 %v3277
        %v3291 = vpack.c.b16 %v3288, %v3287
        %v3292 = vpack.c.b16 %v3290, %v3289
        %v3296 = vsel %vm740, %v3241, 0
        %v3299 = vsel %vm740, %v3242, 0
        %v3302 = vsel %vm740, %v3243, 0
        %v3305 = vsel %vm740, %v3244, 0
        %v3308 = vsel %vm740, %v3245, 0
        %v3311 = vsel %vm740, %v3246, 0
        %v3314 = vsel %vm740, %v3247, 0
        %v3317 = vsel %vm740, %v3248, 0
        %v3320 = vsel %vm740, %v3249, 0
        %v3323 = vsel %vm740, %v3250, 0
        %v3326 = vsel %vm740, %v3251, 0
        %v3329 = vsel %vm740, %v3252, 0
        %v3332 = vsel %vm740, %v3253, 0
        %v3335 = vsel %vm740, %v3254, 0
        %v3338 = vsel %vm740, %v3255, 0
        %v3341 = vsel %vm740, %v3256, 0
        %v3344 = vsel %vm740, %v3257, 0
        %v3347 = vsel %vm740, %v3258, 0
        %v3350 = vsel %vm740, %v3259, 0
        %v3353 = vsel %vm740, %v3260, 0
        %v3356 = vsel %vm740, %v3261, 0
        %v3359 = vsel %vm740, %v3262, 0
        %v3362 = vsel %vm740, %v3263, 0
        %v3365 = vsel %vm740, %v3264, 0
        %v3368 = vsel %vm740, %v3265, 0
        %v3371 = vsel %vm740, %v3266, 0
        %v3374 = vsel %vm740, %v3267, 0
        %v3377 = vsel %vm740, %v3268, 0
        %v3380 = vsel %vm740, %v3269, 0
        %v3383 = vsel %vm740, %v3270, 0
        %v3386 = vsel %vm740, %v3271, 0
        %v3389 = vsel %vm740, %v3272, 0
        %3391 = vmatprep.subr.bf16.mxu0 0
        %3392 = vmatpush1.bf16.msra.mxu0 %v3291
        %3393 = vmatprep.subr.bf16.mxu0 0
        %3394 = vmatpush1.bf16.msra.mxu0 %v3292
        %3395 = vmatprep.subr.bf16.mxu0 0
        %3396 = vmatpush1.bf16.msra.mxu0 0
        %3397 = vmatprep.subr.bf16.mxu0 0
        %3398 = vmatpush1.bf16.msra.mxu0 0
        %3399 = vmatprep.subr.bf16.mxu0 0
        %3400 = vmatpush1.bf16.msra.mxu0 0
        %3401 = vmatprep.subr.bf16.mxu0 0
        %3402 = vmatpush1.bf16.msra.mxu0 0
        %3403 = vmatprep.subr.bf16.mxu0 0
        %3404 = vmatpush1.bf16.msra.mxu0 0
        %3405 = vmatprep.subr.bf16.mxu0 0
        %3406 = vmatpush1.bf16.msra.mxu0 0
        %3407 = vmatprep.subr.bf16.mxu0 0
        %3408 = vmatpush1.bf16.msra.mxu0 0
        %3409 = vmatprep.subr.bf16.mxu0 0
        %3410 = vmatpush1.bf16.msra.mxu0 0
        %3411 = vmatprep.subr.bf16.mxu0 0
        %3412 = vmatpush1.bf16.msra.mxu0 0
        %3413 = vmatprep.subr.bf16.mxu0 0
        %3414 = vmatpush1.bf16.msra.mxu0 0
        %3415 = vmatprep.subr.bf16.mxu0 0
        %3416 = vmatpush1.bf16.msra.mxu0 0
        %3417 = vmatprep.subr.bf16.mxu0 0
        %3418 = vmatpush1.bf16.msra.mxu0 0
        %3419 = vmatprep.subr.bf16.mxu0 0
        %3420 = vmatpush1.bf16.msra.mxu0 0
        %3421 = vmatprep.subr.bf16.mxu0 0
        %3422 = vmatpush1.bf16.msra.mxu0 0
        %3423 = vmatprep.mubr.bf16.mxu0 0
        %3424 = vmatmul.mubr.bf16.gmra.mrb[0].mxu0 %v3296
        %v3425 = vpop.f32.mrb[0].mxu0
        %v3426 = vadd.f32 %v3282, %v3425
        %v3427 = vpop.f32.mrb[0].mxu0
        %v3428 = vpop.f32.mrb[0].mxu0
        %v3429 = vadd.f32 %v3282, %v3428
        %v3430 = vpop.f32.mrb[0].mxu0
        %3431 = vmatprep.mubr.bf16.mxu0 0
        %3432 = vmatmul.mubr.bf16.gmra.mrb[0].mxu0 %v3299
        %v3433 = vpop.f32.mrb[0].mxu0
        %v3434 = vadd.f32 %v3282, %v3433
        %v3435 = vpop.f32.mrb[0].mxu0
        %v3436 = vpop.f32.mrb[0].mxu0
        %v3437 = vadd.f32 %v3282, %v3436
        %v3438 = vpop.f32.mrb[0].mxu0
        %3439 = vmatprep.mubr.bf16.mxu0 0
        %3440 = vmatmul.mubr.bf16.gmra.mrb[0].mxu0 %v3302
        %v3441 = vpop.f32.mrb[0].mxu0
        %v3442 = vadd.f32 %v3282, %v3441
        %v3443 = vpop.f32.mrb[0].mxu0
        %v3444 = vpop.f32.mrb[0].mxu0
        %v3445 = vadd.f32 %v3282, %v3444
        %v3446 = vpop.f32.mrb[0].mxu0
        %3447 = vmatprep.mubr.bf16.mxu0 0
        %3448 = vmatmul.mubr.bf16.gmra.mrb[0].mxu0 %v3305
        %v3449 = vpop.f32.mrb[0].mxu0
        %v3450 = vadd.f32 %v3282, %v3449
        %v3451 = vpop.f32.mrb[0].mxu0
        %v3452 = vpop.f32.mrb[0].mxu0
        %v3453 = vadd.f32 %v3282, %v3452
        %v3454 = vpop.f32.mrb[0].mxu0
        %3455 = vmatprep.mubr.bf16.mxu0 0
        %3456 = vmatmul.mubr.bf16.gmra.mrb[0].mxu0 %v3308
        %v3457 = vpop.f32.mrb[0].mxu0
        %v3458 = vadd.f32 %v3282, %v3457
        %v3459 = vpop.f32.mrb[0].mxu0
        %v3460 = vpop.f32.mrb[0].mxu0
        %v3461 = vadd.f32 %v3282, %v3460
        %v3462 = vpop.f32.mrb[0].mxu0
        %3463 = vmatprep.mubr.bf16.mxu0 0
        %3464 = vmatmul.mubr.bf16.gmra.mrb[0].mxu0 %v3311
        %v3465 = vpop.f32.mrb[0].mxu0
        %v3466 = vadd.f32 %v3282, %v3465
        %v3467 = vpop.f32.mrb[0].mxu0
        %v3468 = vpop.f32.mrb[0].mxu0
        %v3469 = vadd.f32 %v3282, %v3468
        %v3470 = vpop.f32.mrb[0].mxu0
        %3471 = vmatprep.mubr.bf16.mxu0 0
        %3472 = vmatmul.mubr.bf16.gmra.mrb[0].mxu0 %v3314
        %v3473 = vpop.f32.mrb[0].mxu0
        %v3474 = vadd.f32 %v3282, %v3473
        %v3475 = vpop.f32.mrb[0].mxu0
        %v3476 = vpop.f32.mrb[0].mxu0
        %v3477 = vadd.f32 %v3282, %v3476
        %v3478 = vpop.f32.mrb[0].mxu0
        %3479 = vmatprep.mubr.bf16.mxu0 0
        %3480 = vmatmul.mubr.bf16.gmra.mrb[0].mxu0 %v3317
        %v3481 = vpop.f32.mrb[0].mxu0
        %v3482 = vadd.f32 %v3282, %v3481
        %v3483 = vpop.f32.mrb[0].mxu0
        %v3484 = vpop.f32.mrb[0].mxu0
        %v3485 = vadd.f32 %v3282, %v3484
        %v3486 = vpop.f32.mrb[0].mxu0
        %3487 = vmatprep.mubr.bf16.mxu0 0
        %3488 = vmatmul.mubr.bf16.gmra.mrb[0].mxu0 %v3320
        %v3489 = vpop.f32.mrb[0].mxu0
        %v3490 = vadd.f32 %v3282, %v3489
        %v3491 = vpop.f32.mrb[0].mxu0
        %v3492 = vpop.f32.mrb[0].mxu0
        %v3493 = vadd.f32 %v3282, %v3492
        %v3494 = vpop.f32.mrb[0].mxu0
        %3495 = vmatprep.mubr.bf16.mxu0 0
        %3496 = vmatmul.mubr.bf16.gmra.mrb[0].mxu0 %v3323
        %v3497 = vpop.f32.mrb[0].mxu0
        %v3498 = vadd.f32 %v3282, %v3497
        %v3499 = vpop.f32.mrb[0].mxu0
        %v3500 = vpop.f32.mrb[0].mxu0
        %v3501 = vadd.f32 %v3282, %v3500
        %v3502 = vpop.f32.mrb[0].mxu0
        %3503 = vmatprep.mubr.bf16.mxu0 0
        %3504 = vmatmul.mubr.bf16.gmra.mrb[0].mxu0 %v3326
        %v3505 = vpop.f32.mrb[0].mxu0
        %v3506 = vadd.f32 %v3282, %v3505
        %v3507 = vpop.f32.mrb[0].mxu0
        %v3508 = vpop.f32.mrb[0].mxu0
        %v3509 = vadd.f32 %v3282, %v3508
        %v3510 = vpop.f32.mrb[0].mxu0
        %3511 = vmatprep.mubr.bf16.mxu0 0
        %3512 = vmatmul.mubr.bf16.gmra.mrb[0].mxu0 %v3329
        %v3513 = vpop.f32.mrb[0].mxu0
        %v3514 = vadd.f32 %v3282, %v3513
        %v3515 = vpop.f32.mrb[0].mxu0
        %v3516 = vpop.f32.mrb[0].mxu0
        %v3517 = vadd.f32 %v3282, %v3516
        %v3518 = vpop.f32.mrb[0].mxu0
        %3519 = vmatprep.mubr.bf16.mxu0 0
        %3520 = vmatmul.mubr.bf16.gmra.mrb[0].mxu0 %v3332
        %v3521 = vpop.f32.mrb[0].mxu0
        %v3522 = vadd.f32 %v3282, %v3521
        %v3523 = vpop.f32.mrb[0].mxu0
        %v3524 = vpop.f32.mrb[0].mxu0
        %v3525 = vadd.f32 %v3282, %v3524
        %v3526 = vpop.f32.mrb[0].mxu0
        %3527 = vmatprep.mubr.bf16.mxu0 0
        %3528 = vmatmul.mubr.bf16.gmra.mrb[0].mxu0 %v3335
        %v3529 = vpop.f32.mrb[0].mxu0
        %v3530 = vadd.f32 %v3282, %v3529
        %v3531 = vpop.f32.mrb[0].mxu0
        %v3532 = vpop.f32.mrb[0].mxu0
        %v3533 = vadd.f32 %v3282, %v3532
        %v3534 = vpop.f32.mrb[0].mxu0
        %3535 = vmatprep.mubr.bf16.mxu0 0
        %3536 = vmatmul.mubr.bf16.gmra.mrb[0].mxu0 %v3338
        %v3537 = vpop.f32.mrb[0].mxu0
        %v3538 = vadd.f32 %v3282, %v3537
        %v3539 = vpop.f32.mrb[0].mxu0
        %v3540 = vpop.f32.mrb[0].mxu0
        %v3541 = vadd.f32 %v3282, %v3540
        %v3542 = vpop.f32.mrb[0].mxu0
        %3543 = vmatprep.mubr.bf16.mxu0 0
        %3544 = vmatmul.mubr.bf16.gmra.mrb[0].mxu0 %v3341
        %v3545 = vpop.f32.mrb[0].mxu0
        %v3546 = vadd.f32 %v3282, %v3545
        %v3547 = vpop.f32.mrb[0].mxu0
        %v3548 = vpop.f32.mrb[0].mxu0
        %v3549 = vadd.f32 %v3282, %v3548
        %v3550 = vpop.f32.mrb[0].mxu0
        %3551 = vmatprep.mubr.bf16.mxu0 0
        %3552 = vmatmul.mubr.bf16.gmra.mrb[0].mxu0 %v3344
        %v3553 = vpop.f32.mrb[0].mxu0
        %v3554 = vadd.f32 %v3282, %v3553
        %v3555 = vpop.f32.mrb[0].mxu0
        %v3556 = vpop.f32.mrb[0].mxu0
        %v3557 = vadd.f32 %v3282, %v3556
        %v3558 = vpop.f32.mrb[0].mxu0
        %3559 = vmatprep.mubr.bf16.mxu0 0
        %3560 = vmatmul.mubr.bf16.gmra.mrb[0].mxu0 %v3347
        %v3561 = vpop.f32.mrb[0].mxu0
        %v3562 = vadd.f32 %v3282, %v3561
        %v3563 = vpop.f32.mrb[0].mxu0
        %v3564 = vpop.f32.mrb[0].mxu0
        %v3565 = vadd.f32 %v3282, %v3564
        %v3566 = vpop.f32.mrb[0].mxu0
        %3567 = vmatprep.mubr.bf16.mxu0 0
        %3568 = vmatmul.mubr.bf16.gmra.mrb[0].mxu0 %v3350
        %v3569 = vpop.f32.mrb[0].mxu0
        %v3570 = vadd.f32 %v3282, %v3569
        %v3571 = vpop.f32.mrb[0].mxu0
        %v3572 = vpop.f32.mrb[0].mxu0
        %v3573 = vadd.f32 %v3282, %v3572
        %v3574 = vpop.f32.mrb[0].mxu0
        %3575 = vmatprep.mubr.bf16.mxu0 0
        %3576 = vmatmul.mubr.bf16.gmra.mrb[0].mxu0 %v3353
        %v3577 = vpop.f32.mrb[0].mxu0
        %v3578 = vadd.f32 %v3282, %v3577
        %v3579 = vpop.f32.mrb[0].mxu0
        %v3580 = vpop.f32.mrb[0].mxu0
        %v3581 = vadd.f32 %v3282, %v3580
        %v3582 = vpop.f32.mrb[0].mxu0
        %3583 = vmatprep.mubr.bf16.mxu0 0
        %3584 = vmatmul.mubr.bf16.gmra.mrb[0].mxu0 %v3356
        %v3585 = vpop.f32.mrb[0].mxu0
        %v3586 = vadd.f32 %v3282, %v3585
        %v3587 = vpop.f32.mrb[0].mxu0
        %v3588 = vpop.f32.mrb[0].mxu0
        %v3589 = vadd.f32 %v3282, %v3588
        %v3590 = vpop.f32.mrb[0].mxu0
        %3591 = vmatprep.mubr.bf16.mxu0 0
        %3592 = vmatmul.mubr.bf16.gmra.mrb[0].mxu0 %v3359
        %v3593 = vpop.f32.mrb[0].mxu0
        %v3594 = vadd.f32 %v3282, %v3593
        %v3595 = vpop.f32.mrb[0].mxu0
        %v3596 = vpop.f32.mrb[0].mxu0
        %v3597 = vadd.f32 %v3282, %v3596
        %v3598 = vpop.f32.mrb[0].mxu0
        %3599 = vmatprep.mubr.bf16.mxu0 0
        %3600 = vmatmul.mubr.bf16.gmra.mrb[0].mxu0 %v3362
        %v3601 = vpop.f32.mrb[0].mxu0
        %v3602 = vadd.f32 %v3282, %v3601
        %v3603 = vpop.f32.mrb[0].mxu0
        %v3604 = vpop.f32.mrb[0].mxu0
        %v3605 = vadd.f32 %v3282, %v3604
        %v3606 = vpop.f32.mrb[0].mxu0
        %3607 = vmatprep.mubr.bf16.mxu0 0
        %3608 = vmatmul.mubr.bf16.gmra.mrb[0].mxu0 %v3365
        %v3609 = vpop.f32.mrb[0].mxu0
        %v3610 = vadd.f32 %v3282, %v3609
        %v3611 = vpop.f32.mrb[0].mxu0
        %v3612 = vpop.f32.mrb[0].mxu0
        %v3613 = vadd.f32 %v3282, %v3612
        %v3614 = vpop.f32.mrb[0].mxu0
        %3615 = vmatprep.mubr.bf16.mxu0 0
        %3616 = vmatmul.mubr.bf16.gmra.mrb[0].mxu0 %v3368
        %v3617 = vpop.f32.mrb[0].mxu0
        %v3618 = vadd.f32 %v3282, %v3617
        %v3619 = vpop.f32.mrb[0].mxu0
        %v3620 = vpop.f32.mrb[0].mxu0
        %v3621 = vadd.f32 %v3282, %v3620
        %v3622 = vpop.f32.mrb[0].mxu0
        %3623 = vmatprep.mubr.bf16.mxu0 0
        %3624 = vmatmul.mubr.bf16.gmra.mrb[0].mxu0 %v3371
        %v3625 = vpop.f32.mrb[0].mxu0
        %v3626 = vadd.f32 %v3282, %v3625
        %v3627 = vpop.f32.mrb[0].mxu0
        %v3628 = vpop.f32.mrb[0].mxu0
        %v3629 = vadd.f32 %v3282, %v3628
        %v3630 = vpop.f32.mrb[0].mxu0
        %3631 = vmatprep.mubr.bf16.mxu0 0
        %3632 = vmatmul.mubr.bf16.gmra.mrb[0].mxu0 %v3374
        %v3633 = vpop.f32.mrb[0].mxu0
        %v3634 = vadd.f32 %v3282, %v3633
        %v3635 = vpop.f32.mrb[0].mxu0
        %v3636 = vpop.f32.mrb[0].mxu0
        %v3637 = vadd.f32 %v3282, %v3636
        %v3638 = vpop.f32.mrb[0].mxu0
        %3639 = vmatprep.mubr.bf16.mxu0 0
        %3640 = vmatmul.mubr.bf16.gmra.mrb[0].mxu0 %v3377
        %v3641 = vpop.f32.mrb[0].mxu0
        %v3642 = vadd.f32 %v3282, %v3641
        %v3643 = vpop.f32.mrb[0].mxu0
        %v3644 = vpop.f32.mrb[0].mxu0
        %v3645 = vadd.f32 %v3282, %v3644
        %v3646 = vpop.f32.mrb[0].mxu0
        %3647 = vmatprep.mubr.bf16.mxu0 0
        %3648 = vmatmul.mubr.bf16.gmra.mrb[0].mxu0 %v3380
        %v3649 = vpop.f32.mrb[0].mxu0
        %v3650 = vadd.f32 %v3282, %v3649
        %v3651 = vpop.f32.mrb[0].mxu0
        %v3652 = vpop.f32.mrb[0].mxu0
        %v3653 = vadd.f32 %v3282, %v3652
        %v3654 = vpop.f32.mrb[0].mxu0
        %3655 = vmatprep.mubr.bf16.mxu0 0
        %3656 = vmatmul.mubr.bf16.gmra.mrb[0].mxu0 %v3383
        %v3657 = vpop.f32.mrb[0].mxu0
        %v3658 = vadd.f32 %v3282, %v3657
        %v3659 = vpop.f32.mrb[0].mxu0
        %v3660 = vpop.f32.mrb[0].mxu0
        %v3661 = vadd.f32 %v3282, %v3660
        %v3662 = vpop.f32.mrb[0].mxu0
        %3663 = vmatprep.mubr.bf16.mxu0 0
        %3664 = vmatmul.mubr.bf16.gmra.mrb[0].mxu0 %v3386
        %v3665 = vpop.f32.mrb[0].mxu0
        %v3666 = vadd.f32 %v3282, %v3665
        %v3667 = vpop.f32.mrb[0].mxu0
        %v3668 = vpop.f32.mrb[0].mxu0
        %v3669 = vadd.f32 %v3282, %v3668
        %v3670 = vpop.f32.mrb[0].mxu0
        %3671 = vmatprep.mubr.bf16.mxu0 0
        %3672 = vmatmul.mubr.bf16.gmra.mrb[0].mxu0 %v3389
        %v3673 = vpop.f32.mrb[0].mxu0
        %v3674 = vadd.f32 %v3282, %v3673
        %v3675 = vpop.f32.mrb[0].mxu0
        %v3676 = vpop.f32.mrb[0].mxu0
        %v3677 = vadd.f32 %v3282, %v3676
        %v3678 = vpop.f32.mrb[0].mxu0
        %3679 = vdwg.mxu0
        %v3680 = vld [vmem:[%s268 + $0x11] sm:$0x1]
        %v3681 = vld [vmem:[%s268 + $0x13] sm:$0x1]
        %v3682 = vsel %vm740, %v3426, 0.0
        %v3683 = vsel %vm740, %v3429, 0.0
        %v3684 = vadd.f32 %v3682, %v3683
        %v3685 = vsel %vm740, %v3434, 0.0
        %v3686 = vadd.f32 %v3684, %v3685
        %v3687 = vsel %vm740, %v3437, 0.0
        %v3688 = vadd.f32 %v3686, %v3687
        %v3689 = vsel %vm740, %v3442, 0.0
        %v3690 = vadd.f32 %v3688, %v3689
        %v3691 = vsel %vm740, %v3445, 0.0
        %v3692 = vadd.f32 %v3690, %v3691
        %v3693 = vsel %vm740, %v3450, 0.0
        %v3694 = vadd.f32 %v3692, %v3693
        %v3695 = vsel %vm740, %v3453, 0.0
        %v3696 = vadd.f32 %v3694, %v3695
        %v3697 = vsel %vm740, %v3458, 0.0
        %v3698 = vadd.f32 %v3696, %v3697
        %v3699 = vsel %vm740, %v3461, 0.0
        %v3700 = vadd.f32 %v3698, %v3699
        %v3701 = vsel %vm740, %v3466, 0.0
        %v3702 = vadd.f32 %v3700, %v3701
        %v3703 = vsel %vm740, %v3469, 0.0
        %v3704 = vadd.f32 %v3702, %v3703
        %v3705 = vsel %vm740, %v3474, 0.0
        %v3706 = vadd.f32 %v3704, %v3705
        %v3707 = vsel %vm740, %v3477, 0.0
        %v3708 = vadd.f32 %v3706, %v3707
        %v3709 = vsel %vm740, %v3482, 0.0
        %v3710 = vadd.f32 %v3708, %v3709
        %v3711 = vsel %vm740, %v3485, 0.0
        %v3712 = vadd.f32 %v3710, %v3711
        %v3713 = vsel %vm740, %v3490, 0.0
        %v3714 = vadd.f32 %v3712, %v3713
        %v3715 = vsel %vm740, %v3493, 0.0
        %v3716 = vadd.f32 %v3714, %v3715
        %v3717 = vsel %vm740, %v3498, 0.0
        %v3718 = vadd.f32 %v3716, %v3717
        %v3719 = vsel %vm740, %v3501, 0.0
        %v3720 = vadd.f32 %v3718, %v3719
        %v3721 = vsel %vm740, %v3506, 0.0
        %v3722 = vadd.f32 %v3720, %v3721
        %v3723 = vsel %vm740, %v3509, 0.0
        %v3724 = vadd.f32 %v3722, %v3723
        %v3725 = vsel %vm740, %v3514, 0.0
        %v3726 = vadd.f32 %v3724, %v3725
        %v3727 = vsel %vm740, %v3517, 0.0
        %v3728 = vadd.f32 %v3726, %v3727
        %v3729 = vsel %vm740, %v3522, 0.0
        %v3730 = vadd.f32 %v3728, %v3729
        %v3731 = vsel %vm740, %v3525, 0.0
        %v3732 = vadd.f32 %v3730, %v3731
        %v3733 = vsel %vm740, %v3530, 0.0
        %v3734 = vadd.f32 %v3732, %v3733
        %v3735 = vsel %vm740, %v3533, 0.0
        %v3736 = vadd.f32 %v3734, %v3735
        %v3737 = vsel %vm740, %v3538, 0.0
        %v3738 = vadd.f32 %v3736, %v3737
        %v3739 = vsel %vm740, %v3541, 0.0
        %v3740 = vadd.f32 %v3738, %v3739
        %v3741 = vsel %vm740, %v3546, 0.0
        %v3742 = vadd.f32 %v3740, %v3741
        %v3743 = vsel %vm740, %v3549, 0.0
        %v3744 = vadd.f32 %v3742, %v3743
        %v3745 = vsel %vm740, %v3554, 0.0
        %v3746 = vadd.f32 %v3744, %v3745
        %v3747 = vsel %vm740, %v3557, 0.0
        %v3748 = vadd.f32 %v3746, %v3747
        %v3749 = vsel %vm740, %v3562, 0.0
        %v3750 = vadd.f32 %v3748, %v3749
        %v3751 = vsel %vm740, %v3565, 0.0
        %v3752 = vadd.f32 %v3750, %v3751
        %v3753 = vsel %vm740, %v3570, 0.0
        %v3754 = vadd.f32 %v3752, %v3753
        %v3755 = vsel %vm740, %v3573, 0.0
        %v3756 = vadd.f32 %v3754, %v3755
        %v3757 = vsel %vm740, %v3578, 0.0
        %v3758 = vadd.f32 %v3756, %v3757
        %v3759 = vsel %vm740, %v3581, 0.0
        %v3760 = vadd.f32 %v3758, %v3759
        %v3761 = vsel %vm740, %v3586, 0.0
        %v3762 = vadd.f32 %v3760, %v3761
        %v3763 = vsel %vm740, %v3589, 0.0
        %v3764 = vadd.f32 %v3762, %v3763
        %v3765 = vsel %vm740, %v3594, 0.0
        %v3766 = vadd.f32 %v3764, %v3765
        %v3767 = vsel %vm740, %v3597, 0.0
        %v3768 = vadd.f32 %v3766, %v3767
        %v3769 = vsel %vm740, %v3602, 0.0
        %v3770 = vadd.f32 %v3768, %v3769
        %v3771 = vsel %vm740, %v3605, 0.0
        %v3772 = vadd.f32 %v3770, %v3771
        %v3773 = vsel %vm740, %v3610, 0.0
        %v3774 = vadd.f32 %v3772, %v3773
        %v3775 = vsel %vm740, %v3613, 0.0
        %v3776 = vadd.f32 %v3774, %v3775
        %v3777 = vsel %vm740, %v3618, 0.0
        %v3778 = vadd.f32 %v3776, %v3777
        %v3779 = vsel %vm740, %v3621, 0.0
        %v3780 = vadd.f32 %v3778, %v3779
        %v3781 = vsel %vm740, %v3626, 0.0
        %v3782 = vadd.f32 %v3780, %v3781
        %v3783 = vsel %vm740, %v3629, 0.0
        %v3784 = vadd.f32 %v3782, %v3783
        %v3785 = vsel %vm740, %v3634, 0.0
        %v3786 = vadd.f32 %v3784, %v3785
        %v3787 = vsel %vm740, %v3637, 0.0
        %v3788 = vadd.f32 %v3786, %v3787
        %v3789 = vsel %vm740, %v3642, 0.0
        %v3790 = vadd.f32 %v3788, %v3789
        %v3791 = vsel %vm740, %v3645, 0.0
        %v3792 = vadd.f32 %v3790, %v3791
        %v3793 = vsel %vm740, %v3650, 0.0
        %v3794 = vadd.f32 %v3792, %v3793
        %v3795 = vsel %vm740, %v3653, 0.0
        %v3796 = vadd.f32 %v3794, %v3795
        %v3797 = vsel %vm740, %v3658, 0.0
        %v3798 = vadd.f32 %v3796, %v3797
        %v3799 = vsel %vm740, %v3661, 0.0
        %v3800 = vadd.f32 %v3798, %v3799
        %v3801 = vsel %vm740, %v3666, 0.0
        %v3802 = vadd.f32 %v3800, %v3801
        %v3803 = vsel %vm740, %v3669, 0.0
        %v3804 = vadd.f32 %v3802, %v3803
        %v3805 = vsel %vm740, %v3674, 0.0
        %v3806 = vadd.f32 %v3804, %v3805
        %v3807 = vsel %vm740, %v3677, 0.0
        %v3808 = vadd.f32 %v3806, %v3807
        %v3809 = vrot.slane %v3808, 4
        %v3810 = vadd.f32 %v3808, %v3809
        %v3811 = vrot.slane %v3810, 2
        %v3812 = vadd.f32 %v3810, %v3811
        %v3813 = vrot.slane %v3812, 1
        %v3814 = vadd.f32 %v3812, %v3813
        %v3815 = vmul.f32 %v3426, %v3426
        %v3816 = vmul.f32 %v3429, %v3429
        %v3817 = vmul.f32 %v3434, %v3434
        %v3818 = vmul.f32 %v3437, %v3437
        %v3819 = vmul.f32 %v3442, %v3442
        %v3820 = vmul.f32 %v3445, %v3445
        %v3821 = vmul.f32 %v3450, %v3450
        %v3822 = vmul.f32 %v3453, %v3453
        %v3823 = vmul.f32 %v3458, %v3458
        %v3824 = vmul.f32 %v3461, %v3461
        %v3825 = vmul.f32 %v3466, %v3466
        %v3826 = vmul.f32 %v3469, %v3469
        %v3827 = vmul.f32 %v3474, %v3474
        %v3828 = vmul.f32 %v3477, %v3477
        %v3829 = vmul.f32 %v3482, %v3482
        %v3830 = vmul.f32 %v3485, %v3485
        %v3831 = vmul.f32 %v3490, %v3490
        %v3832 = vmul.f32 %v3493, %v3493
        %v3833 = vmul.f32 %v3498, %v3498
        %v3834 = vmul.f32 %v3501, %v3501
        %v3835 = vmul.f32 %v3506, %v3506
        %v3836 = vmul.f32 %v3509, %v3509
        %v3837 = vmul.f32 %v3514, %v3514
        %v3838 = vmul.f32 %v3517, %v3517
        %v3839 = vmul.f32 %v3522, %v3522
        %v3840 = vmul.f32 %v3525, %v3525
        %v3841 = vmul.f32 %v3530, %v3530
        %v3842 = vmul.f32 %v3533, %v3533
        %v3843 = vmul.f32 %v3538, %v3538
        %v3844 = vmul.f32 %v3541, %v3541
        %v3845 = vmul.f32 %v3546, %v3546
        %v3846 = vmul.f32 %v3549, %v3549
        %v3847 = vmul.f32 %v3554, %v3554
        %v3848 = vmul.f32 %v3557, %v3557
        %v3849 = vmul.f32 %v3562, %v3562
        %v3850 = vmul.f32 %v3565, %v3565
        %v3851 = vmul.f32 %v3570, %v3570
        %v3852 = vmul.f32 %v3573, %v3573
        %v3853 = vmul.f32 %v3578, %v3578
        %v3854 = vmul.f32 %v3581, %v3581
        %v3855 = vmul.f32 %v3586, %v3586
        %v3856 = vmul.f32 %v3589, %v3589
        %v3857 = vmul.f32 %v3594, %v3594
        %v3858 = vmul.f32 %v3597, %v3597
        %v3859 = vmul.f32 %v3602, %v3602
        %v3860 = vmul.f32 %v3605, %v3605
        %v3861 = vmul.f32 %v3610, %v3610
        %v3862 = vmul.f32 %v3613, %v3613
        %v3863 = vmul.f32 %v3618, %v3618
        %v3864 = vmul.f32 %v3621, %v3621
        %v3865 = vmul.f32 %v3626, %v3626
        %v3866 = vmul.f32 %v3629, %v3629
        %v3867 = vmul.f32 %v3634, %v3634
        %v3868 = vmul.f32 %v3637, %v3637
        %v3869 = vmul.f32 %v3642, %v3642
        %v3870 = vmul.f32 %v3645, %v3645
        %v3871 = vmul.f32 %v3650, %v3650
        %v3872 = vmul.f32 %v3653, %v3653
        %v3873 = vmul.f32 %v3658, %v3658
        %v3874 = vmul.f32 %v3661, %v3661
        %v3875 = vmul.f32 %v3666, %v3666
        %v3876 = vmul.f32 %v3669, %v3669
        %v3877 = vmul.f32 %v3674, %v3674
        %v3878 = vmul.f32 %v3677, %v3677
        %v3879 = vsel %vm740, %v3815, 0.0
        %v3880 = vsel %vm740, %v3816, 0.0
        %v3881 = vadd.f32 %v3879, %v3880
        %v3882 = vsel %vm740, %v3817, 0.0
        %v3883 = vadd.f32 %v3881, %v3882
        %v3884 = vsel %vm740, %v3818, 0.0
        %v3885 = vadd.f32 %v3883, %v3884
        %v3886 = vsel %vm740, %v3819, 0.0
        %v3887 = vadd.f32 %v3885, %v3886
        %v3888 = vsel %vm740, %v3820, 0.0
        %v3889 = vadd.f32 %v3887, %v3888
        %v3890 = vsel %vm740, %v3821, 0.0
        %v3891 = vadd.f32 %v3889, %v3890
        %v3892 = vsel %vm740, %v3822, 0.0
        %v3893 = vadd.f32 %v3891, %v3892
        %v3894 = vsel %vm740, %v3823, 0.0
        %v3895 = vadd.f32 %v3893, %v3894
        %v3896 = vsel %vm740, %v3824, 0.0
        %v3897 = vadd.f32 %v3895, %v3896
        %v3898 = vsel %vm740, %v3825, 0.0
        %v3899 = vadd.f32 %v3897, %v3898
        %v3900 = vsel %vm740, %v3826, 0.0
        %v3901 = vadd.f32 %v3899, %v3900
        %v3902 = vsel %vm740, %v3827, 0.0
        %v3903 = vadd.f32 %v3901, %v3902
        %v3904 = vsel %vm740, %v3828, 0.0
        %v3905 = vadd.f32 %v3903, %v3904
        %v3906 = vsel %vm740, %v3829, 0.0
        %v3907 = vadd.f32 %v3905, %v3906
        %v3908 = vsel %vm740, %v3830, 0.0
        %v3909 = vadd.f32 %v3907, %v3908
        %v3910 = vsel %vm740, %v3831, 0.0
        %v3911 = vadd.f32 %v3909, %v3910
        %v3912 = vsel %vm740, %v3832, 0.0
        %v3913 = vadd.f32 %v3911, %v3912
        %v3914 = vsel %vm740, %v3833, 0.0
        %v3915 = vadd.f32 %v3913, %v3914
        %v3916 = vsel %vm740, %v3834, 0.0
        %v3917 = vadd.f32 %v3915, %v3916
        %v3918 = vsel %vm740, %v3835, 0.0
        %v3919 = vadd.f32 %v3917, %v3918
        %v3920 = vsel %vm740, %v3836, 0.0
        %v3921 = vadd.f32 %v3919, %v3920
        %v3922 = vsel %vm740, %v3837, 0.0
        %v3923 = vadd.f32 %v3921, %v3922
        %v3924 = vsel %vm740, %v3838, 0.0
        %v3925 = vadd.f32 %v3923, %v3924
        %v3926 = vsel %vm740, %v3839, 0.0
        %v3927 = vadd.f32 %v3925, %v3926
        %v3928 = vsel %vm740, %v3840, 0.0
        %v3929 = vadd.f32 %v3927, %v3928
        %v3930 = vsel %vm740, %v3841, 0.0
        %v3931 = vadd.f32 %v3929, %v3930
        %v3932 = vsel %vm740, %v3842, 0.0
        %v3933 = vadd.f32 %v3931, %v3932
        %v3934 = vsel %vm740, %v3843, 0.0
        %v3935 = vadd.f32 %v3933, %v3934
        %v3936 = vsel %vm740, %v3844, 0.0
        %v3937 = vadd.f32 %v3935, %v3936
        %v3938 = vsel %vm740, %v3845, 0.0
        %v3939 = vadd.f32 %v3937, %v3938
        %v3940 = vsel %vm740, %v3846, 0.0
        %v3941 = vadd.f32 %v3939, %v3940
        %v3942 = vsel %vm740, %v3847, 0.0
        %v3943 = vadd.f32 %v3941, %v3942
        %v3944 = vsel %vm740, %v3848, 0.0
        %v3945 = vadd.f32 %v3943, %v3944
        %v3946 = vsel %vm740, %v3849, 0.0
        %v3947 = vadd.f32 %v3945, %v3946
        %v3948 = vsel %vm740, %v3850, 0.0
        %v3949 = vadd.f32 %v3947, %v3948
        %v3950 = vsel %vm740, %v3851, 0.0
        %v3951 = vadd.f32 %v3949, %v3950
        %v3952 = vsel %vm740, %v3852, 0.0
        %v3953 = vadd.f32 %v3951, %v3952
        %v3954 = vsel %vm740, %v3853, 0.0
        %v3955 = vadd.f32 %v3953, %v3954
        %v3956 = vsel %vm740, %v3854, 0.0
        %v3957 = vadd.f32 %v3955, %v3956
        %v3958 = vsel %vm740, %v3855, 0.0
        %v3959 = vadd.f32 %v3957, %v3958
        %v3960 = vsel %vm740, %v3856, 0.0
        %v3961 = vadd.f32 %v3959, %v3960
        %v3962 = vsel %vm740, %v3857, 0.0
        %v3963 = vadd.f32 %v3961, %v3962
        %v3964 = vsel %vm740, %v3858, 0.0
        %v3965 = vadd.f32 %v3963, %v3964
        %v3966 = vsel %vm740, %v3859, 0.0
        %v3967 = vadd.f32 %v3965, %v3966
        %v3968 = vsel %vm740, %v3860, 0.0
        %v3969 = vadd.f32 %v3967, %v3968
        %v3970 = vsel %vm740, %v3861, 0.0
        %v3971 = vadd.f32 %v3969, %v3970
        %v3972 = vsel %vm740, %v3862, 0.0
        %v3973 = vadd.f32 %v3971, %v3972
        %v3974 = vsel %vm740, %v3863, 0.0
        %v3975 = vadd.f32 %v3973, %v3974
        %v3976 = vsel %vm740, %v3864, 0.0
        %v3977 = vadd.f32 %v3975, %v3976
        %v3978 = vsel %vm740, %v3865, 0.0
        %v3979 = vadd.f32 %v3977, %v3978
        %v3980 = vsel %vm740, %v3866, 0.0
        %v3981 = vadd.f32 %v3979, %v3980
        %v3982 = vsel %vm740, %v3867, 0.0
        %v3983 = vadd.f32 %v3981, %v3982
        %v3984 = vsel %vm740, %v3868, 0.0
        %v3985 = vadd.f32 %v3983, %v3984
        %v3986 = vsel %vm740, %v3869, 0.0
        %v3987 = vadd.f32 %v3985, %v3986
        %v3988 = vsel %vm740, %v3870, 0.0
        %v3989 = vadd.f32 %v3987, %v3988
        %v3990 = vsel %vm740, %v3871, 0.0
        %v3991 = vadd.f32 %v3989, %v3990
        %v3992 = vsel %vm740, %v3872, 0.0
        %v3993 = vadd.f32 %v3991, %v3992
        %v3994 = vsel %vm740, %v3873, 0.0
        %v3995 = vadd.f32 %v3993, %v3994
        %v3996 = vsel %vm740, %v3874, 0.0
        %v3997 = vadd.f32 %v3995, %v3996
        %v3998 = vsel %vm740, %v3875, 0.0
        %v3999 = vadd.f32 %v3997, %v3998
        %v4000 = vsel %vm740, %v3876, 0.0
        %v4001 = vadd.f32 %v3999, %v4000
        %v4002 = vsel %vm740, %v3877, 0.0
        %v4003 = vadd.f32 %v4001, %v4002
        %v4004 = vsel %vm740, %v3878, 0.0
        %v4005 = vadd.f32 %v4003, %v4004
        %v4006 = vrot.slane %v4005, 4
        %v4007 = vadd.f32 %v4005, %v4006
        %v4008 = vrot.slane %v4007, 2
        %v4009 = vadd.f32 %v4007, %v4008
        %v4010 = vrot.slane %v4009, 1
        %v4011 = vadd.f32 %v4009, %v4010
        %v4012 = vmul.f32 %v3814, 0.001953125
        %v4013 = vmul.f32 %v4011, 0.001953125
        %v4014 = vmul.f32 %v4012, %v4012
        %v4015 = vsub.f32 %v4013, %v4014
        %v4016 = vmax.f32 %v4015, 0.0
        %v4017 = vadd.f32 %v4016, 1e-05
        %v4018 = vrsqrt.pop %v4017
        %v4019 = vmul.f32 %v3680, %v4018
        %v4020 = vmul.f32 %v4012, %v4019
        %v4021 = vsub.f32 %v3681, %v4020
        %v4022 = vlaneseq
        %v4023 = vshrl.u32 %v4022, 7
        %v4024 = vsub.s32 0, %v4023
        %v4025 = vrot.slane %v4019, %v4024
        %v4026 = vmul.f32 %v3426, %v4025
        %v4027 = vmul.f32 %v3429, %v4025
        %v4028 = vmul.f32 %v3434, %v4025
        %v4029 = vmul.f32 %v3437, %v4025
        %v4030 = vmul.f32 %v3442, %v4025
        %v4031 = vmul.f32 %v3445, %v4025
        %v4032 = vmul.f32 %v3450, %v4025
        %v4033 = vmul.f32 %v3453, %v4025
        %v4034 = vmul.f32 %v3458, %v4025
        %v4035 = vmul.f32 %v3461, %v4025
        %v4036 = vmul.f32 %v3466, %v4025
        %v4037 = vmul.f32 %v3469, %v4025
        %v4038 = vmul.f32 %v3474, %v4025
        %v4039 = vmul.f32 %v3477, %v4025
        %v4040 = vmul.f32 %v3482, %v4025
        %v4041 = vmul.f32 %v3485, %v4025
        %v4042 = vmul.f32 %v3490, %v4025
        %v4043 = vmul.f32 %v3493, %v4025
        %v4044 = vmul.f32 %v3498, %v4025
        %v4045 = vmul.f32 %v3501, %v4025
        %v4046 = vmul.f32 %v3506, %v4025
        %v4047 = vmul.f32 %v3509, %v4025
        %v4048 = vmul.f32 %v3514, %v4025
        %v4049 = vmul.f32 %v3517, %v4025
        %v4050 = vmul.f32 %v3522, %v4025
        %v4051 = vmul.f32 %v3525, %v4025
        %v4052 = vmul.f32 %v3530, %v4025
        %v4053 = vmul.f32 %v3533, %v4025
        %v4054 = vmul.f32 %v3538, %v4025
        %v4055 = vmul.f32 %v3541, %v4025
        %v4056 = vmul.f32 %v3546, %v4025
        %v4057 = vmul.f32 %v3549, %v4025
        %v4058 = vmul.f32 %v3554, %v4025
        %v4059 = vmul.f32 %v3557, %v4025
        %v4060 = vmul.f32 %v3562, %v4025
        %v4061 = vmul.f32 %v3565, %v4025
        %v4062 = vmul.f32 %v3570, %v4025
        %v4063 = vmul.f32 %v3573, %v4025
        %v4064 = vmul.f32 %v3578, %v4025
        %v4065 = vmul.f32 %v3581, %v4025
        %v4066 = vmul.f32 %v3586, %v4025
        %v4067 = vmul.f32 %v3589, %v4025
        %v4068 = vmul.f32 %v3594, %v4025
        %v4069 = vmul.f32 %v3597, %v4025
        %v4070 = vmul.f32 %v3602, %v4025
        %v4071 = vmul.f32 %v3605, %v4025
        %v4072 = vmul.f32 %v3610, %v4025
        %v4073 = vmul.f32 %v3613, %v4025
        %v4074 = vmul.f32 %v3618, %v4025
        %v4075 = vmul.f32 %v3621, %v4025
        %v4076 = vmul.f32 %v3626, %v4025
        %v4077 = vmul.f32 %v3629, %v4025
        %v4078 = vmul.f32 %v3634, %v4025
        %v4079 = vmul.f32 %v3637, %v4025
        %v4080 = vmul.f32 %v3642, %v4025
        %v4081 = vmul.f32 %v3645, %v4025
        %v4082 = vmul.f32 %v3650, %v4025
        %v4083 = vmul.f32 %v3653, %v4025
        %v4084 = vmul.f32 %v3658, %v4025
        %v4085 = vmul.f32 %v3661, %v4025
        %v4086 = vmul.f32 %v3666, %v4025
        %v4087 = vmul.f32 %v3669, %v4025
        %v4088 = vmul.f32 %v3674, %v4025
        %v4089 = vmul.f32 %v3677, %v4025
        %v4090 = vlaneseq
        %v4091 = vshrl.u32 %v4090, 7
        %v4092 = vsub.s32 0, %v4091
        %v4093 = vrot.slane %v4021, %v4092
        %v4094 = vadd.f32 %v4026, %v4093
        %v4095 = vadd.f32 %v4027, %v4093
        %v4096 = vadd.f32 %v4028, %v4093
        %v4097 = vadd.f32 %v4029, %v4093
        %v4098 = vadd.f32 %v4030, %v4093
        %v4099 = vadd.f32 %v4031, %v4093
        %v4100 = vadd.f32 %v4032, %v4093
        %v4101 = vadd.f32 %v4033, %v4093
        %v4102 = vadd.f32 %v4034, %v4093
        %v4103 = vadd.f32 %v4035, %v4093
        %v4104 = vadd.f32 %v4036, %v4093
        %v4105 = vadd.f32 %v4037, %v4093
        %v4106 = vadd.f32 %v4038, %v4093
        %v4107 = vadd.f32 %v4039, %v4093
        %v4108 = vadd.f32 %v4040, %v4093
        %v4109 = vadd.f32 %v4041, %v4093
        %v4110 = vadd.f32 %v4042, %v4093
        %v4111 = vadd.f32 %v4043, %v4093
        %v4112 = vadd.f32 %v4044, %v4093
        %v4113 = vadd.f32 %v4045, %v4093
        %v4114 = vadd.f32 %v4046, %v4093
        %v4115 = vadd.f32 %v4047, %v4093
        %v4116 = vadd.f32 %v4048, %v4093
        %v4117 = vadd.f32 %v4049, %v4093
        %v4118 = vadd.f32 %v4050, %v4093
        %v4119 = vadd.f32 %v4051, %v4093
        %v4120 = vadd.f32 %v4052, %v4093
        %v4121 = vadd.f32 %v4053, %v4093
        %v4122 = vadd.f32 %v4054, %v4093
        %v4123 = vadd.f32 %v4055, %v4093
        %v4124 = vadd.f32 %v4056, %v4093
        %v4125 = vadd.f32 %v4057, %v4093
        %v4126 = vadd.f32 %v4058, %v4093
        %v4127 = vadd.f32 %v4059, %v4093
        %v4128 = vadd.f32 %v4060, %v4093
        %v4129 = vadd.f32 %v4061, %v4093
        %v4130 = vadd.f32 %v4062, %v4093
        %v4131 = vadd.f32 %v4063, %v4093
        %v4132 = vadd.f32 %v4064, %v4093
        %v4133 = vadd.f32 %v4065, %v4093
        %v4134 = vadd.f32 %v4066, %v4093
        %v4135 = vadd.f32 %v4067, %v4093
        %v4136 = vadd.f32 %v4068, %v4093
        %v4137 = vadd.f32 %v4069, %v4093
        %v4138 = vadd.f32 %v4070, %v4093
        %v4139 = vadd.f32 %v4071, %v4093
        %v4140 = vadd.f32 %v4072, %v4093
        %v4141 = vadd.f32 %v4073, %v4093
        %v4142 = vadd.f32 %v4074, %v4093
        %v4143 = vadd.f32 %v4075, %v4093
        %v4144 = vadd.f32 %v4076, %v4093
        %v4145 = vadd.f32 %v4077, %v4093
        %v4146 = vadd.f32 %v4078, %v4093
        %v4147 = vadd.f32 %v4079, %v4093
        %v4148 = vadd.f32 %v4080, %v4093
        %v4149 = vadd.f32 %v4081, %v4093
        %v4150 = vadd.f32 %v4082, %v4093
        %v4151 = vadd.f32 %v4083, %v4093
        %v4152 = vadd.f32 %v4084, %v4093
        %v4153 = vadd.f32 %v4085, %v4093
        %v4154 = vadd.f32 %v4086, %v4093
        %v4155 = vadd.f32 %v4087, %v4093
        %v4156 = vadd.f32 %v4088, %v4093
        %v4157 = vadd.f32 %v4089, %v4093
        %v4158 = vmax.f32 %v4094, 0.0
        %v4159 = vmax.f32 %v4095, 0.0
        %v4160 = vmax.f32 %v4096, 0.0
        %v4161 = vmax.f32 %v4097, 0.0
        %v4162 = vmax.f32 %v4098, 0.0
        %v4163 = vmax.f32 %v4099, 0.0
        %v4164 = vmax.f32 %v4100, 0.0
        %v4165 = vmax.f32 %v4101, 0.0
        %v4166 = vmax.f32 %v4102, 0.0
        %v4167 = vmax.f32 %v4103, 0.0
        %v4168 = vmax.f32 %v4104, 0.0
        %v4169 = vmax.f32 %v4105, 0.0
        %v4170 = vmax.f32 %v4106, 0.0
        %v4171 = vmax.f32 %v4107, 0.0
        %v4172 = vmax.f32 %v4108, 0.0
        %v4173 = vmax.f32 %v4109, 0.0
        %v4174 = vmax.f32 %v4110, 0.0
        %v4175 = vmax.f32 %v4111, 0.0
        %v4176 = vmax.f32 %v4112, 0.0
        %v4177 = vmax.f32 %v4113, 0.0
        %v4178 = vmax.f32 %v4114, 0.0
        %v4179 = vmax.f32 %v4115, 0.0
        %v4180 = vmax.f32 %v4116, 0.0
        %v4181 = vmax.f32 %v4117, 0.0
        %v4182 = vmax.f32 %v4118, 0.0
        %v4183 = vmax.f32 %v4119, 0.0
        %v4184 = vmax.f32 %v4120, 0.0
        %v4185 = vmax.f32 %v4121, 0.0
        %v4186 = vmax.f32 %v4122, 0.0
        %v4187 = vmax.f32 %v4123, 0.0
        %v4188 = vmax.f32 %v4124, 0.0
        %v4189 = vmax.f32 %v4125, 0.0
        %v4190 = vmax.f32 %v4126, 0.0
        %v4191 = vmax.f32 %v4127, 0.0
        %v4192 = vmax.f32 %v4128, 0.0
        %v4193 = vmax.f32 %v4129, 0.0
        %v4194 = vmax.f32 %v4130, 0.0
        %v4195 = vmax.f32 %v4131, 0.0
        %v4196 = vmax.f32 %v4132, 0.0
        %v4197 = vmax.f32 %v4133, 0.0
        %v4198 = vmax.f32 %v4134, 0.0
        %v4199 = vmax.f32 %v4135, 0.0
        %v4200 = vmax.f32 %v4136, 0.0
        %v4201 = vmax.f32 %v4137, 0.0
        %v4202 = vmax.f32 %v4138, 0.0
        %v4203 = vmax.f32 %v4139, 0.0
        %v4204 = vmax.f32 %v4140, 0.0
        %v4205 = vmax.f32 %v4141, 0.0
        %v4206 = vmax.f32 %v4142, 0.0
        %v4207 = vmax.f32 %v4143, 0.0
        %v4208 = vmax.f32 %v4144, 0.0
        %v4209 = vmax.f32 %v4145, 0.0
        %v4210 = vmax.f32 %v4146, 0.0
        %v4211 = vmax.f32 %v4147, 0.0
        %v4212 = vmax.f32 %v4148, 0.0
        %v4213 = vmax.f32 %v4149, 0.0
        %v4214 = vmax.f32 %v4150, 0.0
        %v4215 = vmax.f32 %v4151, 0.0
        %v4216 = vmax.f32 %v4152, 0.0
        %v4217 = vmax.f32 %v4153, 0.0
        %v4218 = vmax.f32 %v4154, 0.0
        %v4219 = vmax.f32 %v4155, 0.0
        %v4220 = vmax.f32 %v4156, 0.0
        %v4221 = vmax.f32 %v4157, 0.0
        %v4222 = vpack.c.bf16 %v4159, %v4158
        %v4223 = vpack.c.bf16 %v4161, %v4160
        %v4224 = vpack.c.bf16 %v4163, %v4162
        %v4225 = vpack.c.bf16 %v4165, %v4164
        %v4226 = vpack.c.bf16 %v4167, %v4166
        %v4227 = vpack.c.bf16 %v4169, %v4168
        %v4228 = vpack.c.bf16 %v4171, %v4170
        %v4229 = vpack.c.bf16 %v4173, %v4172
        %v4230 = vpack.c.bf16 %v4175, %v4174
        %v4231 = vpack.c.bf16 %v4177, %v4176
        %v4232 = vpack.c.bf16 %v4179, %v4178
        %v4233 = vpack.c.bf16 %v4181, %v4180
        %v4234 = vpack.c.bf16 %v4183, %v4182
        %v4235 = vpack.c.bf16 %v4185, %v4184
        %v4236 = vpack.c.bf16 %v4187, %v4186
        %v4237 = vpack.c.bf16 %v4189, %v4188
        %v4238 = vpack.c.bf16 %v4191, %v4190
        %v4239 = vpack.c.bf16 %v4193, %v4192
        %v4240 = vpack.c.bf16 %v4195, %v4194
        %v4241 = vpack.c.bf16 %v4197, %v4196
        %v4242 = vpack.c.bf16 %v4199, %v4198
        %v4243 = vpack.c.bf16 %v4201, %v4200
        %v4244 = vpack.c.bf16 %v4203, %v4202
        %v4245 = vpack.c.bf16 %v4205, %v4204
        %v4246 = vpack.c.bf16 %v4207, %v4206
        %v4247 = vpack.c.bf16 %v4209, %v4208
        %v4248 = vpack.c.bf16 %v4211, %v4210
        %v4249 = vpack.c.bf16 %v4213, %v4212
        %v4250 = vpack.c.bf16 %v4215, %v4214
        %v4251 = vpack.c.bf16 %v4217, %v4216
        %v4252 = vpack.c.bf16 %v4219, %v4218
        %v4253 = vpack.c.bf16 %v4221, %v4220
        %s4254 = scalar_lea.vmem %s278, 32
        %v4255 = vld [vmem:[%s4254] sm:$0xf]
        %v4256 = vld [vmem:[%s4254 + $0x4] sm:$0xf]
        %v4257 = vld [vmem:[%s4254 + $0x8] sm:$0xf]
        %v4258 = vld [vmem:[%s4254 + $0xc] sm:$0xf]
        %v4259 = vld [vmem:[%s268 + $0x14] sm:$0x1]
        %v4260 = vlaneseq
        %v4261 = vshrl.u32 %v4260, 7
        %v4262 = vsub.s32 0, %v4261
        %v4263 = vrot.slane %v4259, %v4262
        %v4268 = vunpack.c.l.b16 %v4255
        %v4269 = vunpack.c.l.b16 %v4256
        %v4270 = vunpack.c.l.b16 %v4257
        %v4271 = vunpack.c.l.b16 %v4258
        %v4272 = vpack.c.b16 %v4269, %v4268
        %v4273 = vpack.c.b16 %v4271, %v4270
        %v4277 = vsel %vm740, %v4222, 0
        %v4280 = vsel %vm740, %v4223, 0
        %v4283 = vsel %vm740, %v4224, 0
        %v4286 = vsel %vm740, %v4225, 0
        %v4289 = vsel %vm740, %v4226, 0
        %v4292 = vsel %vm740, %v4227, 0
        %v4295 = vsel %vm740, %v4228, 0
        %v4298 = vsel %vm740, %v4229, 0
        %v4301 = vsel %vm740, %v4230, 0
        %v4304 = vsel %vm740, %v4231, 0
        %v4307 = vsel %vm740, %v4232, 0
        %v4310 = vsel %vm740, %v4233, 0
        %v4313 = vsel %vm740, %v4234, 0
        %v4316 = vsel %vm740, %v4235, 0
        %v4319 = vsel %vm740, %v4236, 0
        %v4322 = vsel %vm740, %v4237, 0
        %v4325 = vsel %vm740, %v4238, 0
        %v4328 = vsel %vm740, %v4239, 0
        %v4331 = vsel %vm740, %v4240, 0
        %v4334 = vsel %vm740, %v4241, 0
        %v4337 = vsel %vm740, %v4242, 0
        %v4340 = vsel %vm740, %v4243, 0
        %v4343 = vsel %vm740, %v4244, 0
        %v4346 = vsel %vm740, %v4245, 0
        %v4349 = vsel %vm740, %v4246, 0
        %v4352 = vsel %vm740, %v4247, 0
        %v4355 = vsel %vm740, %v4248, 0
        %v4358 = vsel %vm740, %v4249, 0
        %v4361 = vsel %vm740, %v4250, 0
        %v4364 = vsel %vm740, %v4251, 0
        %v4367 = vsel %vm740, %v4252, 0
        %v4370 = vsel %vm740, %v4253, 0
        %4372 = vmatprep.subr.bf16.mxu0 0
        %4373 = vmatpush1.bf16.msra.mxu0 %v4272
        %4374 = vmatprep.subr.bf16.mxu0 0
        %4375 = vmatpush1.bf16.msra.mxu0 %v4273
        %4376 = vmatprep.subr.bf16.mxu0 0
        %4377 = vmatpush1.bf16.msra.mxu0 0
        %4378 = vmatprep.subr.bf16.mxu0 0
        %4379 = vmatpush1.bf16.msra.mxu0 0
        %4380 = vmatprep.subr.bf16.mxu0 0
        %4381 = vmatpush1.bf16.msra.mxu0 0
        %4382 = vmatprep.subr.bf16.mxu0 0
        %4383 = vmatpush1.bf16.msra.mxu0 0
        %4384 = vmatprep.subr.bf16.mxu0 0
        %4385 = vmatpush1.bf16.msra.mxu0 0
        %4386 = vmatprep.subr.bf16.mxu0 0
        %4387 = vmatpush1.bf16.msra.mxu0 0
        %4388 = vmatprep.subr.bf16.mxu0 0
        %4389 = vmatpush1.bf16.msra.mxu0 0
        %4390 = vmatprep.subr.bf16.mxu0 0
        %4391 = vmatpush1.bf16.msra.mxu0 0
        %4392 = vmatprep.subr.bf16.mxu0 0
        %4393 = vmatpush1.bf16.msra.mxu0 0
        %4394 = vmatprep.subr.bf16.mxu0 0
        %4395 = vmatpush1.bf16.msra.mxu0 0
        %4396 = vmatprep.subr.bf16.mxu0 0
        %4397 = vmatpush1.bf16.msra.mxu0 0
        %4398 = vmatprep.subr.bf16.mxu0 0
        %4399 = vmatpush1.bf16.msra.mxu0 0
        %4400 = vmatprep.subr.bf16.mxu0 0
        %4401 = vmatpush1.bf16.msra.mxu0 0
        %4402 = vmatprep.subr.bf16.mxu0 0
        %4403 = vmatpush1.bf16.msra.mxu0 0
        %4404 = vmatprep.mubr.bf16.mxu0 0
        %4405 = vmatmul.mubr.bf16.gmra.mrb[0].mxu0 %v4277
        %v4406 = vpop.f32.mrb[0].mxu0
        %v4407 = vadd.f32 %v4263, %v4406
        %v4408 = vpop.f32.mrb[0].mxu0
        %v4409 = vpop.f32.mrb[0].mxu0
        %v4410 = vadd.f32 %v4263, %v4409
        %v4411 = vpop.f32.mrb[0].mxu0
        %4412 = vmatprep.mubr.bf16.mxu0 0
        %4413 = vmatmul.mubr.bf16.gmra.mrb[0].mxu0 %v4280
        %v4414 = vpop.f32.mrb[0].mxu0
        %v4415 = vadd.f32 %v4263, %v4414
        %v4416 = vpop.f32.mrb[0].mxu0
        %v4417 = vpop.f32.mrb[0].mxu0
        %v4418 = vadd.f32 %v4263, %v4417
        %v4419 = vpop.f32.mrb[0].mxu0
        %4420 = vmatprep.mubr.bf16.mxu0 0
        %4421 = vmatmul.mubr.bf16.gmra.mrb[0].mxu0 %v4283
        %v4422 = vpop.f32.mrb[0].mxu0
        %v4423 = vadd.f32 %v4263, %v4422
        %v4424 = vpop.f32.mrb[0].mxu0
        %v4425 = vpop.f32.mrb[0].mxu0
        %v4426 = vadd.f32 %v4263, %v4425
        %v4427 = vpop.f32.mrb[0].mxu0
        %4428 = vmatprep.mubr.bf16.mxu0 0
        %4429 = vmatmul.mubr.bf16.gmra.mrb[0].mxu0 %v4286
        %v4430 = vpop.f32.mrb[0].mxu0
        %v4431 = vadd.f32 %v4263, %v4430
        %v4432 = vpop.f32.mrb[0].mxu0
        %v4433 = vpop.f32.mrb[0].mxu0
        %v4434 = vadd.f32 %v4263, %v4433
        %v4435 = vpop.f32.mrb[0].mxu0
        %4436 = vmatprep.mubr.bf16.mxu0 0
        %4437 = vmatmul.mubr.bf16.gmra.mrb[0].mxu0 %v4289
        %v4438 = vpop.f32.mrb[0].mxu0
        %v4439 = vadd.f32 %v4263, %v4438
        %v4440 = vpop.f32.mrb[0].mxu0
        %v4441 = vpop.f32.mrb[0].mxu0
        %v4442 = vadd.f32 %v4263, %v4441
        %v4443 = vpop.f32.mrb[0].mxu0
        %4444 = vmatprep.mubr.bf16.mxu0 0
        %4445 = vmatmul.mubr.bf16.gmra.mrb[0].mxu0 %v4292
        %v4446 = vpop.f32.mrb[0].mxu0
        %v4447 = vadd.f32 %v4263, %v4446
        %v4448 = vpop.f32.mrb[0].mxu0
        %v4449 = vpop.f32.mrb[0].mxu0
        %v4450 = vadd.f32 %v4263, %v4449
        %v4451 = vpop.f32.mrb[0].mxu0
        %4452 = vmatprep.mubr.bf16.mxu0 0
        %4453 = vmatmul.mubr.bf16.gmra.mrb[0].mxu0 %v4295
        %v4454 = vpop.f32.mrb[0].mxu0
        %v4455 = vadd.f32 %v4263, %v4454
        %v4456 = vpop.f32.mrb[0].mxu0
        %v4457 = vpop.f32.mrb[0].mxu0
        %v4458 = vadd.f32 %v4263, %v4457
        %v4459 = vpop.f32.mrb[0].mxu0
        %4460 = vmatprep.mubr.bf16.mxu0 0
        %4461 = vmatmul.mubr.bf16.gmra.mrb[0].mxu0 %v4298
        %v4462 = vpop.f32.mrb[0].mxu0
        %v4463 = vadd.f32 %v4263, %v4462
        %v4464 = vpop.f32.mrb[0].mxu0
        %v4465 = vpop.f32.mrb[0].mxu0
        %v4466 = vadd.f32 %v4263, %v4465
        %v4467 = vpop.f32.mrb[0].mxu0
        %4468 = vmatprep.mubr.bf16.mxu0 0
        %4469 = vmatmul.mubr.bf16.gmra.mrb[0].mxu0 %v4301
        %v4470 = vpop.f32.mrb[0].mxu0
        %v4471 = vadd.f32 %v4263, %v4470
        %v4472 = vpop.f32.mrb[0].mxu0
        %v4473 = vpop.f32.mrb[0].mxu0
        %v4474 = vadd.f32 %v4263, %v4473
        %v4475 = vpop.f32.mrb[0].mxu0
        %4476 = vmatprep.mubr.bf16.mxu0 0
        %4477 = vmatmul.mubr.bf16.gmra.mrb[0].mxu0 %v4304
        %v4478 = vpop.f32.mrb[0].mxu0
        %v4479 = vadd.f32 %v4263, %v4478
        %v4480 = vpop.f32.mrb[0].mxu0
        %v4481 = vpop.f32.mrb[0].mxu0
        %v4482 = vadd.f32 %v4263, %v4481
        %v4483 = vpop.f32.mrb[0].mxu0
        %4484 = vmatprep.mubr.bf16.mxu0 0
        %4485 = vmatmul.mubr.bf16.gmra.mrb[0].mxu0 %v4307
        %v4486 = vpop.f32.mrb[0].mxu0
        %v4487 = vadd.f32 %v4263, %v4486
        %v4488 = vpop.f32.mrb[0].mxu0
        %v4489 = vpop.f32.mrb[0].mxu0
        %v4490 = vadd.f32 %v4263, %v4489
        %v4491 = vpop.f32.mrb[0].mxu0
        %4492 = vmatprep.mubr.bf16.mxu0 0
        %4493 = vmatmul.mubr.bf16.gmra.mrb[0].mxu0 %v4310
        %v4494 = vpop.f32.mrb[0].mxu0
        %v4495 = vadd.f32 %v4263, %v4494
        %v4496 = vpop.f32.mrb[0].mxu0
        %v4497 = vpop.f32.mrb[0].mxu0
        %v4498 = vadd.f32 %v4263, %v4497
        %v4499 = vpop.f32.mrb[0].mxu0
        %4500 = vmatprep.mubr.bf16.mxu0 0
        %4501 = vmatmul.mubr.bf16.gmra.mrb[0].mxu0 %v4313
        %v4502 = vpop.f32.mrb[0].mxu0
        %v4503 = vadd.f32 %v4263, %v4502
        %v4504 = vpop.f32.mrb[0].mxu0
        %v4505 = vpop.f32.mrb[0].mxu0
        %v4506 = vadd.f32 %v4263, %v4505
        %v4507 = vpop.f32.mrb[0].mxu0
        %4508 = vmatprep.mubr.bf16.mxu0 0
        %4509 = vmatmul.mubr.bf16.gmra.mrb[0].mxu0 %v4316
        %v4510 = vpop.f32.mrb[0].mxu0
        %v4511 = vadd.f32 %v4263, %v4510
        %v4512 = vpop.f32.mrb[0].mxu0
        %v4513 = vpop.f32.mrb[0].mxu0
        %v4514 = vadd.f32 %v4263, %v4513
        %v4515 = vpop.f32.mrb[0].mxu0
        %4516 = vmatprep.mubr.bf16.mxu0 0
        %4517 = vmatmul.mubr.bf16.gmra.mrb[0].mxu0 %v4319
        %v4518 = vpop.f32.mrb[0].mxu0
        %v4519 = vadd.f32 %v4263, %v4518
        %v4520 = vpop.f32.mrb[0].mxu0
        %v4521 = vpop.f32.mrb[0].mxu0
        %v4522 = vadd.f32 %v4263, %v4521
        %v4523 = vpop.f32.mrb[0].mxu0
        %4524 = vmatprep.mubr.bf16.mxu0 0
        %4525 = vmatmul.mubr.bf16.gmra.mrb[0].mxu0 %v4322
        %v4526 = vpop.f32.mrb[0].mxu0
        %v4527 = vadd.f32 %v4263, %v4526
        %v4528 = vpop.f32.mrb[0].mxu0
        %v4529 = vpop.f32.mrb[0].mxu0
        %v4530 = vadd.f32 %v4263, %v4529
        %v4531 = vpop.f32.mrb[0].mxu0
        %4532 = vmatprep.mubr.bf16.mxu0 0
        %4533 = vmatmul.mubr.bf16.gmra.mrb[0].mxu0 %v4325
        %v4534 = vpop.f32.mrb[0].mxu0
        %v4535 = vadd.f32 %v4263, %v4534
        %v4536 = vpop.f32.mrb[0].mxu0
        %v4537 = vpop.f32.mrb[0].mxu0
        %v4538 = vadd.f32 %v4263, %v4537
        %v4539 = vpop.f32.mrb[0].mxu0
        %4540 = vmatprep.mubr.bf16.mxu0 0
        %4541 = vmatmul.mubr.bf16.gmra.mrb[0].mxu0 %v4328
        %v4542 = vpop.f32.mrb[0].mxu0
        %v4543 = vadd.f32 %v4263, %v4542
        %v4544 = vpop.f32.mrb[0].mxu0
        %v4545 = vpop.f32.mrb[0].mxu0
        %v4546 = vadd.f32 %v4263, %v4545
        %v4547 = vpop.f32.mrb[0].mxu0
        %4548 = vmatprep.mubr.bf16.mxu0 0
        %4549 = vmatmul.mubr.bf16.gmra.mrb[0].mxu0 %v4331
        %v4550 = vpop.f32.mrb[0].mxu0
        %v4551 = vadd.f32 %v4263, %v4550
        %v4552 = vpop.f32.mrb[0].mxu0
        %v4553 = vpop.f32.mrb[0].mxu0
        %v4554 = vadd.f32 %v4263, %v4553
        %v4555 = vpop.f32.mrb[0].mxu0
        %4556 = vmatprep.mubr.bf16.mxu0 0
        %4557 = vmatmul.mubr.bf16.gmra.mrb[0].mxu0 %v4334
        %v4558 = vpop.f32.mrb[0].mxu0
        %v4559 = vadd.f32 %v4263, %v4558
        %v4560 = vpop.f32.mrb[0].mxu0
        %v4561 = vpop.f32.mrb[0].mxu0
        %v4562 = vadd.f32 %v4263, %v4561
        %v4563 = vpop.f32.mrb[0].mxu0
        %4564 = vmatprep.mubr.bf16.mxu0 0
        %4565 = vmatmul.mubr.bf16.gmra.mrb[0].mxu0 %v4337
        %v4566 = vpop.f32.mrb[0].mxu0
        %v4567 = vadd.f32 %v4263, %v4566
        %v4568 = vpop.f32.mrb[0].mxu0
        %v4569 = vpop.f32.mrb[0].mxu0
        %v4570 = vadd.f32 %v4263, %v4569
        %v4571 = vpop.f32.mrb[0].mxu0
        %4572 = vmatprep.mubr.bf16.mxu0 0
        %4573 = vmatmul.mubr.bf16.gmra.mrb[0].mxu0 %v4340
        %v4574 = vpop.f32.mrb[0].mxu0
        %v4575 = vadd.f32 %v4263, %v4574
        %v4576 = vpop.f32.mrb[0].mxu0
        %v4577 = vpop.f32.mrb[0].mxu0
        %v4578 = vadd.f32 %v4263, %v4577
        %v4579 = vpop.f32.mrb[0].mxu0
        %4580 = vmatprep.mubr.bf16.mxu0 0
        %4581 = vmatmul.mubr.bf16.gmra.mrb[0].mxu0 %v4343
        %v4582 = vpop.f32.mrb[0].mxu0
        %v4583 = vadd.f32 %v4263, %v4582
        %v4584 = vpop.f32.mrb[0].mxu0
        %v4585 = vpop.f32.mrb[0].mxu0
        %v4586 = vadd.f32 %v4263, %v4585
        %v4587 = vpop.f32.mrb[0].mxu0
        %4588 = vmatprep.mubr.bf16.mxu0 0
        %4589 = vmatmul.mubr.bf16.gmra.mrb[0].mxu0 %v4346
        %v4590 = vpop.f32.mrb[0].mxu0
        %v4591 = vadd.f32 %v4263, %v4590
        %v4592 = vpop.f32.mrb[0].mxu0
        %v4593 = vpop.f32.mrb[0].mxu0
        %v4594 = vadd.f32 %v4263, %v4593
        %v4595 = vpop.f32.mrb[0].mxu0
        %4596 = vmatprep.mubr.bf16.mxu0 0
        %4597 = vmatmul.mubr.bf16.gmra.mrb[0].mxu0 %v4349
        %v4598 = vpop.f32.mrb[0].mxu0
        %v4599 = vadd.f32 %v4263, %v4598
        %v4600 = vpop.f32.mrb[0].mxu0
        %v4601 = vpop.f32.mrb[0].mxu0
        %v4602 = vadd.f32 %v4263, %v4601
        %v4603 = vpop.f32.mrb[0].mxu0
        %4604 = vmatprep.mubr.bf16.mxu0 0
        %4605 = vmatmul.mubr.bf16.gmra.mrb[0].mxu0 %v4352
        %v4606 = vpop.f32.mrb[0].mxu0
        %v4607 = vadd.f32 %v4263, %v4606
        %v4608 = vpop.f32.mrb[0].mxu0
        %v4609 = vpop.f32.mrb[0].mxu0
        %v4610 = vadd.f32 %v4263, %v4609
        %v4611 = vpop.f32.mrb[0].mxu0
        %4612 = vmatprep.mubr.bf16.mxu0 0
        %4613 = vmatmul.mubr.bf16.gmra.mrb[0].mxu0 %v4355
        %v4614 = vpop.f32.mrb[0].mxu0
        %v4615 = vadd.f32 %v4263, %v4614
        %v4616 = vpop.f32.mrb[0].mxu0
        %v4617 = vpop.f32.mrb[0].mxu0
        %v4618 = vadd.f32 %v4263, %v4617
        %v4619 = vpop.f32.mrb[0].mxu0
        %4620 = vmatprep.mubr.bf16.mxu0 0
        %4621 = vmatmul.mubr.bf16.gmra.mrb[0].mxu0 %v4358
        %v4622 = vpop.f32.mrb[0].mxu0
        %v4623 = vadd.f32 %v4263, %v4622
        %v4624 = vpop.f32.mrb[0].mxu0
        %v4625 = vpop.f32.mrb[0].mxu0
        %v4626 = vadd.f32 %v4263, %v4625
        %v4627 = vpop.f32.mrb[0].mxu0
        %4628 = vmatprep.mubr.bf16.mxu0 0
        %4629 = vmatmul.mubr.bf16.gmra.mrb[0].mxu0 %v4361
        %v4630 = vpop.f32.mrb[0].mxu0
        %v4631 = vadd.f32 %v4263, %v4630
        %v4632 = vpop.f32.mrb[0].mxu0
        %v4633 = vpop.f32.mrb[0].mxu0
        %v4634 = vadd.f32 %v4263, %v4633
        %v4635 = vpop.f32.mrb[0].mxu0
        %4636 = vmatprep.mubr.bf16.mxu0 0
        %4637 = vmatmul.mubr.bf16.gmra.mrb[0].mxu0 %v4364
        %v4638 = vpop.f32.mrb[0].mxu0
        %v4639 = vadd.f32 %v4263, %v4638
        %v4640 = vpop.f32.mrb[0].mxu0
        %v4641 = vpop.f32.mrb[0].mxu0
        %v4642 = vadd.f32 %v4263, %v4641
        %v4643 = vpop.f32.mrb[0].mxu0
        %4644 = vmatprep.mubr.bf16.mxu0 0
        %4645 = vmatmul.mubr.bf16.gmra.mrb[0].mxu0 %v4367
        %v4646 = vpop.f32.mrb[0].mxu0
        %v4647 = vadd.f32 %v4263, %v4646
        %v4648 = vpop.f32.mrb[0].mxu0
        %v4649 = vpop.f32.mrb[0].mxu0
        %v4650 = vadd.f32 %v4263, %v4649
        %v4651 = vpop.f32.mrb[0].mxu0
        %4652 = vmatprep.mubr.bf16.mxu0 0
        %4653 = vmatmul.mubr.bf16.gmra.mrb[0].mxu0 %v4370
        %v4654 = vpop.f32.mrb[0].mxu0
        %v4655 = vadd.f32 %v4263, %v4654
        %v4656 = vpop.f32.mrb[0].mxu0
        %v4657 = vpop.f32.mrb[0].mxu0
        %v4658 = vadd.f32 %v4263, %v4657
        %v4659 = vpop.f32.mrb[0].mxu0
        %4660 = vdwg.mxu0
        %4661 = vxpose.xlu0.b32.start [1/16] %v4407, 128
        %4662 = vxpose.xlu0.b32.cont [2/16] %v4410, 128
        %4663 = vxpose.xlu0.b32.cont [3/16] %v4415, 128
        %4664 = vxpose.xlu0.b32.cont [4/16] %v4418, 128
        %4665 = vxpose.xlu0.b32.cont [5/16] %v4423, 128
        %4666 = vxpose.xlu0.b32.cont [6/16] %v4426, 128
        %4667 = vxpose.xlu0.b32.cont [7/16] %v4431, 128
        %4668 = vxpose.xlu0.b32.cont [8/16] %v4434, 128
        %4669 = vxpose.xlu0.b32.cont [9/16] %v4439, 128
        %4670 = vxpose.xlu0.b32.cont [10/16] %v4442, 128
        %4671 = vxpose.xlu0.b32.cont [11/16] %v4447, 128
        %4672 = vxpose.xlu0.b32.cont [12/16] %v4450, 128
        %4673 = vxpose.xlu0.b32.cont [13/16] %v4455, 128
        %4674 = vxpose.xlu0.b32.cont [14/16] %v4458, 128
        %4675 = vxpose.xlu0.b32.cont [15/16] %v4463, 128
        %4676 = vxpose.xlu0.b32.end [16/16] %v4466, 128
        %v4677 = vpop.trf.xlu0
        %v4678 = vpop.trf.xlu0
        %v4679 = vpop.trf.xlu0
        %v4680 = vpop.trf.xlu0
        %v4681 = vpop.trf.xlu0
        %v4682 = vpop.trf.xlu0
        %v4683 = vpop.trf.xlu0
        %v4684 = vpop.trf.xlu0
        %v4685 = vpop.trf.xlu0
        %v4686 = vpop.trf.xlu0
        %v4687 = vpop.trf.xlu0
        %v4688 = vpop.trf.xlu0
        %v4689 = vpop.trf.xlu0
        %v4690 = vpop.trf.xlu0
        %v4691 = vpop.trf.xlu0
        %v4692 = vpop.trf.xlu0
        %4693 = vxpose.xlu0.b32.start [1/16] %v4471, 128
        %4694 = vxpose.xlu0.b32.cont [2/16] %v4474, 128
        %4695 = vxpose.xlu0.b32.cont [3/16] %v4479, 128
        %4696 = vxpose.xlu0.b32.cont [4/16] %v4482, 128
        %4697 = vxpose.xlu0.b32.cont [5/16] %v4487, 128
        %4698 = vxpose.xlu0.b32.cont [6/16] %v4490, 128
        %4699 = vxpose.xlu0.b32.cont [7/16] %v4495, 128
        %4700 = vxpose.xlu0.b32.cont [8/16] %v4498, 128
        %4701 = vxpose.xlu0.b32.cont [9/16] %v4503, 128
        %4702 = vxpose.xlu0.b32.cont [10/16] %v4506, 128
        %4703 = vxpose.xlu0.b32.cont [11/16] %v4511, 128
        %4704 = vxpose.xlu0.b32.cont [12/16] %v4514, 128
        %4705 = vxpose.xlu0.b32.cont [13/16] %v4519, 128
        %4706 = vxpose.xlu0.b32.cont [14/16] %v4522, 128
        %4707 = vxpose.xlu0.b32.cont [15/16] %v4527, 128
        %4708 = vxpose.xlu0.b32.end [16/16] %v4530, 128
        %v4709 = vpop.trf.xlu0
        %v4710 = vpop.trf.xlu0
        %v4711 = vpop.trf.xlu0
        %v4712 = vpop.trf.xlu0
        %v4713 = vpop.trf.xlu0
        %v4714 = vpop.trf.xlu0
        %v4715 = vpop.trf.xlu0
        %v4716 = vpop.trf.xlu0
        %v4717 = vpop.trf.xlu0
        %v4718 = vpop.trf.xlu0
        %v4719 = vpop.trf.xlu0
        %v4720 = vpop.trf.xlu0
        %v4721 = vpop.trf.xlu0
        %v4722 = vpop.trf.xlu0
        %v4723 = vpop.trf.xlu0
        %v4724 = vpop.trf.xlu0
        %4725 = vxpose.xlu0.b32.start [1/16] %v4535, 128
        %4726 = vxpose.xlu0.b32.cont [2/16] %v4538, 128
        %4727 = vxpose.xlu0.b32.cont [3/16] %v4543, 128
        %4728 = vxpose.xlu0.b32.cont [4/16] %v4546, 128
        %4729 = vxpose.xlu0.b32.cont [5/16] %v4551, 128
        %4730 = vxpose.xlu0.b32.cont [6/16] %v4554, 128
        %4731 = vxpose.xlu0.b32.cont [7/16] %v4559, 128
        %4732 = vxpose.xlu0.b32.cont [8/16] %v4562, 128
        %4733 = vxpose.xlu0.b32.cont [9/16] %v4567, 128
        %4734 = vxpose.xlu0.b32.cont [10/16] %v4570, 128
        %4735 = vxpose.xlu0.b32.cont [11/16] %v4575, 128
        %4736 = vxpose.xlu0.b32.cont [12/16] %v4578, 128
        %4737 = vxpose.xlu0.b32.cont [13/16] %v4583, 128
        %4738 = vxpose.xlu0.b32.cont [14/16] %v4586, 128
        %4739 = vxpose.xlu0.b32.cont [15/16] %v4591, 128
        %4740 = vxpose.xlu0.b32.end [16/16] %v4594, 128
        %v4741 = vpop.trf.xlu0
        %v4742 = vpop.trf.xlu0
        %v4743 = vpop.trf.xlu0
        %v4744 = vpop.trf.xlu0
        %v4745 = vpop.trf.xlu0
        %v4746 = vpop.trf.xlu0
        %v4747 = vpop.trf.xlu0
        %v4748 = vpop.trf.xlu0
        %v4749 = vpop.trf.xlu0
        %v4750 = vpop.trf.xlu0
        %v4751 = vpop.trf.xlu0
        %v4752 = vpop.trf.xlu0
        %v4753 = vpop.trf.xlu0
        %v4754 = vpop.trf.xlu0
        %v4755 = vpop.trf.xlu0
        %v4756 = vpop.trf.xlu0
        %4757 = vxpose.xlu0.b32.start [1/16] %v4599, 128
        %4758 = vxpose.xlu0.b32.cont [2/16] %v4602, 128
        %4759 = vxpose.xlu0.b32.cont [3/16] %v4607, 128
        %4760 = vxpose.xlu0.b32.cont [4/16] %v4610, 128
        %4761 = vxpose.xlu0.b32.cont [5/16] %v4615, 128
        %4762 = vxpose.xlu0.b32.cont [6/16] %v4618, 128
        %4763 = vxpose.xlu0.b32.cont [7/16] %v4623, 128
        %4764 = vxpose.xlu0.b32.cont [8/16] %v4626, 128
        %4765 = vxpose.xlu0.b32.cont [9/16] %v4631, 128
        %4766 = vxpose.xlu0.b32.cont [10/16] %v4634, 128
        %4767 = vxpose.xlu0.b32.cont [11/16] %v4639, 128
        %4768 = vxpose.xlu0.b32.cont [12/16] %v4642, 128
        %4769 = vxpose.xlu0.b32.cont [13/16] %v4647, 128
        %4770 = vxpose.xlu0.b32.cont [14/16] %v4650, 128
        %4771 = vxpose.xlu0.b32.cont [15/16] %v4655, 128
        %4772 = vxpose.xlu0.b32.end [16/16] %v4658, 128
        %v4773 = vpop.trf.xlu0
        %v4774 = vpop.trf.xlu0
        %v4775 = vpop.trf.xlu0
        %v4776 = vpop.trf.xlu0
        %v4777 = vpop.trf.xlu0
        %v4778 = vpop.trf.xlu0
        %v4779 = vpop.trf.xlu0
        %v4780 = vpop.trf.xlu0
        %v4781 = vpop.trf.xlu0
        %v4782 = vpop.trf.xlu0
        %v4783 = vpop.trf.xlu0
        %v4784 = vpop.trf.xlu0
        %v4785 = vpop.trf.xlu0
        %v4786 = vpop.trf.xlu0
        %v4787 = vpop.trf.xlu0
        %v4788 = vpop.trf.xlu0
        %v4793 = vcombine.low %v4677, %v4709
        %v4794 = vcombine.low %v4741, %v4773
        %4797 = vst [vmem:[%s258] sm:$0x77] %v4793
        %4798 = vst [vmem:[%s258 + $0x8] sm:$0x77] %v4794
        %s4799 = sand.u32 %s149, 1
        %s4800 = sand.u32 %s149, 1
        %s4801 = smul.addr %s4800, 16
        %s4802 = scalar_lea.vmem [#allocation2], %s4801
        // Predicated region
        $region41: #{tpu_custom_call.1} parent=39 // pred_check
          %p4803 = pneg %p159
        $region42: #{tpu_custom_call.1} parent=39 // pred_check_branch
          %4805 = sbr.rel (%p4803) target = $region44
        $region43: #{tpu_custom_call.1} parent=39 // pred_region
          %s4806 = smul.addr %s16, 2
          %s4807 = smul.addr %s4806, 4
          %s4808 = scalar_lea.vmem %s5, %s4807
          // Predicated region
          $region45: #{tpu_custom_call.1} parent=43 // pred_check
            _
          $region46: #{tpu_custom_call.1} parent=43 // pred_check_branch
            %4810 = sbr.rel (0) target = $region48
          $region47: #{tpu_custom_call.1} parent=43 // pred_region
            // Predicated region
            $region49: #{tpu_custom_call.1} parent=47 // pred_check
              _
            $region50: #{tpu_custom_call.1} parent=47 // pred_check_branch
              %4812 = sbr.rel (0) target = $region52
            $region51: #{tpu_custom_call.1} parent=47 // pred_region
              // Predicated region
              $region64: #{tpu_custom_call.1} parent=51 // pred_check
                _
              $region65: #{tpu_custom_call.1} parent=51 // pred_check_branch
                %4829 = sbr.rel (0) target = $region67
              $region66: #{tpu_custom_call.1} parent=51 // pred_region
                loop: start=0, step=1, limit=1
                $region68: #{tpu_custom_call.1} parent=66 // loop_pre_header
                  _
                $region69: #{tpu_custom_call.1} parent=66 // loop_header
                  %s4831 = sphi 0, %s4835
                  %p4832 = scmp.ge.s32.totalorder %s4831, 1
                  %s4836 = sphi %s4802, %s4802
                  %s4837 = sphi %s4808, %s4808
                $region70: #{tpu_custom_call.1} parent=66 // loop_header_branch
                  %4834 = sbr.rel (%p4832) target = $region74
                $region71: #{tpu_custom_call.1} parent=66 // loop_body
                  %v4838 = vld [vmem:[%s4836] sm:$0xff]
                  %4839 = vst [vmem:[%s4837] sm:$0xff] %v4838
                  %v4840 = vld [vmem:[%s4836 + $0x8] sm:$0xff]
                  %4841 = vst [vmem:[%s4837 + $0x10] sm:$0xff] %v4840
                $region72: #{tpu_custom_call.1} parent=66 // loop_footer
                  %s4835 = sadd.s32 1, %s4831
                $region73: #{tpu_custom_call.1} parent=66 // loop_footer_branch
                  %4830 = sbr.rel target = $region69
                $region74: #{tpu_custom_call.1} parent=66 // loop_exit
                  _
              $region67: #{tpu_custom_call.1} parent=51 // pred_fallthru
                _
              // Predicated region
              $region75: #{tpu_custom_call.1} parent=51 // pred_check
                _
              $region76: #{tpu_custom_call.1} parent=51 // pred_check_branch
                %4843 = sbr.rel target = $region78
              $region77: #{tpu_custom_call.1} parent=51 // pred_region
                _
              $region78: #{tpu_custom_call.1} parent=51 // pred_fallthru
                _
            $region52: #{tpu_custom_call.1} parent=47 // pred_fallthru
              _
            // Predicated region
            $region53: #{tpu_custom_call.1} parent=47 // pred_check
              _
            $region54: #{tpu_custom_call.1} parent=47 // pred_check_branch
              %4814 = sbr.rel target = $region56
            $region55: #{tpu_custom_call.1} parent=47 // pred_region
              loop: start=0, step=1, limit=1
              $region57: #{tpu_custom_call.1} parent=55 // loop_pre_header
                _
              $region58: #{tpu_custom_call.1} parent=55 // loop_header
                %s4817 = sphi 0, %s4821
                %p4818 = scmp.ge.s32.totalorder %s4817, 1
                %s4822 = sphi %s4802, %s4802
                %s4823 = sphi %s4808, %s4808
              $region59: #{tpu_custom_call.1} parent=55 // loop_header_branch
                %4820 = sbr.rel (%p4818) target = $region63
              $region60: #{tpu_custom_call.1} parent=55 // loop_body
                %v4824 = vld [vmem:[%s4822] sm:$0xff]
                %4825 = vst [vmem:[%s4823] sm:$0xff] %v4824
                %v4826 = vld [vmem:[%s4822 + $0x8] sm:$0xff]
                %4827 = vst [vmem:[%s4823 + $0x10] sm:$0xff] %v4826
              $region61: #{tpu_custom_call.1} parent=55 // loop_footer
                %s4821 = sadd.s32 1, %s4817
              $region62: #{tpu_custom_call.1} parent=55 // loop_footer_branch
                %4816 = sbr.rel target = $region58
              $region63: #{tpu_custom_call.1} parent=55 // loop_exit
                _
            $region56: #{tpu_custom_call.1} parent=47 // pred_fallthru
              _
          $region48: #{tpu_custom_call.1} parent=43 // pred_fallthru
            _
          %4844 = vnop
        $region44: #{tpu_custom_call.1} parent=39 // pred_fallthru
          _
      $region40: #{tpu_custom_call.1} parent=5 // pred_fallthru
        _
      %p4845 = scmp.le.s32.totalorder 2, %s11
      // Predicated region
      $region79: #{tpu_custom_call.1} parent=5 // pred_check
        %p4846 = pneg %p4845
      $region80: #{tpu_custom_call.1} parent=5 // pred_check_branch
        %4848 = sbr.rel (%p4846) target = $region82
      $region81: #{tpu_custom_call.1} parent=5 // pred_region
        %s4849 = ssub.s32 %s11, 2
        // Predicated region
        $region83: #{tpu_custom_call.1} parent=81 // pred_check
          %p4850 = pneg %p165
        $region84: #{tpu_custom_call.1} parent=81 // pred_check_branch
          %4852 = sbr.rel (%p4850) target = $region86
        $region85: #{tpu_custom_call.1} parent=81 // pred_region
          %s4853 = sand.u32 %s150, 1
          %s4854 = sand.u32 %s150, 1
          %s4855 = smul.addr %s4854, 16
          %s4856 = scalar_lea.vmem [#allocation2], %s4855
        $region86: #{tpu_custom_call.1} parent=81 // pred_fallthru
          _
      $region82: #{tpu_custom_call.1} parent=5 // pred_fallthru
        _
    $region6: #{tpu_custom_call.1} parent=1 // loop_footer
      %s15 = sadd.s32 1, %s11
    $region7: #{tpu_custom_call.1} parent=1 // loop_footer_branch
      %10 = sbr.rel target = $region3
    $region8: #{tpu_custom_call.1} parent=1 // loop_exit
      _

</llo_original>
